<compile_context>
chip_gen: v5e
topology: v5e:2x2
jax: 0.10.0
libtpu: 0.0.40
codegen_flags: <defaults>
</compile_context>

<pallas_src>
import functools

import jax
import jax.numpy as jnp
from jax import lax
from jax.experimental import pallas as pl
from jax.experimental.pallas import tpu as pltpu

NEG_SLOPE = 0.01   # F.leaky_relu default
BN_EPS = 1e-5      # nn.BatchNorm default


def _lrelu(y):
    return jnp.where(y >= 0, y, NEG_SLOPE * y)


# ----------------------------------------------------------------------------
# Fully fused kernel
# ----------------------------------------------------------------------------
def _net_kernel(p1_ref, w1_ref, w2_ref, tb_ref, w3_hbm, w4_ref, o_ref,
                w3_vmem, w3_sem, *, B, H1, W1, H2, W2):
    """Fused Net_withoutLS forward for one (small) batch.

    p1_ref : (H1*W1*B, 18) f32  conv1 im2col patches, rows (i1, j1, b),
                                 cols (di, dj, cin)
    w1_ref : (18, 64)  f32  conv1 weight (BN1 scale folded into columns)
    w2_ref : (576, 64) bf16 conv2 weight, rows (di, dj, cin), BN2 folded
    tb_ref : (4, 1024) f32  packed shifts: [t1 | t2 | t3 | fc2 bias]
    w3_hbm : (S*64, 1024) bf16  fc1 weight in HBM, rows (s, c), BN3 folded
    w4_ref : (1024, 12) bf16 fc2 weight
    w3_vmem: (S*64, 1024) bf16 VMEM landing buffer for w3
    w3_sem : DMA semaphore for the w3 copy
    """
    S = H2 * W2

    # Kick off the dominant (~2 MB) fc1-weight HBM->VMEM DMA immediately so it
    # overlaps with all of conv1/conv2 below; we only wait right before fc1.
    w3_copy = pltpu.make_async_copy(w3_hbm, w3_vmem, w3_sem)
    w3_copy.start()

    t1 = tb_ref[0:1, 0:64]     # conv1 bias + BN1 shift (scale folded in w1)
    t2 = tb_ref[1:2, 0:64]     # conv2 bias + BN2 shift
    t3 = tb_ref[2:3, :]        # fc1 bias + BN3 shift
    b4 = tb_ref[3:4, 0:12]     # fc2 bias

    # ---- conv1 (+BN1) + leaky_relu: one (H1*W1*B, 18) x (18, 64) matmul ----
    h1 = jnp.dot(p1_ref[...], w1_ref[...], preferred_element_type=jnp.float32)
    h1 = _lrelu(h1 + t1)                       # rows ordered (i1, j1, b)
    h1 = h1.reshape(H1, W1 * B, 64)            # (H1, W1*B, 64)

    # ---- conv2 (+BN2): 9 accumulated tap matmuls, bf16 x bf16 -> f32 -------
    # Each tap slice is a plain register slice of h1 (no scratch, no masked
    # 64-lane stores); accumulation happens in f32 registers.
    acc2 = jnp.zeros((S * B, 64), jnp.float32)
    for di in range(3):
        for dj in range(3):
            col = (di * 3 + dj) * 64
            patch = h1[di:di + H2, dj * B:(dj + W2) * B, :].reshape(S * B, 64)
            acc2 = acc2 + jnp.dot(patch.astype(jnp.bfloat16),
                                  w2_ref[col:col + 64, :],
                                  preferred_element_type=jnp.float32)
    h2 = _lrelu(acc2 + t2)                     # (S*B, 64), rows ordered (s, b)

    # ---- fc1 (+BN3): contract the flattened (s, c) axis as S accumulated ---
    # (B, 64) x (64, 1024) matmuls -> no (B, S*64) flatten slab / scatter.
    w3_copy.wait()
    acc3 = jnp.zeros((B, 1024), jnp.float32)
    for s in range(S):
        acc3 = acc3 + jnp.dot(h2[s * B:(s + 1) * B, :].astype(jnp.bfloat16),
                              w3_vmem[s * 64:(s + 1) * 64, :],
                              preferred_element_type=jnp.float32)
    z = _lrelu(acc3 + t3)                      # (B, 1024)

    # ---- fc2 (bias only, no BN / activation) --------------------------------
    out = jnp.dot(z.astype(jnp.bfloat16), w4_ref[...],
                  preferred_element_type=jnp.float32) + b4
    o_ref[...] = out.astype(o_ref.dtype)


# ----------------------------------------------------------------------------
# One-time parameter preparation (BN folding + weight permutations + packing)
# ----------------------------------------------------------------------------
def prepare_params(params):
    f32, bf16 = jnp.float32, jnp.bfloat16

    def fold(bn, bias):
        scale = bn["gamma"] / jnp.sqrt(bn["rv"] + BN_EPS)
        shift = (bias - bn["rm"]) * scale + bn["beta"]
        return scale.astype(f32), shift.astype(f32)

    s1, t1 = fold(params["batch1"], params["conv1_b"])
    s2, t2 = fold(params["batch2"], params["conv2_b"])
    s3, t3 = fold(params["batch3"], params["fc1_b"])

    # conv weights (O, I, 3, 3) -> im2col layout (3*3*I, O), rows (di, dj, cin)
    # with the BatchNorm scale folded into the output-channel columns.
    w1 = jnp.transpose(params["conv1_w"], (2, 3, 1, 0)).reshape(-1, 64)
    w1 = (w1 * s1[None, :]).astype(f32)
    w2 = jnp.transpose(params["conv2_w"], (2, 3, 1, 0)).reshape(-1, 64)
    w2 = (w2 * s2[None, :]).astype(bf16)

    # fc1 weight: torch.flatten is NCHW order (k = c*S + s); the kernel
    # contracts in (s, c) order -> permute rows once, fold BN3 scale.
    n_out, k_in = params["fc1_w"].shape
    S = k_in // 64
    w3 = jnp.transpose(params["fc1_w"].reshape(n_out, 64, S), (2, 1, 0))
    w3 = (w3.reshape(k_in, n_out) * s3[None, :]).astype(bf16)

    w4 = params["fc2_w"].T.astype(bf16)                 # (1024, 12)

    # Pack all small per-feature shift vectors into ONE (4, 1024) table so the
    # prologue issues a single tiny DMA instead of four descriptors.
    tb = jnp.zeros((4, 1024), f32)
    tb = tb.at[0, :64].set(t1).at[1, :64].set(t2)
    tb = tb.at[2, :].set(t3).at[3, :12].set(params["fc2_b"].astype(f32))

    return dict(w1=w1, w2=w2, w3=w3, w4=w4, tb=tb)


# ----------------------------------------------------------------------------
# Forward wrapper (single pallas_call)
# ----------------------------------------------------------------------------
@jax.jit
def net_withoutLS_forward(prep, x, x1):
    """x: (B, 2, row_size, 8) NCHW; x1 is accepted but unused (as in PyTorch)."""
    del x1
    B, C, H, W = x.shape
    assert C == 2 and W == 8
    H1, W1, H2, W2 = H - 2, W - 2, H - 4, W - 4
    S = H2 * W2

    # conv1 im2col (a few KB) rides along with the layout transpose the
    # wrapper already needed: rows (i1, j1, b), cols (di, dj, cin).
    xt = jnp.transpose(x, (2, 3, 0, 1)).astype(jnp.float32)      # (H, W, B, C)
    taps = [xt[di:di + H1, dj:dj + W1] for di in range(3) for dj in range(3)]
    p1 = jnp.concatenate(taps, axis=-1).reshape(H1 * W1 * B, 9 * C)

    kernel = functools.partial(_net_kernel, B=B, H1=H1, W1=W1, H2=H2, W2=W2)
    vmem = pltpu.MemorySpace.VMEM
    return pl.pallas_call(
        kernel,
        out_shape=jax.ShapeDtypeStruct((B, 12), jnp.float32),
        in_specs=[
            pl.BlockSpec(memory_space=vmem),     # p1 (conv1 patches)
            pl.BlockSpec(memory_space=vmem),     # w1
            pl.BlockSpec(memory_space=vmem),     # w2
            pl.BlockSpec(memory_space=vmem),     # packed shift table
            pl.BlockSpec(memory_space=pl.ANY),   # w3 stays in HBM; DMA'd in-kernel
            pl.BlockSpec(memory_space=vmem),     # w4
        ],
        out_specs=pl.BlockSpec(memory_space=vmem),
        scratch_shapes=[
            pltpu.VMEM((S * 64, 1024), jnp.bfloat16),   # w3 landing buffer
            pltpu.SemaphoreType.DMA,                    # w3 DMA completion sem
        ],
    )(p1, prep["w1"], prep["w2"], prep["tb"], prep["w3"], prep["w4"])


# ----------------------------------------------------------------------------
# Pure-JAX reference (mirrors the kernel's bf16 rounding points)
# ----------------------------------------------------------------------------
def reference_forward(params, x, x1):
    del x1
    f32 = jnp.float32
    hi = lax.Precision.HIGHEST
    q = lambda w: w.astype(jnp.bfloat16).astype(f32)
    dn = ("NCHW", "OIHW", "NCHW")

    def bn(y, p, shape):
        scale = p["gamma"] / jnp.sqrt(p["rv"] + BN_EPS)
        shift = p["beta"] - p["rm"] * scale
        return y * scale.reshape(shape) + shift.reshape(shape)

    y = lax.conv_general_dilated(x.astype(f32), params["conv1_w"], (1, 1), "VALID",
                                 dimension_numbers=dn, precision=hi)
    y = y + params["conv1_b"].reshape(1, -1, 1, 1)
    y = _lrelu(bn(y, params["batch1"], (1, -1, 1, 1)))
    y = q(y)
    y = lax.conv_general_dilated(y, q(params["conv2_w"]), (1, 1), "VALID",
                                 dimension_numbers=dn, precision=hi)
    y = y + params["conv2_b"].reshape(1, -1, 1, 1)
    y = _lrelu(bn(y, params["batch2"], (1, -1, 1, 1)))
    y = q(y)
    y = y.reshape(y.shape[0], -1)                         # torch.flatten(x, 1), NCHW
    z = jnp.dot(y, q(params["fc1_w"]).T, precision=hi) + params["fc1_b"]
    z = _lrelu(bn(z, params["batch3"], (1, -1)))
    z = q(z)
    return jnp.dot(z, q(params["fc2_w"]).T, precision=hi) + params["fc2_b"]


# ----------------------------------------------------------------------------
# Deterministic synthetic parameters (xavier-uniform weights, default BN)
# ----------------------------------------------------------------------------
def _xavier(key, shape, fan_in, fan_out):
    limit = (6.0 / (fan_in + fan_out)) ** 0.5
    return jax.random.uniform(key, shape, jnp.float32, -limit, limit)


def _bias(key, fan_in, n):
    bound = 1.0 / (fan_in ** 0.5)
    return jax.random.uniform(key, (n,), jnp.float32, -bound, bound)


def _bn(n):
    return dict(gamma=jnp.ones((n,), jnp.float32), beta=jnp.zeros((n,), jnp.float32),
                rm=jnp.zeros((n,), jnp.float32), rv=jnp.ones((n,), jnp.float32))


def init_params(key, row_size):
    rs = row_size - 4
    k = jax.random.split(key, 8)
    return dict(
        conv1_w=_xavier(k[0], (64, 2, 3, 3), 2 * 9, 64 * 9),
        conv1_b=_bias(k[1], 2 * 9, 64),
        conv2_w=_xavier(k[2], (64, 64, 3, 3), 64 * 9, 64 * 9),
        conv2_b=_bias(k[3], 64 * 9, 64),
        fc1_w=_xavier(k[4], (1024, rs * 4 * 64), rs * 4 * 64, 1024),
        fc1_b=_bias(k[5], rs * 4 * 64, 1024),
        fc2_w=_xavier(k[6], (12, 1024), 1024, 12),
        fc2_b=_bias(k[7], 1024, 12),
        batch1=_bn(64), batch2=_bn(64), batch3=_bn(1024),
    )


if __name__ == "__main__":
    row_size = 8      # input x is (B, 2, row_size, 8); fc1 in = (row_size-4)*4*64
    batch = 2
    key = jax.random.PRNGKey(0)
    kp, kx, kx1 = jax.random.split(key, 3)

    params = init_params(kp, row_size)
    prep = prepare_params(params)
    x = jax.random.normal(kx, (batch, 2, row_size, 8), jnp.float32)
    x1 = jax.random.normal(kx1, (batch, 12), jnp.float32)   # unused by forward()

    out = net_withoutLS_forward(prep, x, x1)
    jax.block_until_ready(out)
    assert out.shape == (batch, 12), out.shape

    ref = reference_forward(params, x, x1)
    err = float(jnp.max(jnp.abs(out - ref)))
    assert jnp.allclose(out, ref, rtol=2e-2, atol=2e-2), err
    print("KERNEL_OK")
</pallas_src>

<mosaic_0001>
module attributes {stable_mosaic.version = 11 : i64} {
  func.func @_net_kernel(%arg0: memref<72x18xf32, #tpu.memory_space<vmem>>, %arg1: memref<18x64xf32, #tpu.memory_space<vmem>>, %arg2: memref<576x64xbf16, #tpu.memory_space<vmem>>, %arg3: memref<4x1024xf32, #tpu.memory_space<vmem>>, %arg4: memref<1024x1024xbf16, #tpu.memory_space<any>>, %arg5: memref<1024x12xbf16, #tpu.memory_space<vmem>>, %arg6: memref<2x12xf32, #tpu.memory_space<vmem>>, %arg7: memref<1024x1024xbf16, #tpu.memory_space<vmem>>, %arg8: memref<!tpu.dma_semaphore, #tpu.memory_space<semaphore_mem>>) attributes {dimension_semantics = [], scalar_prefetch = 0 : i64, scratch_operands = 2 : i64, tpu.core_type = #tpu.core_type<tc>} {
    tpu.enqueue_dma source(%arg4 : memref<1024x1024xbf16, #tpu.memory_space<any>>) target(%arg7 : memref<1024x1024xbf16, #tpu.memory_space<vmem>>) target_semaphore(%arg8 : memref<!tpu.dma_semaphore, #tpu.memory_space<semaphore_mem>>)
    %c0 = arith.constant 0 : index
    %c0_0 = arith.constant 0 : index
    %0 = vector.load %arg3[%c0, %c0_0] : memref<4x1024xf32, #tpu.memory_space<vmem>>, vector<1x64xf32>
    %c1 = arith.constant 1 : index
    %c0_1 = arith.constant 0 : index
    %1 = vector.load %arg3[%c1, %c0_1] : memref<4x1024xf32, #tpu.memory_space<vmem>>, vector<1x64xf32>
    %c2 = arith.constant 2 : index
    %c0_2 = arith.constant 0 : index
    %2 = vector.load %arg3[%c2, %c0_2] : memref<4x1024xf32, #tpu.memory_space<vmem>>, vector<1x1024xf32>
    %c3 = arith.constant 3 : index
    %c0_3 = arith.constant 0 : index
    %3 = vector.load %arg3[%c3, %c0_3] : memref<4x1024xf32, #tpu.memory_space<vmem>>, vector<1x12xf32>
    %c0_4 = arith.constant 0 : index
    %c0_5 = arith.constant 0 : index
    %4 = vector.load %arg0[%c0_4, %c0_5] : memref<72x18xf32, #tpu.memory_space<vmem>>, vector<72x18xf32>
    %c0_6 = arith.constant 0 : index
    %c0_7 = arith.constant 0 : index
    %5 = vector.load %arg1[%c0_6, %c0_7] : memref<18x64xf32, #tpu.memory_space<vmem>>, vector<18x64xf32>
    %cst = arith.constant dense<0.000000e+00> : vector<72x64xf32>
    %6 = tpu.matmul %4, %5, %cst {dimension_numbers = #tpu.dot_dimension_numbers<[1], [0], [0], [1], [0, 0, 1, 1], [], []>} : vector<72x18xf32>, vector<18x64xf32>, vector<72x64xf32> -> vector<72x64xf32>
    %7 = vector.broadcast %0 : vector<1x64xf32> to vector<72x64xf32>
    %8 = arith.addf %6, %7 : vector<72x64xf32>
    %cst_8 = arith.constant 0.000000e+00 : f32
    %9 = vector.broadcast %cst_8 : f32 to vector<72x64xf32>
    %10 = arith.cmpf oge, %8, %9 : vector<72x64xf32>
    %cst_9 = arith.constant 0.00999999977 : f32
    %11 = vector.broadcast %cst_9 : f32 to vector<72x64xf32>
    %12 = arith.mulf %11, %8 : vector<72x64xf32>
    %13 = arith.select %10, %8, %12 : vector<72x64xi1>, vector<72x64xf32>
    %14 = vector.shape_cast %13 : vector<72x64xf32> to vector<6x12x64xf32>
    %cst_10 = arith.constant 0.000000e+00 : f32
    %15 = vector.broadcast %cst_10 : f32 to vector<32x64xf32>
    %16 = vector.extract_strided_slice %14 {offsets = [0, 0, 0], sizes = [4, 8, 64], strides = [1, 1, 1]} : vector<6x12x64xf32> to vector<4x8x64xf32>
    %17 = vector.shape_cast %16 : vector<4x8x64xf32> to vector<32x64xf32>
    %18 = arith.truncf %17 : vector<32x64xf32> to vector<32x64xbf16>
    %c0_11 = arith.constant 0 : index
    %c0_12 = arith.constant 0 : index
    %19 = vector.load %arg2[%c0_11, %c0_12] : memref<576x64xbf16, #tpu.memory_space<vmem>>, vector<64x64xbf16>
    %cst_13 = arith.constant dense<0.000000e+00> : vector<32x64xf32>
    %20 = tpu.matmul %18, %19, %cst_13 {dimension_numbers = #tpu.dot_dimension_numbers<[1], [0], [0], [1], [0, 0, 1, 1], [], []>} : vector<32x64xbf16>, vector<64x64xbf16>, vector<32x64xf32> -> vector<32x64xf32>
    %21 = arith.addf %15, %20 : vector<32x64xf32>
    %22 = vector.extract_strided_slice %14 {offsets = [0, 2, 0], sizes = [4, 8, 64], strides = [1, 1, 1]} : vector<6x12x64xf32> to vector<4x8x64xf32>
    %23 = vector.shape_cast %22 : vector<4x8x64xf32> to vector<32x64xf32>
    %24 = arith.truncf %23 : vector<32x64xf32> to vector<32x64xbf16>
    %c64 = arith.constant 64 : index
    %c0_14 = arith.constant 0 : index
    %25 = vector.load %arg2[%c64, %c0_14] : memref<576x64xbf16, #tpu.memory_space<vmem>>, vector<64x64xbf16>
    %cst_15 = arith.constant dense<0.000000e+00> : vector<32x64xf32>
    %26 = tpu.matmul %24, %25, %cst_15 {dimension_numbers = #tpu.dot_dimension_numbers<[1], [0], [0], [1], [0, 0, 1, 1], [], []>} : vector<32x64xbf16>, vector<64x64xbf16>, vector<32x64xf32> -> vector<32x64xf32>
    %27 = arith.addf %21, %26 : vector<32x64xf32>
    %28 = vector.extract_strided_slice %14 {offsets = [0, 4, 0], sizes = [4, 8, 64], strides = [1, 1, 1]} : vector<6x12x64xf32> to vector<4x8x64xf32>
    %29 = vector.shape_cast %28 : vector<4x8x64xf32> to vector<32x64xf32>
    %30 = arith.truncf %29 : vector<32x64xf32> to vector<32x64xbf16>
    %c128 = arith.constant 128 : index
    %c0_16 = arith.constant 0 : index
    %31 = vector.load %arg2[%c128, %c0_16] : memref<576x64xbf16, #tpu.memory_space<vmem>>, vector<64x64xbf16>
    %cst_17 = arith.constant dense<0.000000e+00> : vector<32x64xf32>
    %32 = tpu.matmul %30, %31, %cst_17 {dimension_numbers = #tpu.dot_dimension_numbers<[1], [0], [0], [1], [0, 0, 1, 1], [], []>} : vector<32x64xbf16>, vector<64x64xbf16>, vector<32x64xf32> -> vector<32x64xf32>
    %33 = arith.addf %27, %32 : vector<32x64xf32>
    %34 = vector.extract_strided_slice %14 {offsets = [1, 0, 0], sizes = [4, 8, 64], strides = [1, 1, 1]} : vector<6x12x64xf32> to vector<4x8x64xf32>
    %35 = vector.shape_cast %34 : vector<4x8x64xf32> to vector<32x64xf32>
    %36 = arith.truncf %35 : vector<32x64xf32> to vector<32x64xbf16>
    %c192 = arith.constant 192 : index
    %c0_18 = arith.constant 0 : index
    %37 = vector.load %arg2[%c192, %c0_18] : memref<576x64xbf16, #tpu.memory_space<vmem>>, vector<64x64xbf16>
    %cst_19 = arith.constant dense<0.000000e+00> : vector<32x64xf32>
    %38 = tpu.matmul %36, %37, %cst_19 {dimension_numbers = #tpu.dot_dimension_numbers<[1], [0], [0], [1], [0, 0, 1, 1], [], []>} : vector<32x64xbf16>, vector<64x64xbf16>, vector<32x64xf32> -> vector<32x64xf32>
    %39 = arith.addf %33, %38 : vector<32x64xf32>
    %40 = vector.extract_strided_slice %14 {offsets = [1, 2, 0], sizes = [4, 8, 64], strides = [1, 1, 1]} : vector<6x12x64xf32> to vector<4x8x64xf32>
    %41 = vector.shape_cast %40 : vector<4x8x64xf32> to vector<32x64xf32>
    %42 = arith.truncf %41 : vector<32x64xf32> to vector<32x64xbf16>
    %c256 = arith.constant 256 : index
    %c0_20 = arith.constant 0 : index
    %43 = vector.load %arg2[%c256, %c0_20] : memref<576x64xbf16, #tpu.memory_space<vmem>>, vector<64x64xbf16>
    %cst_21 = arith.constant dense<0.000000e+00> : vector<32x64xf32>
    %44 = tpu.matmul %42, %43, %cst_21 {dimension_numbers = #tpu.dot_dimension_numbers<[1], [0], [0], [1], [0, 0, 1, 1], [], []>} : vector<32x64xbf16>, vector<64x64xbf16>, vector<32x64xf32> -> vector<32x64xf32>
    %45 = arith.addf %39, %44 : vector<32x64xf32>
    %46 = vector.extract_strided_slice %14 {offsets = [1, 4, 0], sizes = [4, 8, 64], strides = [1, 1, 1]} : vector<6x12x64xf32> to vector<4x8x64xf32>
    %47 = vector.shape_cast %46 : vector<4x8x64xf32> to vector<32x64xf32>
    %48 = arith.truncf %47 : vector<32x64xf32> to vector<32x64xbf16>
    %c320 = arith.constant 320 : index
    %c0_22 = arith.constant 0 : index
    %49 = vector.load %arg2[%c320, %c0_22] : memref<576x64xbf16, #tpu.memory_space<vmem>>, vector<64x64xbf16>
    %cst_23 = arith.constant dense<0.000000e+00> : vector<32x64xf32>
    %50 = tpu.matmul %48, %49, %cst_23 {dimension_numbers = #tpu.dot_dimension_numbers<[1], [0], [0], [1], [0, 0, 1, 1], [], []>} : vector<32x64xbf16>, vector<64x64xbf16>, vector<32x64xf32> -> vector<32x64xf32>
    %51 = arith.addf %45, %50 : vector<32x64xf32>
    %52 = vector.extract_strided_slice %14 {offsets = [2, 0, 0], sizes = [4, 8, 64], strides = [1, 1, 1]} : vector<6x12x64xf32> to vector<4x8x64xf32>
    %53 = vector.shape_cast %52 : vector<4x8x64xf32> to vector<32x64xf32>
    %54 = arith.truncf %53 : vector<32x64xf32> to vector<32x64xbf16>
    %c384 = arith.constant 384 : index
    %c0_24 = arith.constant 0 : index
    %55 = vector.load %arg2[%c384, %c0_24] : memref<576x64xbf16, #tpu.memory_space<vmem>>, vector<64x64xbf16>
    %cst_25 = arith.constant dense<0.000000e+00> : vector<32x64xf32>
    %56 = tpu.matmul %54, %55, %cst_25 {dimension_numbers = #tpu.dot_dimension_numbers<[1], [0], [0], [1], [0, 0, 1, 1], [], []>} : vector<32x64xbf16>, vector<64x64xbf16>, vector<32x64xf32> -> vector<32x64xf32>
    %57 = arith.addf %51, %56 : vector<32x64xf32>
    %58 = vector.extract_strided_slice %14 {offsets = [2, 2, 0], sizes = [4, 8, 64], strides = [1, 1, 1]} : vector<6x12x64xf32> to vector<4x8x64xf32>
    %59 = vector.shape_cast %58 : vector<4x8x64xf32> to vector<32x64xf32>
    %60 = arith.truncf %59 : vector<32x64xf32> to vector<32x64xbf16>
    %c448 = arith.constant 448 : index
    %c0_26 = arith.constant 0 : index
    %61 = vector.load %arg2[%c448, %c0_26] : memref<576x64xbf16, #tpu.memory_space<vmem>>, vector<64x64xbf16>
    %cst_27 = arith.constant dense<0.000000e+00> : vector<32x64xf32>
    %62 = tpu.matmul %60, %61, %cst_27 {dimension_numbers = #tpu.dot_dimension_numbers<[1], [0], [0], [1], [0, 0, 1, 1], [], []>} : vector<32x64xbf16>, vector<64x64xbf16>, vector<32x64xf32> -> vector<32x64xf32>
    %63 = arith.addf %57, %62 : vector<32x64xf32>
    %64 = vector.extract_strided_slice %14 {offsets = [2, 4, 0], sizes = [4, 8, 64], strides = [1, 1, 1]} : vector<6x12x64xf32> to vector<4x8x64xf32>
    %65 = vector.shape_cast %64 : vector<4x8x64xf32> to vector<32x64xf32>
    %66 = arith.truncf %65 : vector<32x64xf32> to vector<32x64xbf16>
    %c512 = arith.constant 512 : index
    %c0_28 = arith.constant 0 : index
    %67 = vector.load %arg2[%c512, %c0_28] : memref<576x64xbf16, #tpu.memory_space<vmem>>, vector<64x64xbf16>
    %cst_29 = arith.constant dense<0.000000e+00> : vector<32x64xf32>
    %68 = tpu.matmul %66, %67, %cst_29 {dimension_numbers = #tpu.dot_dimension_numbers<[1], [0], [0], [1], [0, 0, 1, 1], [], []>} : vector<32x64xbf16>, vector<64x64xbf16>, vector<32x64xf32> -> vector<32x64xf32>
    %69 = arith.addf %63, %68 : vector<32x64xf32>
    %70 = vector.broadcast %1 : vector<1x64xf32> to vector<32x64xf32>
    %71 = arith.addf %69, %70 : vector<32x64xf32>
    %cst_30 = arith.constant 0.000000e+00 : f32
    %72 = vector.broadcast %cst_30 : f32 to vector<32x64xf32>
    %73 = arith.cmpf oge, %71, %72 : vector<32x64xf32>
    %cst_31 = arith.constant 0.00999999977 : f32
    %74 = vector.broadcast %cst_31 : f32 to vector<32x64xf32>
    %75 = arith.mulf %74, %71 : vector<32x64xf32>
    %76 = arith.select %73, %71, %75 : vector<32x64xi1>, vector<32x64xf32>
    tpu.wait_dma2 semaphore(%arg8 : memref<!tpu.dma_semaphore, #tpu.memory_space<semaphore_mem>>) src(%arg4 : memref<1024x1024xbf16, #tpu.memory_space<any>>) dst(%arg7 : memref<1024x1024xbf16, #tpu.memory_space<vmem>>)
    %cst_32 = arith.constant 0.000000e+00 : f32
    %77 = vector.broadcast %cst_32 : f32 to vector<2x1024xf32>
    %78 = vector.extract_strided_slice %76 {offsets = [0, 0], sizes = [2, 64], strides = [1, 1]} : vector<32x64xf32> to vector<2x64xf32>
    %79 = arith.truncf %78 : vector<2x64xf32> to vector<2x64xbf16>
    %c0_33 = arith.constant 0 : index
    %c0_34 = arith.constant 0 : index
    %80 = vector.load %arg7[%c0_33, %c0_34] : memref<1024x1024xbf16, #tpu.memory_space<vmem>>, vector<64x1024xbf16>
    %cst_35 = arith.constant dense<0.000000e+00> : vector<2x1024xf32>
    %81 = tpu.matmul %79, %80, %cst_35 {dimension_numbers = #tpu.dot_dimension_numbers<[1], [0], [0], [1], [0, 0, 1, 1], [], []>} : vector<2x64xbf16>, vector<64x1024xbf16>, vector<2x1024xf32> -> vector<2x1024xf32>
    %82 = arith.addf %77, %81 : vector<2x1024xf32>
    %83 = vector.extract_strided_slice %76 {offsets = [2, 0], sizes = [2, 64], strides = [1, 1]} : vector<32x64xf32> to vector<2x64xf32>
    %84 = arith.truncf %83 : vector<2x64xf32> to vector<2x64xbf16>
    %c64_36 = arith.constant 64 : index
    %c0_37 = arith.constant 0 : index
    %85 = vector.load %arg7[%c64_36, %c0_37] : memref<1024x1024xbf16, #tpu.memory_space<vmem>>, vector<64x1024xbf16>
    %cst_38 = arith.constant dense<0.000000e+00> : vector<2x1024xf32>
    %86 = tpu.matmul %84, %85, %cst_38 {dimension_numbers = #tpu.dot_dimension_numbers<[1], [0], [0], [1], [0, 0, 1, 1], [], []>} : vector<2x64xbf16>, vector<64x1024xbf16>, vector<2x1024xf32> -> vector<2x1024xf32>
    %87 = arith.addf %82, %86 : vector<2x1024xf32>
    %88 = vector.extract_strided_slice %76 {offsets = [4, 0], sizes = [2, 64], strides = [1, 1]} : vector<32x64xf32> to vector<2x64xf32>
    %89 = arith.truncf %88 : vector<2x64xf32> to vector<2x64xbf16>
    %c128_39 = arith.constant 128 : index
    %c0_40 = arith.constant 0 : index
    %90 = vector.load %arg7[%c128_39, %c0_40] : memref<1024x1024xbf16, #tpu.memory_space<vmem>>, vector<64x1024xbf16>
    %cst_41 = arith.constant dense<0.000000e+00> : vector<2x1024xf32>
    %91 = tpu.matmul %89, %90, %cst_41 {dimension_numbers = #tpu.dot_dimension_numbers<[1], [0], [0], [1], [0, 0, 1, 1], [], []>} : vector<2x64xbf16>, vector<64x1024xbf16>, vector<2x1024xf32> -> vector<2x1024xf32>
    %92 = arith.addf %87, %91 : vector<2x1024xf32>
    %93 = vector.extract_strided_slice %76 {offsets = [6, 0], sizes = [2, 64], strides = [1, 1]} : vector<32x64xf32> to vector<2x64xf32>
    %94 = arith.truncf %93 : vector<2x64xf32> to vector<2x64xbf16>
    %c192_42 = arith.constant 192 : index
    %c0_43 = arith.constant 0 : index
    %95 = vector.load %arg7[%c192_42, %c0_43] : memref<1024x1024xbf16, #tpu.memory_space<vmem>>, vector<64x1024xbf16>
    %cst_44 = arith.constant dense<0.000000e+00> : vector<2x1024xf32>
    %96 = tpu.matmul %94, %95, %cst_44 {dimension_numbers = #tpu.dot_dimension_numbers<[1], [0], [0], [1], [0, 0, 1, 1], [], []>} : vector<2x64xbf16>, vector<64x1024xbf16>, vector<2x1024xf32> -> vector<2x1024xf32>
    %97 = arith.addf %92, %96 : vector<2x1024xf32>
    %98 = vector.extract_strided_slice %76 {offsets = [8, 0], sizes = [2, 64], strides = [1, 1]} : vector<32x64xf32> to vector<2x64xf32>
    %99 = arith.truncf %98 : vector<2x64xf32> to vector<2x64xbf16>
    %c256_45 = arith.constant 256 : index
    %c0_46 = arith.constant 0 : index
    %100 = vector.load %arg7[%c256_45, %c0_46] : memref<1024x1024xbf16, #tpu.memory_space<vmem>>, vector<64x1024xbf16>
    %cst_47 = arith.constant dense<0.000000e+00> : vector<2x1024xf32>
    %101 = tpu.matmul %99, %100, %cst_47 {dimension_numbers = #tpu.dot_dimension_numbers<[1], [0], [0], [1], [0, 0, 1, 1], [], []>} : vector<2x64xbf16>, vector<64x1024xbf16>, vector<2x1024xf32> -> vector<2x1024xf32>
    %102 = arith.addf %97, %101 : vector<2x1024xf32>
    %103 = vector.extract_strided_slice %76 {offsets = [10, 0], sizes = [2, 64], strides = [1, 1]} : vector<32x64xf32> to vector<2x64xf32>
    %104 = arith.truncf %103 : vector<2x64xf32> to vector<2x64xbf16>
    %c320_48 = arith.constant 320 : index
    %c0_49 = arith.constant 0 : index
    %105 = vector.load %arg7[%c320_48, %c0_49] : memref<1024x1024xbf16, #tpu.memory_space<vmem>>, vector<64x1024xbf16>
    %cst_50 = arith.constant dense<0.000000e+00> : vector<2x1024xf32>
    %106 = tpu.matmul %104, %105, %cst_50 {dimension_numbers = #tpu.dot_dimension_numbers<[1], [0], [0], [1], [0, 0, 1, 1], [], []>} : vector<2x64xbf16>, vector<64x1024xbf16>, vector<2x1024xf32> -> vector<2x1024xf32>
    %107 = arith.addf %102, %106 : vector<2x1024xf32>
    %108 = vector.extract_strided_slice %76 {offsets = [12, 0], sizes = [2, 64], strides = [1, 1]} : vector<32x64xf32> to vector<2x64xf32>
    %109 = arith.truncf %108 : vector<2x64xf32> to vector<2x64xbf16>
    %c384_51 = arith.constant 384 : index
    %c0_52 = arith.constant 0 : index
    %110 = vector.load %arg7[%c384_51, %c0_52] : memref<1024x1024xbf16, #tpu.memory_space<vmem>>, vector<64x1024xbf16>
    %cst_53 = arith.constant dense<0.000000e+00> : vector<2x1024xf32>
    %111 = tpu.matmul %109, %110, %cst_53 {dimension_numbers = #tpu.dot_dimension_numbers<[1], [0], [0], [1], [0, 0, 1, 1], [], []>} : vector<2x64xbf16>, vector<64x1024xbf16>, vector<2x1024xf32> -> vector<2x1024xf32>
    %112 = arith.addf %107, %111 : vector<2x1024xf32>
    %113 = vector.extract_strided_slice %76 {offsets = [14, 0], sizes = [2, 64], strides = [1, 1]} : vector<32x64xf32> to vector<2x64xf32>
    %114 = arith.truncf %113 : vector<2x64xf32> to vector<2x64xbf16>
    %c448_54 = arith.constant 448 : index
    %c0_55 = arith.constant 0 : index
    %115 = vector.load %arg7[%c448_54, %c0_55] : memref<1024x1024xbf16, #tpu.memory_space<vmem>>, vector<64x1024xbf16>
    %cst_56 = arith.constant dense<0.000000e+00> : vector<2x1024xf32>
    %116 = tpu.matmul %114, %115, %cst_56 {dimension_numbers = #tpu.dot_dimension_numbers<[1], [0], [0], [1], [0, 0, 1, 1], [], []>} : vector<2x64xbf16>, vector<64x1024xbf16>, vector<2x1024xf32> -> vector<2x1024xf32>
    %117 = arith.addf %112, %116 : vector<2x1024xf32>
    %118 = vector.extract_strided_slice %76 {offsets = [16, 0], sizes = [2, 64], strides = [1, 1]} : vector<32x64xf32> to vector<2x64xf32>
    %119 = arith.truncf %118 : vector<2x64xf32> to vector<2x64xbf16>
    %c512_57 = arith.constant 512 : index
    %c0_58 = arith.constant 0 : index
    %120 = vector.load %arg7[%c512_57, %c0_58] : memref<1024x1024xbf16, #tpu.memory_space<vmem>>, vector<64x1024xbf16>
    %cst_59 = arith.constant dense<0.000000e+00> : vector<2x1024xf32>
    %121 = tpu.matmul %119, %120, %cst_59 {dimension_numbers = #tpu.dot_dimension_numbers<[1], [0], [0], [1], [0, 0, 1, 1], [], []>} : vector<2x64xbf16>, vector<64x1024xbf16>, vector<2x1024xf32> -> vector<2x1024xf32>
    %122 = arith.addf %117, %121 : vector<2x1024xf32>
    %123 = vector.extract_strided_slice %76 {offsets = [18, 0], sizes = [2, 64], strides = [1, 1]} : vector<32x64xf32> to vector<2x64xf32>
    %124 = arith.truncf %123 : vector<2x64xf32> to vector<2x64xbf16>
    %c576 = arith.constant 576 : index
    %c0_60 = arith.constant 0 : index
    %125 = vector.load %arg7[%c576, %c0_60] : memref<1024x1024xbf16, #tpu.memory_space<vmem>>, vector<64x1024xbf16>
    %cst_61 = arith.constant dense<0.000000e+00> : vector<2x1024xf32>
    %126 = tpu.matmul %124, %125, %cst_61 {dimension_numbers = #tpu.dot_dimension_numbers<[1], [0], [0], [1], [0, 0, 1, 1], [], []>} : vector<2x64xbf16>, vector<64x1024xbf16>, vector<2x1024xf32> -> vector<2x1024xf32>
    %127 = arith.addf %122, %126 : vector<2x1024xf32>
    %128 = vector.extract_strided_slice %76 {offsets = [20, 0], sizes = [2, 64], strides = [1, 1]} : vector<32x64xf32> to vector<2x64xf32>
    %129 = arith.truncf %128 : vector<2x64xf32> to vector<2x64xbf16>
    %c640 = arith.constant 640 : index
    %c0_62 = arith.constant 0 : index
    %130 = vector.load %arg7[%c640, %c0_62] : memref<1024x1024xbf16, #tpu.memory_space<vmem>>, vector<64x1024xbf16>
    %cst_63 = arith.constant dense<0.000000e+00> : vector<2x1024xf32>
    %131 = tpu.matmul %129, %130, %cst_63 {dimension_numbers = #tpu.dot_dimension_numbers<[1], [0], [0], [1], [0, 0, 1, 1], [], []>} : vector<2x64xbf16>, vector<64x1024xbf16>, vector<2x1024xf32> -> vector<2x1024xf32>
    %132 = arith.addf %127, %131 : vector<2x1024xf32>
    %133 = vector.extract_strided_slice %76 {offsets = [22, 0], sizes = [2, 64], strides = [1, 1]} : vector<32x64xf32> to vector<2x64xf32>
    %134 = arith.truncf %133 : vector<2x64xf32> to vector<2x64xbf16>
    %c704 = arith.constant 704 : index
    %c0_64 = arith.constant 0 : index
    %135 = vector.load %arg7[%c704, %c0_64] : memref<1024x1024xbf16, #tpu.memory_space<vmem>>, vector<64x1024xbf16>
    %cst_65 = arith.constant dense<0.000000e+00> : vector<2x1024xf32>
    %136 = tpu.matmul %134, %135, %cst_65 {dimension_numbers = #tpu.dot_dimension_numbers<[1], [0], [0], [1], [0, 0, 1, 1], [], []>} : vector<2x64xbf16>, vector<64x1024xbf16>, vector<2x1024xf32> -> vector<2x1024xf32>
    %137 = arith.addf %132, %136 : vector<2x1024xf32>
    %138 = vector.extract_strided_slice %76 {offsets = [24, 0], sizes = [2, 64], strides = [1, 1]} : vector<32x64xf32> to vector<2x64xf32>
    %139 = arith.truncf %138 : vector<2x64xf32> to vector<2x64xbf16>
    %c768 = arith.constant 768 : index
    %c0_66 = arith.constant 0 : index
    %140 = vector.load %arg7[%c768, %c0_66] : memref<1024x1024xbf16, #tpu.memory_space<vmem>>, vector<64x1024xbf16>
    %cst_67 = arith.constant dense<0.000000e+00> : vector<2x1024xf32>
    %141 = tpu.matmul %139, %140, %cst_67 {dimension_numbers = #tpu.dot_dimension_numbers<[1], [0], [0], [1], [0, 0, 1, 1], [], []>} : vector<2x64xbf16>, vector<64x1024xbf16>, vector<2x1024xf32> -> vector<2x1024xf32>
    %142 = arith.addf %137, %141 : vector<2x1024xf32>
    %143 = vector.extract_strided_slice %76 {offsets = [26, 0], sizes = [2, 64], strides = [1, 1]} : vector<32x64xf32> to vector<2x64xf32>
    %144 = arith.truncf %143 : vector<2x64xf32> to vector<2x64xbf16>
    %c832 = arith.constant 832 : index
    %c0_68 = arith.constant 0 : index
    %145 = vector.load %arg7[%c832, %c0_68] : memref<1024x1024xbf16, #tpu.memory_space<vmem>>, vector<64x1024xbf16>
    %cst_69 = arith.constant dense<0.000000e+00> : vector<2x1024xf32>
    %146 = tpu.matmul %144, %145, %cst_69 {dimension_numbers = #tpu.dot_dimension_numbers<[1], [0], [0], [1], [0, 0, 1, 1], [], []>} : vector<2x64xbf16>, vector<64x1024xbf16>, vector<2x1024xf32> -> vector<2x1024xf32>
    %147 = arith.addf %142, %146 : vector<2x1024xf32>
    %148 = vector.extract_strided_slice %76 {offsets = [28, 0], sizes = [2, 64], strides = [1, 1]} : vector<32x64xf32> to vector<2x64xf32>
    %149 = arith.truncf %148 : vector<2x64xf32> to vector<2x64xbf16>
    %c896 = arith.constant 896 : index
    %c0_70 = arith.constant 0 : index
    %150 = vector.load %arg7[%c896, %c0_70] : memref<1024x1024xbf16, #tpu.memory_space<vmem>>, vector<64x1024xbf16>
    %cst_71 = arith.constant dense<0.000000e+00> : vector<2x1024xf32>
    %151 = tpu.matmul %149, %150, %cst_71 {dimension_numbers = #tpu.dot_dimension_numbers<[1], [0], [0], [1], [0, 0, 1, 1], [], []>} : vector<2x64xbf16>, vector<64x1024xbf16>, vector<2x1024xf32> -> vector<2x1024xf32>
    %152 = arith.addf %147, %151 : vector<2x1024xf32>
    %153 = vector.extract_strided_slice %76 {offsets = [30, 0], sizes = [2, 64], strides = [1, 1]} : vector<32x64xf32> to vector<2x64xf32>
    %154 = arith.truncf %153 : vector<2x64xf32> to vector<2x64xbf16>
    %c960 = arith.constant 960 : index
    %c0_72 = arith.constant 0 : index
    %155 = vector.load %arg7[%c960, %c0_72] : memref<1024x1024xbf16, #tpu.memory_space<vmem>>, vector<64x1024xbf16>
    %cst_73 = arith.constant dense<0.000000e+00> : vector<2x1024xf32>
    %156 = tpu.matmul %154, %155, %cst_73 {dimension_numbers = #tpu.dot_dimension_numbers<[1], [0], [0], [1], [0, 0, 1, 1], [], []>} : vector<2x64xbf16>, vector<64x1024xbf16>, vector<2x1024xf32> -> vector<2x1024xf32>
    %157 = arith.addf %152, %156 : vector<2x1024xf32>
    %158 = vector.broadcast %2 : vector<1x1024xf32> to vector<2x1024xf32>
    %159 = arith.addf %157, %158 : vector<2x1024xf32>
    %cst_74 = arith.constant 0.000000e+00 : f32
    %160 = vector.broadcast %cst_74 : f32 to vector<2x1024xf32>
    %161 = arith.cmpf oge, %159, %160 : vector<2x1024xf32>
    %cst_75 = arith.constant 0.00999999977 : f32
    %162 = vector.broadcast %cst_75 : f32 to vector<2x1024xf32>
    %163 = arith.mulf %162, %159 : vector<2x1024xf32>
    %164 = arith.select %161, %159, %163 : vector<2x1024xi1>, vector<2x1024xf32>
    %165 = arith.truncf %164 : vector<2x1024xf32> to vector<2x1024xbf16>
    %c0_76 = arith.constant 0 : index
    %c0_77 = arith.constant 0 : index
    %166 = vector.load %arg5[%c0_76, %c0_77] : memref<1024x12xbf16, #tpu.memory_space<vmem>>, vector<1024x12xbf16>
    %cst_78 = arith.constant dense<0.000000e+00> : vector<2x12xf32>
    %167 = tpu.matmul %165, %166, %cst_78 {dimension_numbers = #tpu.dot_dimension_numbers<[1], [0], [0], [1], [0, 0, 1, 1], [], []>} : vector<2x1024xbf16>, vector<1024x12xbf16>, vector<2x12xf32> -> vector<2x12xf32>
    %168 = vector.broadcast %3 : vector<1x12xf32> to vector<2x12xf32>
    %169 = arith.addf %167, %168 : vector<2x12xf32>
    %c0_79 = arith.constant 0 : index
    %c0_80 = arith.constant 0 : index
    %170 = vector.load %arg6[%c0_79, %c0_80] : memref<2x12xf32, #tpu.memory_space<vmem>>, vector<2x12xf32>
    tpu.vector_store %arg6[%c0_79, %c0_80], %169 {strides = array<i32>} : memref<2x12xf32, #tpu.memory_space<vmem>>, vector<2x12xf32>,
    return
  }
}

</mosaic_0001>

<llo_original>
// kernel: net_withoutLS_forward.1
$region0: #{net_withoutLS_forward.1}
  #allocation0 [shape = 'u32[]', space=smem, size = 0x4, offset = 0x4, fixed_abs, tag = 'smem constant byte address 0x4 - core index']
  #allocation1 [shape = 'u32[72,128]{1,0:T(1,128)}', space=vmem, size = 0x9000, scoped, tag = 'internal scratch']
  #allocation2 [shape = 'bf16[1024,1024]{1,0:T(8,128)(2,1)}', space=vmem, size = 0x200000, scoped, tag = 'scratch operand']
  #allocation3 [shape = 's32[1]{0}', space=sflag, size = 0x4, scoped, tag = 'scratch operand']
  #allocation10 [shape = 's32[]', space=sflag, size = 0x4, offset = 0, fixed_abs, tag = 'sflag constant byte address 0x0 - dummy sync flag']
  #allocation11 [shape = 's32[]', space=sflag, size = 0x4, offset = 0, fixed_abs, tag = 'sflag constant byte address 0x0 - dummy sync flag']
  #allocation12 [shape = 'u32[]', space=smem, size = 0x4, offset = 0x44, fixed_abs, tag = 'smem constant byte address 0x44 - assertion arg 0']
  #allocation13 [shape = 'u32[]', space=smem, size = 0x4, offset = 0x48, fixed_abs, tag = 'smem constant byte address 0x48 - assertion arg 1']
  %s0 = inlined_call_operand.vmem [shape: f32[72,18], index: 0, kind: input, shape index: {}]
  %s1 = inlined_call_operand.hbm [shape: f32[18,64], index: 1, kind: input, shape index: {}]
  %s2 = inlined_call_operand.vmem [shape: bf16[576,64], index: 2, kind: input, shape index: {}]
  %s3 = inlined_call_operand.hbm [shape: f32[4,1024], index: 3, kind: input, shape index: {}]
  %s4 = inlined_call_operand.hbm [shape: bf16[1024,1024], index: 4, kind: input, shape index: {}]
  %s5 = inlined_call_operand.vmem [shape: bf16[1024,12], index: 5, kind: input, shape index: {}]
  %s6 = inlined_call_operand.hbm [shape: f32[2,12], index: 6, kind: output, shape index: {}]
  %s7 = sld [smem:[#allocation0]]
  $region42: #{net_withoutLS_forward.1} parent=0
    _
  %s9 = ssub.s32 1, %s7
  %s10 = scalar_select 0, %s9, %s7
  $region1: #{net_withoutLS_forward.1} parent=0
    #allocation4 [shape = 'u8[12288]{0}', space=vmem, size = 0x3000, scoped, tag = 'input window, operand 1, single buffered']
    #allocation5 [shape = 's32[1]{0}', space=sflag, size = 0x4, scoped, tag = 'scoped memory for net_withoutLS_forward.1']
    #allocation6 [shape = 's32[1]{0}', space=sflag, size = 0x4, scoped, tag = 'scoped memory for net_withoutLS_forward.1']
    #allocation7 [shape = 'u8[16384]{0}', space=vmem, size = 0x4000, scoped, tag = 'input window, operand 3, single buffered']
    #allocation8 [shape = 's32[1]{0}', space=sflag, size = 0x4, scoped, tag = 'scoped memory for net_withoutLS_forward.1']
    #allocation9 [shape = 'u8[1024]{0}', space=vmem, size = 0x400, scoped, tag = 'output window, operand 0, single buffered']
    %11 = vsyncpa [#allocation5], 0
    %12 = vsyncpa [#allocation8], 0
    %13 = vsyncpa [#allocation6], 0
    // Predicated region
    $region2: #{net_withoutLS_forward.1} parent=1 // pred_check
      _
    $region3: #{net_withoutLS_forward.1} parent=1 // pred_check_branch
      %15 = sbr.rel (0) target = $region5
    $region4: #{net_withoutLS_forward.1} parent=1 // pred_region
      _
    $region5: #{net_withoutLS_forward.1} parent=1 // pred_fallthru
      _
    // Predicated region
    $region6: #{net_withoutLS_forward.1} parent=1 // pred_check
      _
    $region7: #{net_withoutLS_forward.1} parent=1 // pred_check_branch
      %17 = sbr.rel (0) target = $region9
    $region8: #{net_withoutLS_forward.1} parent=1 // pred_region
      %19 = vsyncadd [#allocation5], 0
      %s20 = sshll.u32 %s1, 4
      %s21 = int_to_ptr.hbm [resolvable:$true] %s20
      %s22 = sshll.u32 [#allocation4], 4
      %s23 = int_to_ptr.vmem [resolvable:$true] %s22
      %28 = dma.hbm_to_vmem [thread:$0]  %s21, 384, %s23, [#allocation5], 128, 128, 8
    $region9: #{net_withoutLS_forward.1} parent=1 // pred_fallthru
      _
    // Predicated region
    $region10: #{net_withoutLS_forward.1} parent=1 // pred_check
      _
    $region11: #{net_withoutLS_forward.1} parent=1 // pred_check_branch
      %30 = sbr.rel (0) target = $region13
    $region12: #{net_withoutLS_forward.1} parent=1 // pred_region
      _
    $region13: #{net_withoutLS_forward.1} parent=1 // pred_fallthru
      _
    // Predicated region
    $region14: #{net_withoutLS_forward.1} parent=1 // pred_check
      _
    $region15: #{net_withoutLS_forward.1} parent=1 // pred_check_branch
      %32 = sbr.rel (0) target = $region17
    $region16: #{net_withoutLS_forward.1} parent=1 // pred_region
      %34 = vsyncadd [#allocation8], 0
      %s36 = sshll.u32 %s3, 4
      %s37 = int_to_ptr.hbm [resolvable:$true] %s36
      %s38 = sshll.u32 [#allocation7], 4
      %s39 = int_to_ptr.vmem [resolvable:$true] %s38
      %41 = dma.hbm_to_vmem [thread:$0]  %s37, 512, %s39, [#allocation8]
    $region17: #{net_withoutLS_forward.1} parent=1 // pred_fallthru
      _
    // Predicated region
    $region18: #{net_withoutLS_forward.1} parent=1 // pred_check
      _
    $region19: #{net_withoutLS_forward.1} parent=1 // pred_check_branch
      %43 = sbr.rel (0) target = $region21
    $region20: #{net_withoutLS_forward.1} parent=1 // pred_region
      _
    $region21: #{net_withoutLS_forward.1} parent=1 // pred_fallthru
      _
    // Predicated region
    $region22: #{net_withoutLS_forward.1} parent=1 // pred_check
      _
    $region23: #{net_withoutLS_forward.1} parent=1 // pred_check_branch
      %45 = sbr.rel (0) target = $region25
    $region24: #{net_withoutLS_forward.1} parent=1 // pred_region
      %47 = dma.done [#allocation5], 384
    $region25: #{net_withoutLS_forward.1} parent=1 // pred_fallthru
      _
    // Predicated region
    $region26: #{net_withoutLS_forward.1} parent=1 // pred_check
      _
    $region27: #{net_withoutLS_forward.1} parent=1 // pred_check_branch
      %49 = sbr.rel (0) target = $region29
    $region28: #{net_withoutLS_forward.1} parent=1 // pred_region
      %51 = dma.done [#allocation8], 512
    $region29: #{net_withoutLS_forward.1} parent=1 // pred_fallthru
      _
    // Predicated region
    $region30: #{net_withoutLS_forward.1} parent=1 // pred_check
      _
    $region31: #{net_withoutLS_forward.1} parent=1 // pred_check_branch
      %54 = sbr.rel target = $region33
    $region32: #{net_withoutLS_forward.1} parent=1 // pred_region
      %55 = sst [smem:[#allocation12]] [#allocation11]
      %56 = sst [smem:[#allocation13]] [#allocation10]
    $region33: #{net_withoutLS_forward.1} parent=1 // pred_fallthru
      _
    %58 = shalt.err (0)
    %s60 = sshll.u32 %s4, 4
    %s61 = int_to_ptr.hbm [resolvable:$true] %s60
    %s62 = sshll.u32 [#allocation2], 4
    %s63 = int_to_ptr.vmem [resolvable:$true] %s62
    %65 = dma.hbm_to_vmem [thread:$0]  %s61, 65536, %s63, [#allocation3]
    %v66 = vld [vmem:[#allocation7] sm:$0x1]
    %v67 = vld [vmem:[#allocation7 + $0x1] sm:$0x1]
    %s68 = scalar_lea.vmem [#allocation7], 2
    %v69 = vld [vmem:[%s68] ss:$4 sm:$0xff]
    %v70 = vld [vmem:[#allocation7 + $0x3] sm:$0x1]
    %v71 = vld [vmem:[%s0] sm:$0xff]
    %v72 = vld [vmem:[%s0 + $0x8] sm:$0xff]
    %v73 = vld [vmem:[%s0 + $0x10] sm:$0xff]
    %v74 = vld [vmem:[%s0 + $0x18] sm:$0xff]
    %v75 = vld [vmem:[%s0 + $0x20] sm:$0xff]
    %v76 = vld [vmem:[%s0 + $0x28] sm:$0xff]
    %v77 = vld [vmem:[%s0 + $0x30] sm:$0xff]
    %v78 = vld [vmem:[%s0 + $0x38] sm:$0xff]
    %v79 = vld [vmem:[%s0 + $0x40] sm:$0xff]
    %v80 = vld [vmem:[#allocation4] sm:$0xff]
    %v81 = vld [vmem:[#allocation4 + $0x8] sm:$0xff]
    %v82 = vld [vmem:[#allocation4 + $0x10] sm:$0x3]
    %v83 = vperm.slane %v66, 0
    %vm84 = vcmask 146432
    %v86 = vsel %vm84, %v71, 0
    %v89 = vsel %vm84, %v72, 0
    %v92 = vsel %vm84, %v73, 0
    %v95 = vsel %vm84, %v74, 0
    %v98 = vsel %vm84, %v75, 0
    %v101 = vsel %vm84, %v76, 0
    %v104 = vsel %vm84, %v77, 0
    %v107 = vsel %vm84, %v78, 0
    %v110 = vsel %vm84, %v79, 0
    %vm112 = vcmask 1041408
    %v114 = vsel %vm112, %v82, 0
    %116 = vmatpush.msra.mxu0 0.0
    %117 = vmatpush.msra.mxu0 0.0
    %118 = vmatpush.msra.mxu0 0.0
    %119 = vmatpush.msra.mxu0 0.0
    %120 = vmatpush.msra.mxu0 0.0
    %121 = vmatpush.msra.mxu0 0.0
    %122 = vmatpush.msra.mxu0 0.0
    %123 = vmatpush.msra.mxu0 0.0
    %124 = vmatpush.msra.mxu0 0.0
    %125 = vmatpush.msra.mxu0 0.0
    %126 = vmatpush.msra.mxu0 0.0
    %127 = vmatpush.msra.mxu0 0.0
    %128 = vmatpush.msra.mxu0 0.0
    %129 = vmatpush.msra.mxu0 %v114
    %130 = vmatpush.msra.mxu0 %v81
    %131 = vmatpush.msra.mxu0 %v80
    %132 = vmatmul.f32.gmra.mxu0 %v86
    %v133 = vpop.f32.mrf.mxu0
    %v134 = vadd.f32 %v83, %v133
    %135 = vmatmul.f32.gmra.mxu0 %v89
    %v136 = vpop.f32.mrf.mxu0
    %v137 = vadd.f32 %v83, %v136
    %138 = vmatmul.f32.gmra.mxu0 %v92
    %v139 = vpop.f32.mrf.mxu0
    %v140 = vadd.f32 %v83, %v139
    %141 = vmatmul.f32.gmra.mxu0 %v95
    %v142 = vpop.f32.mrf.mxu0
    %v143 = vadd.f32 %v83, %v142
    %144 = vmatmul.f32.gmra.mxu0 %v98
    %v145 = vpop.f32.mrf.mxu0
    %v146 = vadd.f32 %v83, %v145
    %147 = vmatmul.f32.gmra.mxu0 %v101
    %v148 = vpop.f32.mrf.mxu0
    %v149 = vadd.f32 %v83, %v148
    %150 = vmatmul.f32.gmra.mxu0 %v104
    %v151 = vpop.f32.mrf.mxu0
    %v152 = vadd.f32 %v83, %v151
    %153 = vmatmul.f32.gmra.mxu0 %v107
    %v154 = vpop.f32.mrf.mxu0
    %v155 = vadd.f32 %v83, %v154
    %156 = vmatmul.f32.gmra.mxu0 %v110
    %v157 = vpop.f32.mrf.mxu0
    %v158 = vadd.f32 %v83, %v157
    %159 = vdwg.mxu0
    %vm160 = vcmp.ge.f32.partialorder %v134, 0.0
    %vm161 = vcmp.ge.f32.partialorder %v137, 0.0
    %vm162 = vcmp.ge.f32.partialorder %v140, 0.0
    %vm163 = vcmp.ge.f32.partialorder %v143, 0.0
    %vm164 = vcmp.ge.f32.partialorder %v146, 0.0
    %vm165 = vcmp.ge.f32.partialorder %v149, 0.0
    %vm166 = vcmp.ge.f32.partialorder %v152, 0.0
    %vm167 = vcmp.ge.f32.partialorder %v155, 0.0
    %vm168 = vcmp.ge.f32.partialorder %v158, 0.0
    %v169 = vmul.f32 %v134, 0.01
    %v170 = vmul.f32 %v137, 0.01
    %v171 = vmul.f32 %v140, 0.01
    %v172 = vmul.f32 %v143, 0.01
    %v173 = vmul.f32 %v146, 0.01
    %v174 = vmul.f32 %v149, 0.01
    %v175 = vmul.f32 %v152, 0.01
    %v176 = vmul.f32 %v155, 0.01
    %v177 = vmul.f32 %v158, 0.01
    %v178 = vsel %vm160, %v134, %v169
    %v179 = vsel %vm161, %v137, %v170
    %v180 = vsel %vm162, %v140, %v171
    %v181 = vsel %vm163, %v143, %v172
    %v182 = vsel %vm164, %v146, %v173
    %v183 = vsel %vm165, %v149, %v174
    %v184 = vsel %vm166, %v152, %v175
    %v185 = vsel %vm167, %v155, %v176
    %v186 = vsel %vm168, %v158, %v177
    %v196 = vrot.slane %v178, 4
    %v197 = vrot.slane %v179, 4
    %v198 = vrot.slane %v180, 4
    %v199 = vrot.slane %v181, 4
    %v200 = vrot.slane %v182, 4
    %v201 = vrot.slane %v183, 4
    %v202 = vrot.slane %v184, 4
    %v203 = vrot.slane %v185, 4
    %v204 = vrot.slane %v186, 4
    %205 = vst [vmem:[#allocation1] ss:$2 sm:$0xff] %v178
    %s206 = scalar_lea.vmem [#allocation1], 1
    %207 = vst [vmem:[%s206] ss:$2 sm:$0xff] %v196
    %s208 = scalar_lea.vmem [#allocation1], 16
    %209 = vst [vmem:[%s208] ss:$2 sm:$0xff] %v197
    %s210 = scalar_lea.vmem [#allocation1], 17
    %211 = vst [vmem:[%s210] ss:$2 sm:$0xff] %v180
    %s212 = scalar_lea.vmem [#allocation1], 32
    %213 = vst [vmem:[%s212] ss:$2 sm:$0xff] %v181
    %s214 = scalar_lea.vmem [#allocation1], 33
    %215 = vst [vmem:[%s214] ss:$2 sm:$0xff] %v199
    %s216 = scalar_lea.vmem [#allocation1], 48
    %217 = vst [vmem:[%s216] ss:$2 sm:$0xff] %v200
    %s218 = scalar_lea.vmem [#allocation1], 49
    %219 = vst [vmem:[%s218] ss:$2 sm:$0xff] %v183
    %v220 = vld.sshfl [vmem:[#allocation1] sm:$0xff pattern:$0x75316420]
    %v221 = vld.sshfl [vmem:[#allocation1 + $0x10] sm:$0xff pattern:$0x75316420]
    %v222 = vld.sshfl [vmem:[#allocation1 + $0x20] sm:$0xff pattern:$0x75316420]
    %v223 = vld.sshfl [vmem:[#allocation1 + $0x30] sm:$0xff pattern:$0x75316420]
    %v228 = vpack.c.bf16 %v221, %v220
    %v229 = vpack.c.bf16 %v223, %v222
    %v230 = vld [vmem:[%s2] sm:$0xf]
    %v231 = vld [vmem:[%s2 + $0x4] sm:$0xf]
    %v232 = vld [vmem:[%s2 + $0x8] sm:$0xf]
    %v233 = vld [vmem:[%s2 + $0xc] sm:$0xf]
    %v234 = vld [vmem:[%s2 + $0x10] sm:$0xf]
    %v235 = vld [vmem:[%s2 + $0x14] sm:$0xf]
    %v236 = vld [vmem:[%s2 + $0x18] sm:$0xf]
    %v237 = vld [vmem:[%s2 + $0x1c] sm:$0xf]
    %vm238 = vcmask 1045508
    %vm239 = vmor %vm112, %vm238
    %v240 = vrot.slane %v178, 6
    %v241 = vrot.slane %v240, 4
    %v242 = vrot.slane %v196, 6
    %v243 = vsel %vm239, %v241, %v242
    %v244 = vrot.slane %v242, 4
    %v245 = vrot.slane %v179, 6
    %v246 = vsel %vm239, %v244, %v245
    %v247 = vrot.slane %v197, 6
    %v248 = vrot.slane %v247, 4
    %v249 = vrot.slane %v180, 6
    %v250 = vsel %vm239, %v248, %v249
    %v251 = vrot.slane %v249, 4
    %v252 = vrot.slane %v198, 6
    %v253 = vsel %vm239, %v251, %v252
    %v254 = vrot.slane %v181, 6
    %v255 = vrot.slane %v254, 4
    %v256 = vrot.slane %v199, 6
    %v257 = vsel %vm239, %v255, %v256
    %v258 = vrot.slane %v256, 4
    %v259 = vrot.slane %v182, 6
    %v260 = vsel %vm239, %v258, %v259
    %v261 = vrot.slane %v200, 6
    %v262 = vrot.slane %v261, 4
    %v263 = vrot.slane %v183, 6
    %v264 = vsel %vm239, %v262, %v263
    %v265 = vrot.slane %v263, 4
    %v266 = vrot.slane %v201, 6
    %v267 = vsel %vm239, %v265, %v266
    %268 = vst [vmem:[#allocation1] ss:$2 sm:$0xff] %v243
    %s269 = scalar_lea.vmem [#allocation1], 1
    %270 = vst [vmem:[%s269] ss:$2 sm:$0xff] %v246
    %s271 = scalar_lea.vmem [#allocation1], 16
    %272 = vst [vmem:[%s271] ss:$2 sm:$0xff] %v250
    %s273 = scalar_lea.vmem [#allocation1], 17
    %274 = vst [vmem:[%s273] ss:$2 sm:$0xff] %v253
    %s275 = scalar_lea.vmem [#allocation1], 32
    %276 = vst [vmem:[%s275] ss:$2 sm:$0xff] %v257
    %s277 = scalar_lea.vmem [#allocation1], 33
    %278 = vst [vmem:[%s277] ss:$2 sm:$0xff] %v260
    %s279 = scalar_lea.vmem [#allocation1], 48
    %280 = vst [vmem:[%s279] ss:$2 sm:$0xff] %v264
    %s281 = scalar_lea.vmem [#allocation1], 49
    %282 = vst [vmem:[%s281] ss:$2 sm:$0xff] %v267
    %v283 = vld.sshfl [vmem:[#allocation1] sm:$0xff pattern:$0x75316420]
    %v284 = vld.sshfl [vmem:[#allocation1 + $0x10] sm:$0xff pattern:$0x75316420]
    %v285 = vld.sshfl [vmem:[#allocation1 + $0x20] sm:$0xff pattern:$0x75316420]
    %v286 = vld.sshfl [vmem:[#allocation1 + $0x30] sm:$0xff pattern:$0x75316420]
    %v291 = vpack.c.bf16 %v284, %v283
    %v292 = vpack.c.bf16 %v286, %v285
    %v293 = vld [vmem:[%s2 + $0x20] sm:$0xf]
    %v294 = vld [vmem:[%s2 + $0x24] sm:$0xf]
    %v295 = vld [vmem:[%s2 + $0x28] sm:$0xf]
    %v296 = vld [vmem:[%s2 + $0x2c] sm:$0xf]
    %v297 = vld [vmem:[%s2 + $0x30] sm:$0xf]
    %v298 = vld [vmem:[%s2 + $0x34] sm:$0xf]
    %v299 = vld [vmem:[%s2 + $0x38] sm:$0xf]
    %v300 = vld [vmem:[%s2 + $0x3c] sm:$0xf]
    %v309 = vunpack.c.l.b16 %v293
    %v310 = vunpack.c.l.b16 %v294
    %v311 = vunpack.c.l.b16 %v295
    %v312 = vunpack.c.l.b16 %v296
    %v313 = vunpack.c.l.b16 %v297
    %v314 = vunpack.c.l.b16 %v298
    %v315 = vunpack.c.l.b16 %v299
    %v316 = vunpack.c.l.b16 %v300
    %v317 = vpack.c.b16 %v310, %v309
    %v318 = vpack.c.b16 %v312, %v311
    %v319 = vpack.c.b16 %v314, %v313
    %v320 = vpack.c.b16 %v316, %v315
    %vm325 = vcmask 523264
    %v327 = vsel %vm325, %v291, 0
    %v330 = vsel %vm325, %v292, 0
    %332 = vmatpush.bf16.msra.mxu0 0
    %333 = vmatpush.bf16.msra.mxu0 0
    %334 = vmatpush.bf16.msra.mxu0 0
    %335 = vmatpush.bf16.msra.mxu0 0
    %336 = vmatpush.bf16.msra.mxu0 %v320
    %337 = vmatpush.bf16.msra.mxu0 %v319
    %338 = vmatpush.bf16.msra.mxu0 %v318
    %339 = vmatpush.bf16.msra.mxu0 %v317
    %340 = vmatmul.bf16.gmra.mxu0 %v327
    %v341 = vpop.f32.mrf.mxu0
    %v342 = vadd.f32 0.0, %v341
    %v343 = vpop.f32.mrf.mxu0
    %v344 = vadd.f32 0.0, %v343
    %345 = vmatmul.bf16.gmra.mxu0 %v330
    %v346 = vpop.f32.mrf.mxu0
    %v347 = vadd.f32 0.0, %v346
    %v348 = vpop.f32.mrf.mxu0
    %v349 = vadd.f32 0.0, %v348
    %350 = vdwg.mxu0
    %v359 = vunpack.c.l.b16 %v230
    %v360 = vunpack.c.l.b16 %v231
    %v361 = vunpack.c.l.b16 %v232
    %v362 = vunpack.c.l.b16 %v233
    %v363 = vunpack.c.l.b16 %v234
    %v364 = vunpack.c.l.b16 %v235
    %v365 = vunpack.c.l.b16 %v236
    %v366 = vunpack.c.l.b16 %v237
    %v367 = vpack.c.b16 %v360, %v359
    %v368 = vpack.c.b16 %v362, %v361
    %v369 = vpack.c.b16 %v364, %v363
    %v370 = vpack.c.b16 %v366, %v365
    %v376 = vsel %vm325, %v228, 0
    %v379 = vsel %vm325, %v229, 0
    %381 = vmatpush.bf16.msra.mxu0 0
    %382 = vmatpush.bf16.msra.mxu0 0
    %383 = vmatpush.bf16.msra.mxu0 0
    %384 = vmatpush.bf16.msra.mxu0 0
    %385 = vmatpush.bf16.msra.mxu0 %v370
    %386 = vmatpush.bf16.msra.mxu0 %v369
    %387 = vmatpush.bf16.msra.mxu0 %v368
    %388 = vmatpush.bf16.msra.mxu0 %v367
    %389 = vmatmul.bf16.gmra.mxu0 %v376
    %v390 = vpop.f32.mrf.mxu0
    %v391 = vadd.f32 %v342, %v390
    %v392 = vpop.f32.mrf.mxu0
    %v393 = vadd.f32 %v344, %v392
    %394 = vmatmul.bf16.gmra.mxu0 %v379
    %v395 = vpop.f32.mrf.mxu0
    %v396 = vadd.f32 %v347, %v395
    %v397 = vpop.f32.mrf.mxu0
    %v398 = vadd.f32 %v349, %v397
    %399 = vdwg.mxu0
    %400 = vst [vmem:[#allocation1] ss:$2 sm:$0xff] %v196
    %s401 = scalar_lea.vmem [#allocation1], 1
    %402 = vst [vmem:[%s401] ss:$2 sm:$0xff] %v179
    %s403 = scalar_lea.vmem [#allocation1], 16
    %404 = vst [vmem:[%s403] ss:$2 sm:$0xff] %v180
    %s405 = scalar_lea.vmem [#allocation1], 17
    %406 = vst [vmem:[%s405] ss:$2 sm:$0xff] %v198
    %s407 = scalar_lea.vmem [#allocation1], 32
    %408 = vst [vmem:[%s407] ss:$2 sm:$0xff] %v199
    %s409 = scalar_lea.vmem [#allocation1], 33
    %410 = vst [vmem:[%s409] ss:$2 sm:$0xff] %v182
    %s411 = scalar_lea.vmem [#allocation1], 48
    %412 = vst [vmem:[%s411] ss:$2 sm:$0xff] %v183
    %s413 = scalar_lea.vmem [#allocation1], 49
    %414 = vst [vmem:[%s413] ss:$2 sm:$0xff] %v201
    %v415 = vld.sshfl [vmem:[#allocation1] sm:$0xff pattern:$0x75316420]
    %v416 = vld.sshfl [vmem:[#allocation1 + $0x10] sm:$0xff pattern:$0x75316420]
    %v417 = vld.sshfl [vmem:[#allocation1 + $0x20] sm:$0xff pattern:$0x75316420]
    %v418 = vld.sshfl [vmem:[#allocation1 + $0x30] sm:$0xff pattern:$0x75316420]
    %v423 = vpack.c.bf16 %v416, %v415
    %v424 = vpack.c.bf16 %v418, %v417
    %v425 = vld [vmem:[%s2 + $0x40] sm:$0xf]
    %v426 = vld [vmem:[%s2 + $0x44] sm:$0xf]
    %v427 = vld [vmem:[%s2 + $0x48] sm:$0xf]
    %v428 = vld [vmem:[%s2 + $0x4c] sm:$0xf]
    %v429 = vld [vmem:[%s2 + $0x50] sm:$0xf]
    %v430 = vld [vmem:[%s2 + $0x54] sm:$0xf]
    %v431 = vld [vmem:[%s2 + $0x58] sm:$0xf]
    %v432 = vld [vmem:[%s2 + $0x5c] sm:$0xf]
    %v441 = vunpack.c.l.b16 %v425
    %v442 = vunpack.c.l.b16 %v426
    %v443 = vunpack.c.l.b16 %v427
    %v444 = vunpack.c.l.b16 %v428
    %v445 = vunpack.c.l.b16 %v429
    %v446 = vunpack.c.l.b16 %v430
    %v447 = vunpack.c.l.b16 %v431
    %v448 = vunpack.c.l.b16 %v432
    %v449 = vpack.c.b16 %v442, %v441
    %v450 = vpack.c.b16 %v444, %v443
    %v451 = vpack.c.b16 %v446, %v445
    %v452 = vpack.c.b16 %v448, %v447
    %v458 = vsel %vm325, %v423, 0
    %v461 = vsel %vm325, %v424, 0
    %463 = vmatpush.bf16.msra.mxu0 0
    %464 = vmatpush.bf16.msra.mxu0 0
    %465 = vmatpush.bf16.msra.mxu0 0
    %466 = vmatpush.bf16.msra.mxu0 0
    %467 = vmatpush.bf16.msra.mxu0 %v452
    %468 = vmatpush.bf16.msra.mxu0 %v451
    %469 = vmatpush.bf16.msra.mxu0 %v450
    %470 = vmatpush.bf16.msra.mxu0 %v449
    %471 = vmatmul.bf16.gmra.mxu0 %v458
    %v472 = vpop.f32.mrf.mxu0
    %v473 = vadd.f32 0.0, %v472
    %v474 = vpop.f32.mrf.mxu0
    %v475 = vadd.f32 0.0, %v474
    %476 = vmatmul.bf16.gmra.mxu0 %v461
    %v477 = vpop.f32.mrf.mxu0
    %v478 = vadd.f32 0.0, %v477
    %v479 = vpop.f32.mrf.mxu0
    %v480 = vadd.f32 0.0, %v479
    %481 = vdwg.mxu0
    %v482 = vadd.f32 %v391, %v473
    %v483 = vadd.f32 %v393, %v475
    %v484 = vadd.f32 %v396, %v478
    %v485 = vadd.f32 %v398, %v480
    %486 = vst [vmem:[#allocation1] ss:$2 sm:$0xff] %v197
    %s487 = scalar_lea.vmem [#allocation1], 1
    %488 = vst [vmem:[%s487] ss:$2 sm:$0xff] %v180
    %s489 = scalar_lea.vmem [#allocation1], 16
    %490 = vst [vmem:[%s489] ss:$2 sm:$0xff] %v181
    %s491 = scalar_lea.vmem [#allocation1], 17
    %492 = vst [vmem:[%s491] ss:$2 sm:$0xff] %v199
    %s493 = scalar_lea.vmem [#allocation1], 32
    %494 = vst [vmem:[%s493] ss:$2 sm:$0xff] %v200
    %s495 = scalar_lea.vmem [#allocation1], 33
    %496 = vst [vmem:[%s495] ss:$2 sm:$0xff] %v183
    %s497 = scalar_lea.vmem [#allocation1], 48
    %498 = vst [vmem:[%s497] ss:$2 sm:$0xff] %v184
    %s499 = scalar_lea.vmem [#allocation1], 49
    %500 = vst [vmem:[%s499] ss:$2 sm:$0xff] %v202
    %v501 = vld.sshfl [vmem:[#allocation1] sm:$0xff pattern:$0x75316420]
    %v502 = vld.sshfl [vmem:[#allocation1 + $0x10] sm:$0xff pattern:$0x75316420]
    %v503 = vld.sshfl [vmem:[#allocation1 + $0x20] sm:$0xff pattern:$0x75316420]
    %v504 = vld.sshfl [vmem:[#allocation1 + $0x30] sm:$0xff pattern:$0x75316420]
    %v509 = vpack.c.bf16 %v502, %v501
    %v510 = vpack.c.bf16 %v504, %v503
    %v511 = vld [vmem:[%s2 + $0x60] sm:$0xf]
    %v512 = vld [vmem:[%s2 + $0x64] sm:$0xf]
    %v513 = vld [vmem:[%s2 + $0x68] sm:$0xf]
    %v514 = vld [vmem:[%s2 + $0x6c] sm:$0xf]
    %v515 = vld [vmem:[%s2 + $0x70] sm:$0xf]
    %v516 = vld [vmem:[%s2 + $0x74] sm:$0xf]
    %v517 = vld [vmem:[%s2 + $0x78] sm:$0xf]
    %v518 = vld [vmem:[%s2 + $0x7c] sm:$0xf]
    %v527 = vunpack.c.l.b16 %v511
    %v528 = vunpack.c.l.b16 %v512
    %v529 = vunpack.c.l.b16 %v513
    %v530 = vunpack.c.l.b16 %v514
    %v531 = vunpack.c.l.b16 %v515
    %v532 = vunpack.c.l.b16 %v516
    %v533 = vunpack.c.l.b16 %v517
    %v534 = vunpack.c.l.b16 %v518
    %v535 = vpack.c.b16 %v528, %v527
    %v536 = vpack.c.b16 %v530, %v529
    %v537 = vpack.c.b16 %v532, %v531
    %v538 = vpack.c.b16 %v534, %v533
    %v544 = vsel %vm325, %v509, 0
    %v547 = vsel %vm325, %v510, 0
    %549 = vmatpush.bf16.msra.mxu0 0
    %550 = vmatpush.bf16.msra.mxu0 0
    %551 = vmatpush.bf16.msra.mxu0 0
    %552 = vmatpush.bf16.msra.mxu0 0
    %553 = vmatpush.bf16.msra.mxu0 %v538
    %554 = vmatpush.bf16.msra.mxu0 %v537
    %555 = vmatpush.bf16.msra.mxu0 %v536
    %556 = vmatpush.bf16.msra.mxu0 %v535
    %557 = vmatmul.bf16.gmra.mxu0 %v544
    %v558 = vpop.f32.mrf.mxu0
    %v559 = vadd.f32 0.0, %v558
    %v560 = vpop.f32.mrf.mxu0
    %v561 = vadd.f32 0.0, %v560
    %562 = vmatmul.bf16.gmra.mxu0 %v547
    %v563 = vpop.f32.mrf.mxu0
    %v564 = vadd.f32 0.0, %v563
    %v565 = vpop.f32.mrf.mxu0
    %v566 = vadd.f32 0.0, %v565
    %567 = vdwg.mxu0
    %v568 = vadd.f32 %v482, %v559
    %v569 = vadd.f32 %v483, %v561
    %v570 = vadd.f32 %v484, %v564
    %v571 = vadd.f32 %v485, %v566
    %v572 = vrot.slane %v184, 6
    %v573 = vrot.slane %v572, 4
    %v574 = vrot.slane %v202, 6
    %v575 = vsel %vm239, %v573, %v574
    %v576 = vrot.slane %v574, 4
    %v577 = vrot.slane %v185, 6
    %v578 = vsel %vm239, %v576, %v577
    %579 = vst [vmem:[#allocation1] ss:$2 sm:$0xff] %v250
    %s580 = scalar_lea.vmem [#allocation1], 1
    %581 = vst [vmem:[%s580] ss:$2 sm:$0xff] %v253
    %s582 = scalar_lea.vmem [#allocation1], 16
    %583 = vst [vmem:[%s582] ss:$2 sm:$0xff] %v257
    %s584 = scalar_lea.vmem [#allocation1], 17
    %585 = vst [vmem:[%s584] ss:$2 sm:$0xff] %v260
    %s586 = scalar_lea.vmem [#allocation1], 32
    %587 = vst [vmem:[%s586] ss:$2 sm:$0xff] %v264
    %s588 = scalar_lea.vmem [#allocation1], 33
    %589 = vst [vmem:[%s588] ss:$2 sm:$0xff] %v267
    %s590 = scalar_lea.vmem [#allocation1], 48
    %591 = vst [vmem:[%s590] ss:$2 sm:$0xff] %v575
    %s592 = scalar_lea.vmem [#allocation1], 49
    %593 = vst [vmem:[%s592] ss:$2 sm:$0xff] %v578
    %v594 = vld.sshfl [vmem:[#allocation1] sm:$0xff pattern:$0x75316420]
    %v595 = vld.sshfl [vmem:[#allocation1 + $0x10] sm:$0xff pattern:$0x75316420]
    %v596 = vld.sshfl [vmem:[#allocation1 + $0x20] sm:$0xff pattern:$0x75316420]
    %v597 = vld.sshfl [vmem:[#allocation1 + $0x30] sm:$0xff pattern:$0x75316420]
    %v602 = vpack.c.bf16 %v595, %v594
    %v603 = vpack.c.bf16 %v597, %v596
    %v604 = vld [vmem:[%s2 + $0x80] sm:$0xf]
    %v605 = vld [vmem:[%s2 + $0x84] sm:$0xf]
    %v606 = vld [vmem:[%s2 + $0x88] sm:$0xf]
    %v607 = vld [vmem:[%s2 + $0x8c] sm:$0xf]
    %v608 = vld [vmem:[%s2 + $0x90] sm:$0xf]
    %v609 = vld [vmem:[%s2 + $0x94] sm:$0xf]
    %v610 = vld [vmem:[%s2 + $0x98] sm:$0xf]
    %v611 = vld [vmem:[%s2 + $0x9c] sm:$0xf]
    %v620 = vunpack.c.l.b16 %v604
    %v621 = vunpack.c.l.b16 %v605
    %v622 = vunpack.c.l.b16 %v606
    %v623 = vunpack.c.l.b16 %v607
    %v624 = vunpack.c.l.b16 %v608
    %v625 = vunpack.c.l.b16 %v609
    %v626 = vunpack.c.l.b16 %v610
    %v627 = vunpack.c.l.b16 %v611
    %v628 = vpack.c.b16 %v621, %v620
    %v629 = vpack.c.b16 %v623, %v622
    %v630 = vpack.c.b16 %v625, %v624
    %v631 = vpack.c.b16 %v627, %v626
    %v637 = vsel %vm325, %v602, 0
    %v640 = vsel %vm325, %v603, 0
    %642 = vmatpush.bf16.msra.mxu0 0
    %643 = vmatpush.bf16.msra.mxu0 0
    %644 = vmatpush.bf16.msra.mxu0 0
    %645 = vmatpush.bf16.msra.mxu0 0
    %646 = vmatpush.bf16.msra.mxu0 %v631
    %647 = vmatpush.bf16.msra.mxu0 %v630
    %648 = vmatpush.bf16.msra.mxu0 %v629
    %649 = vmatpush.bf16.msra.mxu0 %v628
    %650 = vmatmul.bf16.gmra.mxu0 %v637
    %v651 = vpop.f32.mrf.mxu0
    %v652 = vadd.f32 0.0, %v651
    %v653 = vpop.f32.mrf.mxu0
    %v654 = vadd.f32 0.0, %v653
    %655 = vmatmul.bf16.gmra.mxu0 %v640
    %v656 = vpop.f32.mrf.mxu0
    %v657 = vadd.f32 0.0, %v656
    %v658 = vpop.f32.mrf.mxu0
    %v659 = vadd.f32 0.0, %v658
    %660 = vdwg.mxu0
    %v661 = vadd.f32 %v568, %v652
    %v662 = vadd.f32 %v569, %v654
    %v663 = vadd.f32 %v570, %v657
    %v664 = vadd.f32 %v571, %v659
    %665 = vst [vmem:[#allocation1] ss:$2 sm:$0xff] %v180
    %s666 = scalar_lea.vmem [#allocation1], 1
    %667 = vst [vmem:[%s666] ss:$2 sm:$0xff] %v198
    %s668 = scalar_lea.vmem [#allocation1], 16
    %669 = vst [vmem:[%s668] ss:$2 sm:$0xff] %v199
    %s670 = scalar_lea.vmem [#allocation1], 17
    %671 = vst [vmem:[%s670] ss:$2 sm:$0xff] %v182
    %s672 = scalar_lea.vmem [#allocation1], 32
    %673 = vst [vmem:[%s672] ss:$2 sm:$0xff] %v183
    %s674 = scalar_lea.vmem [#allocation1], 33
    %675 = vst [vmem:[%s674] ss:$2 sm:$0xff] %v201
    %s676 = scalar_lea.vmem [#allocation1], 48
    %677 = vst [vmem:[%s676] ss:$2 sm:$0xff] %v202
    %s678 = scalar_lea.vmem [#allocation1], 49
    %679 = vst [vmem:[%s678] ss:$2 sm:$0xff] %v185
    %v680 = vld.sshfl [vmem:[#allocation1] sm:$0xff pattern:$0x75316420]
    %v681 = vld.sshfl [vmem:[#allocation1 + $0x10] sm:$0xff pattern:$0x75316420]
    %v682 = vld.sshfl [vmem:[#allocation1 + $0x20] sm:$0xff pattern:$0x75316420]
    %v683 = vld.sshfl [vmem:[#allocation1 + $0x30] sm:$0xff pattern:$0x75316420]
    %v688 = vpack.c.bf16 %v681, %v680
    %v689 = vpack.c.bf16 %v683, %v682
    %v690 = vld [vmem:[%s2 + $0xa0] sm:$0xf]
    %v691 = vld [vmem:[%s2 + $0xa4] sm:$0xf]
    %v692 = vld [vmem:[%s2 + $0xa8] sm:$0xf]
    %v693 = vld [vmem:[%s2 + $0xac] sm:$0xf]
    %v694 = vld [vmem:[%s2 + $0xb0] sm:$0xf]
    %v695 = vld [vmem:[%s2 + $0xb4] sm:$0xf]
    %v696 = vld [vmem:[%s2 + $0xb8] sm:$0xf]
    %v697 = vld [vmem:[%s2 + $0xbc] sm:$0xf]
    %v706 = vunpack.c.l.b16 %v690
    %v707 = vunpack.c.l.b16 %v691
    %v708 = vunpack.c.l.b16 %v692
    %v709 = vunpack.c.l.b16 %v693
    %v710 = vunpack.c.l.b16 %v694
    %v711 = vunpack.c.l.b16 %v695
    %v712 = vunpack.c.l.b16 %v696
    %v713 = vunpack.c.l.b16 %v697
    %v714 = vpack.c.b16 %v707, %v706
    %v715 = vpack.c.b16 %v709, %v708
    %v716 = vpack.c.b16 %v711, %v710
    %v717 = vpack.c.b16 %v713, %v712
    %v723 = vsel %vm325, %v688, 0
    %v726 = vsel %vm325, %v689, 0
    %728 = vmatpush.bf16.msra.mxu0 0
    %729 = vmatpush.bf16.msra.mxu0 0
    %730 = vmatpush.bf16.msra.mxu0 0
    %731 = vmatpush.bf16.msra.mxu0 0
    %732 = vmatpush.bf16.msra.mxu0 %v717
    %733 = vmatpush.bf16.msra.mxu0 %v716
    %734 = vmatpush.bf16.msra.mxu0 %v715
    %735 = vmatpush.bf16.msra.mxu0 %v714
    %736 = vmatmul.bf16.gmra.mxu0 %v723
    %v737 = vpop.f32.mrf.mxu0
    %v738 = vadd.f32 0.0, %v737
    %v739 = vpop.f32.mrf.mxu0
    %v740 = vadd.f32 0.0, %v739
    %741 = vmatmul.bf16.gmra.mxu0 %v726
    %v742 = vpop.f32.mrf.mxu0
    %v743 = vadd.f32 0.0, %v742
    %v744 = vpop.f32.mrf.mxu0
    %v745 = vadd.f32 0.0, %v744
    %746 = vdwg.mxu0
    %v747 = vadd.f32 %v661, %v738
    %v748 = vadd.f32 %v662, %v740
    %v749 = vadd.f32 %v663, %v743
    %v750 = vadd.f32 %v664, %v745
    %751 = vst [vmem:[#allocation1] ss:$2 sm:$0xff] %v181
    %s752 = scalar_lea.vmem [#allocation1], 1
    %753 = vst [vmem:[%s752] ss:$2 sm:$0xff] %v199
    %s754 = scalar_lea.vmem [#allocation1], 16
    %755 = vst [vmem:[%s754] ss:$2 sm:$0xff] %v200
    %s756 = scalar_lea.vmem [#allocation1], 17
    %757 = vst [vmem:[%s756] ss:$2 sm:$0xff] %v183
    %s758 = scalar_lea.vmem [#allocation1], 32
    %759 = vst [vmem:[%s758] ss:$2 sm:$0xff] %v184
    %s760 = scalar_lea.vmem [#allocation1], 33
    %761 = vst [vmem:[%s760] ss:$2 sm:$0xff] %v202
    %s762 = scalar_lea.vmem [#allocation1], 48
    %763 = vst [vmem:[%s762] ss:$2 sm:$0xff] %v203
    %s764 = scalar_lea.vmem [#allocation1], 49
    %765 = vst [vmem:[%s764] ss:$2 sm:$0xff] %v186
    %v766 = vld.sshfl [vmem:[#allocation1] sm:$0xff pattern:$0x75316420]
    %v767 = vld.sshfl [vmem:[#allocation1 + $0x10] sm:$0xff pattern:$0x75316420]
    %v768 = vld.sshfl [vmem:[#allocation1 + $0x20] sm:$0xff pattern:$0x75316420]
    %v769 = vld.sshfl [vmem:[#allocation1 + $0x30] sm:$0xff pattern:$0x75316420]
    %v774 = vpack.c.bf16 %v767, %v766
    %v775 = vpack.c.bf16 %v769, %v768
    %v776 = vld [vmem:[%s2 + $0xc0] sm:$0xf]
    %v777 = vld [vmem:[%s2 + $0xc4] sm:$0xf]
    %v778 = vld [vmem:[%s2 + $0xc8] sm:$0xf]
    %v779 = vld [vmem:[%s2 + $0xcc] sm:$0xf]
    %v780 = vld [vmem:[%s2 + $0xd0] sm:$0xf]
    %v781 = vld [vmem:[%s2 + $0xd4] sm:$0xf]
    %v782 = vld [vmem:[%s2 + $0xd8] sm:$0xf]
    %v783 = vld [vmem:[%s2 + $0xdc] sm:$0xf]
    %v792 = vunpack.c.l.b16 %v776
    %v793 = vunpack.c.l.b16 %v777
    %v794 = vunpack.c.l.b16 %v778
    %v795 = vunpack.c.l.b16 %v779
    %v796 = vunpack.c.l.b16 %v780
    %v797 = vunpack.c.l.b16 %v781
    %v798 = vunpack.c.l.b16 %v782
    %v799 = vunpack.c.l.b16 %v783
    %v800 = vpack.c.b16 %v793, %v792
    %v801 = vpack.c.b16 %v795, %v794
    %v802 = vpack.c.b16 %v797, %v796
    %v803 = vpack.c.b16 %v799, %v798
    %v809 = vsel %vm325, %v774, 0
    %v812 = vsel %vm325, %v775, 0
    %814 = vmatpush.bf16.msra.mxu0 0
    %815 = vmatpush.bf16.msra.mxu0 0
    %816 = vmatpush.bf16.msra.mxu0 0
    %817 = vmatpush.bf16.msra.mxu0 0
    %818 = vmatpush.bf16.msra.mxu0 %v803
    %819 = vmatpush.bf16.msra.mxu0 %v802
    %820 = vmatpush.bf16.msra.mxu0 %v801
    %821 = vmatpush.bf16.msra.mxu0 %v800
    %822 = vmatmul.bf16.gmra.mxu0 %v809
    %v823 = vpop.f32.mrf.mxu0
    %v824 = vadd.f32 0.0, %v823
    %v825 = vpop.f32.mrf.mxu0
    %v826 = vadd.f32 0.0, %v825
    %827 = vmatmul.bf16.gmra.mxu0 %v812
    %v828 = vpop.f32.mrf.mxu0
    %v829 = vadd.f32 0.0, %v828
    %v830 = vpop.f32.mrf.mxu0
    %v831 = vadd.f32 0.0, %v830
    %832 = vdwg.mxu0
    %v833 = vadd.f32 %v747, %v824
    %v834 = vadd.f32 %v748, %v826
    %v835 = vadd.f32 %v749, %v829
    %v836 = vadd.f32 %v750, %v831
    %v837 = vrot.slane %v203, 6
    %v838 = vrot.slane %v837, 4
    %v839 = vrot.slane %v186, 6
    %v840 = vsel %vm239, %v838, %v839
    %v841 = vrot.slane %v839, 4
    %v842 = vrot.slane %v204, 6
    %v843 = vsel %vm239, %v841, %v842
    %844 = vst [vmem:[#allocation1] ss:$2 sm:$0xff] %v257
    %s845 = scalar_lea.vmem [#allocation1], 1
    %846 = vst [vmem:[%s845] ss:$2 sm:$0xff] %v260
    %s847 = scalar_lea.vmem [#allocation1], 16
    %848 = vst [vmem:[%s847] ss:$2 sm:$0xff] %v264
    %s849 = scalar_lea.vmem [#allocation1], 17
    %850 = vst [vmem:[%s849] ss:$2 sm:$0xff] %v267
    %s851 = scalar_lea.vmem [#allocation1], 32
    %852 = vst [vmem:[%s851] ss:$2 sm:$0xff] %v575
    %s853 = scalar_lea.vmem [#allocation1], 33
    %854 = vst [vmem:[%s853] ss:$2 sm:$0xff] %v578
    %s855 = scalar_lea.vmem [#allocation1], 48
    %856 = vst [vmem:[%s855] ss:$2 sm:$0xff] %v840
    %s857 = scalar_lea.vmem [#allocation1], 49
    %858 = vst [vmem:[%s857] ss:$2 sm:$0xff] %v843
    %v859 = vld.sshfl [vmem:[#allocation1] sm:$0xff pattern:$0x75316420]
    %v860 = vld.sshfl [vmem:[#allocation1 + $0x10] sm:$0xff pattern:$0x75316420]
    %v861 = vld.sshfl [vmem:[#allocation1 + $0x20] sm:$0xff pattern:$0x75316420]
    %v862 = vld.sshfl [vmem:[#allocation1 + $0x30] sm:$0xff pattern:$0x75316420]
    %v867 = vpack.c.bf16 %v860, %v859
    %v868 = vpack.c.bf16 %v862, %v861
    %v869 = vld [vmem:[%s2 + $0xe0] sm:$0xf]
    %v870 = vld [vmem:[%s2 + $0xe4] sm:$0xf]
    %v871 = vld [vmem:[%s2 + $0xe8] sm:$0xf]
    %v872 = vld [vmem:[%s2 + $0xec] sm:$0xf]
    %v873 = vld [vmem:[%s2 + $0xf0] sm:$0xf]
    %v874 = vld [vmem:[%s2 + $0xf4] sm:$0xf]
    %v875 = vld [vmem:[%s2 + $0xf8] sm:$0xf]
    %v876 = vld [vmem:[%s2 + $0xfc] sm:$0xf]
    %v885 = vunpack.c.l.b16 %v869
    %v886 = vunpack.c.l.b16 %v870
    %v887 = vunpack.c.l.b16 %v871
    %v888 = vunpack.c.l.b16 %v872
    %v889 = vunpack.c.l.b16 %v873
    %v890 = vunpack.c.l.b16 %v874
    %v891 = vunpack.c.l.b16 %v875
    %v892 = vunpack.c.l.b16 %v876
    %v893 = vpack.c.b16 %v886, %v885
    %v894 = vpack.c.b16 %v888, %v887
    %v895 = vpack.c.b16 %v890, %v889
    %v896 = vpack.c.b16 %v892, %v891
    %v902 = vsel %vm325, %v867, 0
    %v905 = vsel %vm325, %v868, 0
    %907 = vmatpush.bf16.msra.mxu0 0
    %908 = vmatpush.bf16.msra.mxu0 0
    %909 = vmatpush.bf16.msra.mxu0 0
    %910 = vmatpush.bf16.msra.mxu0 0
    %911 = vmatpush.bf16.msra.mxu0 %v896
    %912 = vmatpush.bf16.msra.mxu0 %v895
    %913 = vmatpush.bf16.msra.mxu0 %v894
    %914 = vmatpush.bf16.msra.mxu0 %v893
    %915 = vmatmul.bf16.gmra.mxu0 %v902
    %v916 = vpop.f32.mrf.mxu0
    %v917 = vadd.f32 0.0, %v916
    %v918 = vpop.f32.mrf.mxu0
    %v919 = vadd.f32 0.0, %v918
    %920 = vmatmul.bf16.gmra.mxu0 %v905
    %v921 = vpop.f32.mrf.mxu0
    %v922 = vadd.f32 0.0, %v921
    %v923 = vpop.f32.mrf.mxu0
    %v924 = vadd.f32 0.0, %v923
    %925 = vdwg.mxu0
    %v926 = vadd.f32 %v833, %v917
    %v927 = vadd.f32 %v834, %v919
    %v928 = vadd.f32 %v835, %v922
    %v929 = vadd.f32 %v836, %v924
    %930 = vst [vmem:[#allocation1] ss:$2 sm:$0xff] %v199
    %s931 = scalar_lea.vmem [#allocation1], 1
    %932 = vst [vmem:[%s931] ss:$2 sm:$0xff] %v182
    %s933 = scalar_lea.vmem [#allocation1], 16
    %934 = vst [vmem:[%s933] ss:$2 sm:$0xff] %v183
    %s935 = scalar_lea.vmem [#allocation1], 17
    %936 = vst [vmem:[%s935] ss:$2 sm:$0xff] %v201
    %s937 = scalar_lea.vmem [#allocation1], 32
    %938 = vst [vmem:[%s937] ss:$2 sm:$0xff] %v202
    %s939 = scalar_lea.vmem [#allocation1], 33
    %940 = vst [vmem:[%s939] ss:$2 sm:$0xff] %v185
    %s941 = scalar_lea.vmem [#allocation1], 48
    %942 = vst [vmem:[%s941] ss:$2 sm:$0xff] %v186
    %s943 = scalar_lea.vmem [#allocation1], 49
    %944 = vst [vmem:[%s943] ss:$2 sm:$0xff] %v204
    %v945 = vld.sshfl [vmem:[#allocation1] sm:$0xff pattern:$0x75316420]
    %v946 = vld.sshfl [vmem:[#allocation1 + $0x10] sm:$0xff pattern:$0x75316420]
    %v947 = vld.sshfl [vmem:[#allocation1 + $0x20] sm:$0xff pattern:$0x75316420]
    %v948 = vld.sshfl [vmem:[#allocation1 + $0x30] sm:$0xff pattern:$0x75316420]
    %v953 = vpack.c.bf16 %v946, %v945
    %v954 = vpack.c.bf16 %v948, %v947
    %v955 = vld [vmem:[%s2 + $0x100] sm:$0xf]
    %v956 = vld [vmem:[%s2 + $0x104] sm:$0xf]
    %v957 = vld [vmem:[%s2 + $0x108] sm:$0xf]
    %v958 = vld [vmem:[%s2 + $0x10c] sm:$0xf]
    %v959 = vld [vmem:[%s2 + $0x110] sm:$0xf]
    %v960 = vld [vmem:[%s2 + $0x114] sm:$0xf]
    %v961 = vld [vmem:[%s2 + $0x118] sm:$0xf]
    %v962 = vld [vmem:[%s2 + $0x11c] sm:$0xf]
    %v971 = vunpack.c.l.b16 %v955
    %v972 = vunpack.c.l.b16 %v956
    %v973 = vunpack.c.l.b16 %v957
    %v974 = vunpack.c.l.b16 %v958
    %v975 = vunpack.c.l.b16 %v959
    %v976 = vunpack.c.l.b16 %v960
    %v977 = vunpack.c.l.b16 %v961
    %v978 = vunpack.c.l.b16 %v962
    %v979 = vpack.c.b16 %v972, %v971
    %v980 = vpack.c.b16 %v974, %v973
    %v981 = vpack.c.b16 %v976, %v975
    %v982 = vpack.c.b16 %v978, %v977
    %v988 = vsel %vm325, %v953, 0
    %v991 = vsel %vm325, %v954, 0
    %993 = vmatpush.bf16.msra.mxu0 0
    %994 = vmatpush.bf16.msra.mxu0 0
    %995 = vmatpush.bf16.msra.mxu0 0
    %996 = vmatpush.bf16.msra.mxu0 0
    %997 = vmatpush.bf16.msra.mxu0 %v982
    %998 = vmatpush.bf16.msra.mxu0 %v981
    %999 = vmatpush.bf16.msra.mxu0 %v980
    %1000 = vmatpush.bf16.msra.mxu0 %v979
    %1001 = vmatmul.bf16.gmra.mxu0 %v988
    %v1002 = vpop.f32.mrf.mxu0
    %v1003 = vadd.f32 0.0, %v1002
    %v1004 = vpop.f32.mrf.mxu0
    %v1005 = vadd.f32 0.0, %v1004
    %1006 = vmatmul.bf16.gmra.mxu0 %v991
    %v1007 = vpop.f32.mrf.mxu0
    %v1008 = vadd.f32 0.0, %v1007
    %v1009 = vpop.f32.mrf.mxu0
    %v1010 = vadd.f32 0.0, %v1009
    %1011 = vdwg.mxu0
    %v1012 = vadd.f32 %v926, %v1003
    %v1013 = vadd.f32 %v927, %v1005
    %v1014 = vadd.f32 %v928, %v1008
    %v1015 = vadd.f32 %v929, %v1010
    %v1016 = vperm.slane %v67, 0
    %v1017 = vadd.f32 %v1012, %v1016
    %v1018 = vadd.f32 %v1013, %v1016
    %v1019 = vadd.f32 %v1014, %v1016
    %v1020 = vadd.f32 %v1015, %v1016
    %vm1021 = vcmp.ge.f32.partialorder %v1017, 0.0
    %vm1022 = vcmp.ge.f32.partialorder %v1018, 0.0
    %vm1023 = vcmp.ge.f32.partialorder %v1019, 0.0
    %vm1024 = vcmp.ge.f32.partialorder %v1020, 0.0
    %v1025 = vmul.f32 %v1017, 0.01
    %v1026 = vmul.f32 %v1018, 0.01
    %v1027 = vmul.f32 %v1019, 0.01
    %v1028 = vmul.f32 %v1020, 0.01
    %v1029 = vsel %vm1021, %v1017, %v1025
    %v1030 = vsel %vm1022, %v1018, %v1026
    %v1031 = vsel %vm1023, %v1019, %v1027
    %v1032 = vsel %vm1024, %v1020, %v1028
    %s1033 = smul.u32 4, 128
    %s1034 = smul.u32 %s1033, 8
    %s1035 = sshll.u32 %s1034, 4
    %1036 = dma.done [#allocation3], %s1035
    %v1037 = vpack.c.bf16 %v1029, %v1029
    %v1038 = vld [vmem:[#allocation2] sm:$0xff]
    %v1039 = vld [vmem:[#allocation2 + $0x8] sm:$0xff]
    %v1040 = vld [vmem:[#allocation2 + $0x10] sm:$0xff]
    %v1041 = vld [vmem:[#allocation2 + $0x18] sm:$0xff]
    %v1042 = vld [vmem:[#allocation2 + $0x20] sm:$0xff]
    %v1043 = vld [vmem:[#allocation2 + $0x28] sm:$0xff]
    %v1044 = vld [vmem:[#allocation2 + $0x30] sm:$0xff]
    %v1045 = vld [vmem:[#allocation2 + $0x38] sm:$0xff]
    %v1046 = vld [vmem:[#allocation2 + $0x40] sm:$0xff]
    %v1047 = vld [vmem:[#allocation2 + $0x48] sm:$0xff]
    %v1048 = vld [vmem:[#allocation2 + $0x50] sm:$0xff]
    %v1049 = vld [vmem:[#allocation2 + $0x58] sm:$0xff]
    %v1050 = vld [vmem:[#allocation2 + $0x60] sm:$0xff]
    %v1051 = vld [vmem:[#allocation2 + $0x68] sm:$0xff]
    %v1052 = vld [vmem:[#allocation2 + $0x70] sm:$0xff]
    %v1053 = vld [vmem:[#allocation2 + $0x78] sm:$0xff]
    %v1054 = vld [vmem:[#allocation2 + $0x80] sm:$0xff]
    %v1055 = vld [vmem:[#allocation2 + $0x88] sm:$0xff]
    %v1056 = vld [vmem:[#allocation2 + $0x90] sm:$0xff]
    %v1057 = vld [vmem:[#allocation2 + $0x98] sm:$0xff]
    %v1058 = vld [vmem:[#allocation2 + $0xa0] sm:$0xff]
    %v1059 = vld [vmem:[#allocation2 + $0xa8] sm:$0xff]
    %v1060 = vld [vmem:[#allocation2 + $0xb0] sm:$0xff]
    %v1061 = vld [vmem:[#allocation2 + $0xb8] sm:$0xff]
    %v1062 = vld [vmem:[#allocation2 + $0xc0] sm:$0xff]
    %v1063 = vld [vmem:[#allocation2 + $0xc8] sm:$0xff]
    %v1064 = vld [vmem:[#allocation2 + $0xd0] sm:$0xff]
    %v1065 = vld [vmem:[#allocation2 + $0xd8] sm:$0xff]
    %v1066 = vld [vmem:[#allocation2 + $0xe0] sm:$0xff]
    %v1067 = vld [vmem:[#allocation2 + $0xe8] sm:$0xff]
    %v1068 = vld [vmem:[#allocation2 + $0xf0] sm:$0xff]
    %v1069 = vld [vmem:[#allocation2 + $0xf8] sm:$0xff]
    %v1070 = vld [vmem:[#allocation2 + $0x100] sm:$0xff]
    %v1071 = vld [vmem:[#allocation2 + $0x108] sm:$0xff]
    %v1072 = vld [vmem:[#allocation2 + $0x110] sm:$0xff]
    %v1073 = vld [vmem:[#allocation2 + $0x118] sm:$0xff]
    %v1074 = vld [vmem:[#allocation2 + $0x120] sm:$0xff]
    %v1075 = vld [vmem:[#allocation2 + $0x128] sm:$0xff]
    %v1076 = vld [vmem:[#allocation2 + $0x130] sm:$0xff]
    %v1077 = vld [vmem:[#allocation2 + $0x138] sm:$0xff]
    %v1078 = vld [vmem:[#allocation2 + $0x140] sm:$0xff]
    %v1079 = vld [vmem:[#allocation2 + $0x148] sm:$0xff]
    %v1080 = vld [vmem:[#allocation2 + $0x150] sm:$0xff]
    %v1081 = vld [vmem:[#allocation2 + $0x158] sm:$0xff]
    %v1082 = vld [vmem:[#allocation2 + $0x160] sm:$0xff]
    %v1083 = vld [vmem:[#allocation2 + $0x168] sm:$0xff]
    %v1084 = vld [vmem:[#allocation2 + $0x170] sm:$0xff]
    %v1085 = vld [vmem:[#allocation2 + $0x178] sm:$0xff]
    %v1086 = vld [vmem:[#allocation2 + $0x180] sm:$0xff]
    %v1087 = vld [vmem:[#allocation2 + $0x188] sm:$0xff]
    %v1088 = vld [vmem:[#allocation2 + $0x190] sm:$0xff]
    %v1089 = vld [vmem:[#allocation2 + $0x198] sm:$0xff]
    %v1090 = vld [vmem:[#allocation2 + $0x1a0] sm:$0xff]
    %v1091 = vld [vmem:[#allocation2 + $0x1a8] sm:$0xff]
    %v1092 = vld [vmem:[#allocation2 + $0x1b0] sm:$0xff]
    %v1093 = vld [vmem:[#allocation2 + $0x1b8] sm:$0xff]
    %v1094 = vld [vmem:[#allocation2 + $0x1c0] sm:$0xff]
    %v1095 = vld [vmem:[#allocation2 + $0x1c8] sm:$0xff]
    %v1096 = vld [vmem:[#allocation2 + $0x1d0] sm:$0xff]
    %v1097 = vld [vmem:[#allocation2 + $0x1d8] sm:$0xff]
    %v1098 = vld [vmem:[#allocation2 + $0x1e0] sm:$0xff]
    %v1099 = vld [vmem:[#allocation2 + $0x1e8] sm:$0xff]
    %v1100 = vld [vmem:[#allocation2 + $0x1f0] sm:$0xff]
    %v1101 = vld [vmem:[#allocation2 + $0x1f8] sm:$0xff]
    %v1103 = vrot.slane %v1037, 1
    %v1136 = vunpack.c.l.b16 %v1070
    %v1137 = vunpack.c.h.b16 %v1070
    %v1138 = vunpack.c.l.b16 %v1071
    %v1139 = vunpack.c.h.b16 %v1071
    %v1140 = vunpack.c.l.b16 %v1072
    %v1141 = vunpack.c.h.b16 %v1072
    %v1142 = vunpack.c.l.b16 %v1073
    %v1143 = vunpack.c.h.b16 %v1073
    %v1144 = vunpack.c.l.b16 %v1074
    %v1145 = vunpack.c.h.b16 %v1074
    %v1146 = vunpack.c.l.b16 %v1075
    %v1147 = vunpack.c.h.b16 %v1075
    %v1148 = vunpack.c.l.b16 %v1076
    %v1149 = vunpack.c.h.b16 %v1076
    %v1150 = vunpack.c.l.b16 %v1077
    %v1151 = vunpack.c.h.b16 %v1077
    %v1152 = vunpack.c.l.b16 %v1078
    %v1153 = vunpack.c.h.b16 %v1078
    %v1154 = vunpack.c.l.b16 %v1079
    %v1155 = vunpack.c.h.b16 %v1079
    %v1156 = vunpack.c.l.b16 %v1080
    %v1157 = vunpack.c.h.b16 %v1080
    %v1158 = vunpack.c.l.b16 %v1081
    %v1159 = vunpack.c.h.b16 %v1081
    %v1160 = vunpack.c.l.b16 %v1082
    %v1161 = vunpack.c.h.b16 %v1082
    %v1162 = vunpack.c.l.b16 %v1083
    %v1163 = vunpack.c.h.b16 %v1083
    %v1164 = vunpack.c.l.b16 %v1084
    %v1165 = vunpack.c.h.b16 %v1084
    %v1166 = vunpack.c.l.b16 %v1085
    %v1167 = vunpack.c.h.b16 %v1085
    %v1168 = vunpack.c.l.b16 %v1086
    %v1169 = vunpack.c.h.b16 %v1086
    %v1170 = vunpack.c.l.b16 %v1087
    %v1171 = vunpack.c.h.b16 %v1087
    %v1172 = vunpack.c.l.b16 %v1088
    %v1173 = vunpack.c.h.b16 %v1088
    %v1174 = vunpack.c.l.b16 %v1089
    %v1175 = vunpack.c.h.b16 %v1089
    %v1176 = vunpack.c.l.b16 %v1090
    %v1177 = vunpack.c.h.b16 %v1090
    %v1178 = vunpack.c.l.b16 %v1091
    %v1179 = vunpack.c.h.b16 %v1091
    %v1180 = vunpack.c.l.b16 %v1092
    %v1181 = vunpack.c.h.b16 %v1092
    %v1182 = vunpack.c.l.b16 %v1093
    %v1183 = vunpack.c.h.b16 %v1093
    %v1184 = vunpack.c.l.b16 %v1094
    %v1185 = vunpack.c.h.b16 %v1094
    %v1186 = vunpack.c.l.b16 %v1095
    %v1187 = vunpack.c.h.b16 %v1095
    %v1188 = vunpack.c.l.b16 %v1096
    %v1189 = vunpack.c.h.b16 %v1096
    %v1190 = vunpack.c.l.b16 %v1097
    %v1191 = vunpack.c.h.b16 %v1097
    %v1192 = vunpack.c.l.b16 %v1098
    %v1193 = vunpack.c.h.b16 %v1098
    %v1194 = vunpack.c.l.b16 %v1099
    %v1195 = vunpack.c.h.b16 %v1099
    %v1196 = vunpack.c.l.b16 %v1100
    %v1197 = vunpack.c.h.b16 %v1100
    %v1198 = vunpack.c.l.b16 %v1101
    %v1199 = vunpack.c.h.b16 %v1101
    %v1200 = vpack.c.b16 %v1144, %v1136
    %v1201 = vpack.c.b16 %v1145, %v1137
    %v1202 = vpack.c.b16 %v1146, %v1138
    %v1203 = vpack.c.b16 %v1147, %v1139
    %v1204 = vpack.c.b16 %v1148, %v1140
    %v1205 = vpack.c.b16 %v1149, %v1141
    %v1206 = vpack.c.b16 %v1150, %v1142
    %v1207 = vpack.c.b16 %v1151, %v1143
    %v1208 = vpack.c.b16 %v1160, %v1152
    %v1209 = vpack.c.b16 %v1161, %v1153
    %v1210 = vpack.c.b16 %v1162, %v1154
    %v1211 = vpack.c.b16 %v1163, %v1155
    %v1212 = vpack.c.b16 %v1164, %v1156
    %v1213 = vpack.c.b16 %v1165, %v1157
    %v1214 = vpack.c.b16 %v1166, %v1158
    %v1215 = vpack.c.b16 %v1167, %v1159
    %v1216 = vpack.c.b16 %v1176, %v1168
    %v1217 = vpack.c.b16 %v1177, %v1169
    %v1218 = vpack.c.b16 %v1178, %v1170
    %v1219 = vpack.c.b16 %v1179, %v1171
    %v1220 = vpack.c.b16 %v1180, %v1172
    %v1221 = vpack.c.b16 %v1181, %v1173
    %v1222 = vpack.c.b16 %v1182, %v1174
    %v1223 = vpack.c.b16 %v1183, %v1175
    %v1224 = vpack.c.b16 %v1192, %v1184
    %v1225 = vpack.c.b16 %v1193, %v1185
    %v1226 = vpack.c.b16 %v1194, %v1186
    %v1227 = vpack.c.b16 %v1195, %v1187
    %v1228 = vpack.c.b16 %v1196, %v1188
    %v1229 = vpack.c.b16 %v1197, %v1189
    %v1230 = vpack.c.b16 %v1198, %v1190
    %v1231 = vpack.c.b16 %v1199, %v1191
    %v1265 = vsel %vm325, %v1103, 0
    %1267 = vmatpush.bf16.msra.mxu0 0
    %1268 = vmatpush.bf16.msra.mxu0 0
    %1269 = vmatpush.bf16.msra.mxu0 0
    %1270 = vmatpush.bf16.msra.mxu0 0
    %1271 = vmatpush.bf16.msra.mxu0 %v1224
    %1272 = vmatpush.bf16.msra.mxu0 %v1216
    %1273 = vmatpush.bf16.msra.mxu0 %v1208
    %1274 = vmatpush.bf16.msra.mxu0 %v1200
    %1275 = vmatmul.bf16.gmra.mxu0 %v1265
    %v1276 = vpop.f32.mrf.mxu0
    %v1277 = vadd.f32 0.0, %v1276
    %v1278 = vpop.f32.mrf.mxu0
    %1279 = vdwg.mxu0
    %1280 = vmatpush.bf16.msra.mxu0 0
    %1281 = vmatpush.bf16.msra.mxu0 0
    %1282 = vmatpush.bf16.msra.mxu0 0
    %1283 = vmatpush.bf16.msra.mxu0 0
    %1284 = vmatpush.bf16.msra.mxu0 %v1225
    %1285 = vmatpush.bf16.msra.mxu0 %v1217
    %1286 = vmatpush.bf16.msra.mxu0 %v1209
    %1287 = vmatpush.bf16.msra.mxu0 %v1201
    %1288 = vmatmul.bf16.gmra.mxu0 %v1265
    %v1289 = vpop.f32.mrf.mxu0
    %v1290 = vadd.f32 0.0, %v1289
    %v1291 = vpop.f32.mrf.mxu0
    %1292 = vdwg.mxu0
    %1293 = vmatpush.bf16.msra.mxu0 0
    %1294 = vmatpush.bf16.msra.mxu0 0
    %1295 = vmatpush.bf16.msra.mxu0 0
    %1296 = vmatpush.bf16.msra.mxu0 0
    %1297 = vmatpush.bf16.msra.mxu0 %v1226
    %1298 = vmatpush.bf16.msra.mxu0 %v1218
    %1299 = vmatpush.bf16.msra.mxu0 %v1210
    %1300 = vmatpush.bf16.msra.mxu0 %v1202
    %1301 = vmatmul.bf16.gmra.mxu0 %v1265
    %v1302 = vpop.f32.mrf.mxu0
    %v1303 = vadd.f32 0.0, %v1302
    %v1304 = vpop.f32.mrf.mxu0
    %1305 = vdwg.mxu0
    %1306 = vmatpush.bf16.msra.mxu0 0
    %1307 = vmatpush.bf16.msra.mxu0 0
    %1308 = vmatpush.bf16.msra.mxu0 0
    %1309 = vmatpush.bf16.msra.mxu0 0
    %1310 = vmatpush.bf16.msra.mxu0 %v1227
    %1311 = vmatpush.bf16.msra.mxu0 %v1219
    %1312 = vmatpush.bf16.msra.mxu0 %v1211
    %1313 = vmatpush.bf16.msra.mxu0 %v1203
    %1314 = vmatmul.bf16.gmra.mxu0 %v1265
    %v1315 = vpop.f32.mrf.mxu0
    %v1316 = vadd.f32 0.0, %v1315
    %v1317 = vpop.f32.mrf.mxu0
    %1318 = vdwg.mxu0
    %1319 = vmatpush.bf16.msra.mxu0 0
    %1320 = vmatpush.bf16.msra.mxu0 0
    %1321 = vmatpush.bf16.msra.mxu0 0
    %1322 = vmatpush.bf16.msra.mxu0 0
    %1323 = vmatpush.bf16.msra.mxu0 %v1228
    %1324 = vmatpush.bf16.msra.mxu0 %v1220
    %1325 = vmatpush.bf16.msra.mxu0 %v1212
    %1326 = vmatpush.bf16.msra.mxu0 %v1204
    %1327 = vmatmul.bf16.gmra.mxu0 %v1265
    %v1328 = vpop.f32.mrf.mxu0
    %v1329 = vadd.f32 0.0, %v1328
    %v1330 = vpop.f32.mrf.mxu0
    %1331 = vdwg.mxu0
    %1332 = vmatpush.bf16.msra.mxu0 0
    %1333 = vmatpush.bf16.msra.mxu0 0
    %1334 = vmatpush.bf16.msra.mxu0 0
    %1335 = vmatpush.bf16.msra.mxu0 0
    %1336 = vmatpush.bf16.msra.mxu0 %v1229
    %1337 = vmatpush.bf16.msra.mxu0 %v1221
    %1338 = vmatpush.bf16.msra.mxu0 %v1213
    %1339 = vmatpush.bf16.msra.mxu0 %v1205
    %1340 = vmatmul.bf16.gmra.mxu0 %v1265
    %v1341 = vpop.f32.mrf.mxu0
    %v1342 = vadd.f32 0.0, %v1341
    %v1343 = vpop.f32.mrf.mxu0
    %1344 = vdwg.mxu0
    %1345 = vmatpush.bf16.msra.mxu0 0
    %1346 = vmatpush.bf16.msra.mxu0 0
    %1347 = vmatpush.bf16.msra.mxu0 0
    %1348 = vmatpush.bf16.msra.mxu0 0
    %1349 = vmatpush.bf16.msra.mxu0 %v1230
    %1350 = vmatpush.bf16.msra.mxu0 %v1222
    %1351 = vmatpush.bf16.msra.mxu0 %v1214
    %1352 = vmatpush.bf16.msra.mxu0 %v1206
    %1353 = vmatmul.bf16.gmra.mxu0 %v1265
    %v1354 = vpop.f32.mrf.mxu0
    %v1355 = vadd.f32 0.0, %v1354
    %v1356 = vpop.f32.mrf.mxu0
    %1357 = vdwg.mxu0
    %1358 = vmatpush.bf16.msra.mxu0 0
    %1359 = vmatpush.bf16.msra.mxu0 0
    %1360 = vmatpush.bf16.msra.mxu0 0
    %1361 = vmatpush.bf16.msra.mxu0 0
    %1362 = vmatpush.bf16.msra.mxu0 %v1231
    %1363 = vmatpush.bf16.msra.mxu0 %v1223
    %1364 = vmatpush.bf16.msra.mxu0 %v1215
    %1365 = vmatpush.bf16.msra.mxu0 %v1207
    %1366 = vmatmul.bf16.gmra.mxu0 %v1265
    %v1367 = vpop.f32.mrf.mxu0
    %v1368 = vadd.f32 0.0, %v1367
    %v1369 = vpop.f32.mrf.mxu0
    %1370 = vdwg.mxu0
    %v1403 = vunpack.c.l.b16 %v1038
    %v1404 = vunpack.c.h.b16 %v1038
    %v1405 = vunpack.c.l.b16 %v1039
    %v1406 = vunpack.c.h.b16 %v1039
    %v1407 = vunpack.c.l.b16 %v1040
    %v1408 = vunpack.c.h.b16 %v1040
    %v1409 = vunpack.c.l.b16 %v1041
    %v1410 = vunpack.c.h.b16 %v1041
    %v1411 = vunpack.c.l.b16 %v1042
    %v1412 = vunpack.c.h.b16 %v1042
    %v1413 = vunpack.c.l.b16 %v1043
    %v1414 = vunpack.c.h.b16 %v1043
    %v1415 = vunpack.c.l.b16 %v1044
    %v1416 = vunpack.c.h.b16 %v1044
    %v1417 = vunpack.c.l.b16 %v1045
    %v1418 = vunpack.c.h.b16 %v1045
    %v1419 = vunpack.c.l.b16 %v1046
    %v1420 = vunpack.c.h.b16 %v1046
    %v1421 = vunpack.c.l.b16 %v1047
    %v1422 = vunpack.c.h.b16 %v1047
    %v1423 = vunpack.c.l.b16 %v1048
    %v1424 = vunpack.c.h.b16 %v1048
    %v1425 = vunpack.c.l.b16 %v1049
    %v1426 = vunpack.c.h.b16 %v1049
    %v1427 = vunpack.c.l.b16 %v1050
    %v1428 = vunpack.c.h.b16 %v1050
    %v1429 = vunpack.c.l.b16 %v1051
    %v1430 = vunpack.c.h.b16 %v1051
    %v1431 = vunpack.c.l.b16 %v1052
    %v1432 = vunpack.c.h.b16 %v1052
    %v1433 = vunpack.c.l.b16 %v1053
    %v1434 = vunpack.c.h.b16 %v1053
    %v1435 = vunpack.c.l.b16 %v1054
    %v1436 = vunpack.c.h.b16 %v1054
    %v1437 = vunpack.c.l.b16 %v1055
    %v1438 = vunpack.c.h.b16 %v1055
    %v1439 = vunpack.c.l.b16 %v1056
    %v1440 = vunpack.c.h.b16 %v1056
    %v1441 = vunpack.c.l.b16 %v1057
    %v1442 = vunpack.c.h.b16 %v1057
    %v1443 = vunpack.c.l.b16 %v1058
    %v1444 = vunpack.c.h.b16 %v1058
    %v1445 = vunpack.c.l.b16 %v1059
    %v1446 = vunpack.c.h.b16 %v1059
    %v1447 = vunpack.c.l.b16 %v1060
    %v1448 = vunpack.c.h.b16 %v1060
    %v1449 = vunpack.c.l.b16 %v1061
    %v1450 = vunpack.c.h.b16 %v1061
    %v1451 = vunpack.c.l.b16 %v1062
    %v1452 = vunpack.c.h.b16 %v1062
    %v1453 = vunpack.c.l.b16 %v1063
    %v1454 = vunpack.c.h.b16 %v1063
    %v1455 = vunpack.c.l.b16 %v1064
    %v1456 = vunpack.c.h.b16 %v1064
    %v1457 = vunpack.c.l.b16 %v1065
    %v1458 = vunpack.c.h.b16 %v1065
    %v1459 = vunpack.c.l.b16 %v1066
    %v1460 = vunpack.c.h.b16 %v1066
    %v1461 = vunpack.c.l.b16 %v1067
    %v1462 = vunpack.c.h.b16 %v1067
    %v1463 = vunpack.c.l.b16 %v1068
    %v1464 = vunpack.c.h.b16 %v1068
    %v1465 = vunpack.c.l.b16 %v1069
    %v1466 = vunpack.c.h.b16 %v1069
    %v1467 = vpack.c.b16 %v1411, %v1403
    %v1468 = vpack.c.b16 %v1412, %v1404
    %v1469 = vpack.c.b16 %v1413, %v1405
    %v1470 = vpack.c.b16 %v1414, %v1406
    %v1471 = vpack.c.b16 %v1415, %v1407
    %v1472 = vpack.c.b16 %v1416, %v1408
    %v1473 = vpack.c.b16 %v1417, %v1409
    %v1474 = vpack.c.b16 %v1418, %v1410
    %v1475 = vpack.c.b16 %v1427, %v1419
    %v1476 = vpack.c.b16 %v1428, %v1420
    %v1477 = vpack.c.b16 %v1429, %v1421
    %v1478 = vpack.c.b16 %v1430, %v1422
    %v1479 = vpack.c.b16 %v1431, %v1423
    %v1480 = vpack.c.b16 %v1432, %v1424
    %v1481 = vpack.c.b16 %v1433, %v1425
    %v1482 = vpack.c.b16 %v1434, %v1426
    %v1483 = vpack.c.b16 %v1443, %v1435
    %v1484 = vpack.c.b16 %v1444, %v1436
    %v1485 = vpack.c.b16 %v1445, %v1437
    %v1486 = vpack.c.b16 %v1446, %v1438
    %v1487 = vpack.c.b16 %v1447, %v1439
    %v1488 = vpack.c.b16 %v1448, %v1440
    %v1489 = vpack.c.b16 %v1449, %v1441
    %v1490 = vpack.c.b16 %v1450, %v1442
    %v1491 = vpack.c.b16 %v1459, %v1451
    %v1492 = vpack.c.b16 %v1460, %v1452
    %v1493 = vpack.c.b16 %v1461, %v1453
    %v1494 = vpack.c.b16 %v1462, %v1454
    %v1495 = vpack.c.b16 %v1463, %v1455
    %v1496 = vpack.c.b16 %v1464, %v1456
    %v1497 = vpack.c.b16 %v1465, %v1457
    %v1498 = vpack.c.b16 %v1466, %v1458
    %v1532 = vsel %vm325, %v1037, 0
    %1534 = vmatpush.bf16.msra.mxu0 0
    %1535 = vmatpush.bf16.msra.mxu0 0
    %1536 = vmatpush.bf16.msra.mxu0 0
    %1537 = vmatpush.bf16.msra.mxu0 0
    %1538 = vmatpush.bf16.msra.mxu0 %v1491
    %1539 = vmatpush.bf16.msra.mxu0 %v1483
    %1540 = vmatpush.bf16.msra.mxu0 %v1475
    %1541 = vmatpush.bf16.msra.mxu0 %v1467
    %1542 = vmatmul.bf16.gmra.mxu0 %v1532
    %v1543 = vpop.f32.mrf.mxu0
    %v1544 = vadd.f32 %v1277, %v1543
    %v1545 = vpop.f32.mrf.mxu0
    %1546 = vdwg.mxu0
    %1547 = vmatpush.bf16.msra.mxu0 0
    %1548 = vmatpush.bf16.msra.mxu0 0
    %1549 = vmatpush.bf16.msra.mxu0 0
    %1550 = vmatpush.bf16.msra.mxu0 0
    %1551 = vmatpush.bf16.msra.mxu0 %v1492
    %1552 = vmatpush.bf16.msra.mxu0 %v1484
    %1553 = vmatpush.bf16.msra.mxu0 %v1476
    %1554 = vmatpush.bf16.msra.mxu0 %v1468
    %1555 = vmatmul.bf16.gmra.mxu0 %v1532
    %v1556 = vpop.f32.mrf.mxu0
    %v1557 = vadd.f32 %v1290, %v1556
    %v1558 = vpop.f32.mrf.mxu0
    %1559 = vdwg.mxu0
    %1560 = vmatpush.bf16.msra.mxu0 0
    %1561 = vmatpush.bf16.msra.mxu0 0
    %1562 = vmatpush.bf16.msra.mxu0 0
    %1563 = vmatpush.bf16.msra.mxu0 0
    %1564 = vmatpush.bf16.msra.mxu0 %v1493
    %1565 = vmatpush.bf16.msra.mxu0 %v1485
    %1566 = vmatpush.bf16.msra.mxu0 %v1477
    %1567 = vmatpush.bf16.msra.mxu0 %v1469
    %1568 = vmatmul.bf16.gmra.mxu0 %v1532
    %v1569 = vpop.f32.mrf.mxu0
    %v1570 = vadd.f32 %v1303, %v1569
    %v1571 = vpop.f32.mrf.mxu0
    %1572 = vdwg.mxu0
    %1573 = vmatpush.bf16.msra.mxu0 0
    %1574 = vmatpush.bf16.msra.mxu0 0
    %1575 = vmatpush.bf16.msra.mxu0 0
    %1576 = vmatpush.bf16.msra.mxu0 0
    %1577 = vmatpush.bf16.msra.mxu0 %v1494
    %1578 = vmatpush.bf16.msra.mxu0 %v1486
    %1579 = vmatpush.bf16.msra.mxu0 %v1478
    %1580 = vmatpush.bf16.msra.mxu0 %v1470
    %1581 = vmatmul.bf16.gmra.mxu0 %v1532
    %v1582 = vpop.f32.mrf.mxu0
    %v1583 = vadd.f32 %v1316, %v1582
    %v1584 = vpop.f32.mrf.mxu0
    %1585 = vdwg.mxu0
    %1586 = vmatpush.bf16.msra.mxu0 0
    %1587 = vmatpush.bf16.msra.mxu0 0
    %1588 = vmatpush.bf16.msra.mxu0 0
    %1589 = vmatpush.bf16.msra.mxu0 0
    %1590 = vmatpush.bf16.msra.mxu0 %v1495
    %1591 = vmatpush.bf16.msra.mxu0 %v1487
    %1592 = vmatpush.bf16.msra.mxu0 %v1479
    %1593 = vmatpush.bf16.msra.mxu0 %v1471
    %1594 = vmatmul.bf16.gmra.mxu0 %v1532
    %v1595 = vpop.f32.mrf.mxu0
    %v1596 = vadd.f32 %v1329, %v1595
    %v1597 = vpop.f32.mrf.mxu0
    %1598 = vdwg.mxu0
    %1599 = vmatpush.bf16.msra.mxu0 0
    %1600 = vmatpush.bf16.msra.mxu0 0
    %1601 = vmatpush.bf16.msra.mxu0 0
    %1602 = vmatpush.bf16.msra.mxu0 0
    %1603 = vmatpush.bf16.msra.mxu0 %v1496
    %1604 = vmatpush.bf16.msra.mxu0 %v1488
    %1605 = vmatpush.bf16.msra.mxu0 %v1480
    %1606 = vmatpush.bf16.msra.mxu0 %v1472
    %1607 = vmatmul.bf16.gmra.mxu0 %v1532
    %v1608 = vpop.f32.mrf.mxu0
    %v1609 = vadd.f32 %v1342, %v1608
    %v1610 = vpop.f32.mrf.mxu0
    %1611 = vdwg.mxu0
    %1612 = vmatpush.bf16.msra.mxu0 0
    %1613 = vmatpush.bf16.msra.mxu0 0
    %1614 = vmatpush.bf16.msra.mxu0 0
    %1615 = vmatpush.bf16.msra.mxu0 0
    %1616 = vmatpush.bf16.msra.mxu0 %v1497
    %1617 = vmatpush.bf16.msra.mxu0 %v1489
    %1618 = vmatpush.bf16.msra.mxu0 %v1481
    %1619 = vmatpush.bf16.msra.mxu0 %v1473
    %1620 = vmatmul.bf16.gmra.mxu0 %v1532
    %v1621 = vpop.f32.mrf.mxu0
    %v1622 = vadd.f32 %v1355, %v1621
    %v1623 = vpop.f32.mrf.mxu0
    %1624 = vdwg.mxu0
    %1625 = vmatpush.bf16.msra.mxu0 0
    %1626 = vmatpush.bf16.msra.mxu0 0
    %1627 = vmatpush.bf16.msra.mxu0 0
    %1628 = vmatpush.bf16.msra.mxu0 0
    %1629 = vmatpush.bf16.msra.mxu0 %v1498
    %1630 = vmatpush.bf16.msra.mxu0 %v1490
    %1631 = vmatpush.bf16.msra.mxu0 %v1482
    %1632 = vmatpush.bf16.msra.mxu0 %v1474
    %1633 = vmatmul.bf16.gmra.mxu0 %v1532
    %v1634 = vpop.f32.mrf.mxu0
    %v1635 = vadd.f32 %v1368, %v1634
    %v1636 = vpop.f32.mrf.mxu0
    %1637 = vdwg.mxu0
    %v1638 = vld [vmem:[#allocation2 + $0x200] sm:$0xff]
    %v1639 = vld [vmem:[#allocation2 + $0x208] sm:$0xff]
    %v1640 = vld [vmem:[#allocation2 + $0x210] sm:$0xff]
    %v1641 = vld [vmem:[#allocation2 + $0x218] sm:$0xff]
    %v1642 = vld [vmem:[#allocation2 + $0x220] sm:$0xff]
    %v1643 = vld [vmem:[#allocation2 + $0x228] sm:$0xff]
    %v1644 = vld [vmem:[#allocation2 + $0x230] sm:$0xff]
    %v1645 = vld [vmem:[#allocation2 + $0x238] sm:$0xff]
    %v1646 = vld [vmem:[#allocation2 + $0x240] sm:$0xff]
    %v1647 = vld [vmem:[#allocation2 + $0x248] sm:$0xff]
    %v1648 = vld [vmem:[#allocation2 + $0x250] sm:$0xff]
    %v1649 = vld [vmem:[#allocation2 + $0x258] sm:$0xff]
    %v1650 = vld [vmem:[#allocation2 + $0x260] sm:$0xff]
    %v1651 = vld [vmem:[#allocation2 + $0x268] sm:$0xff]
    %v1652 = vld [vmem:[#allocation2 + $0x270] sm:$0xff]
    %v1653 = vld [vmem:[#allocation2 + $0x278] sm:$0xff]
    %v1654 = vld [vmem:[#allocation2 + $0x280] sm:$0xff]
    %v1655 = vld [vmem:[#allocation2 + $0x288] sm:$0xff]
    %v1656 = vld [vmem:[#allocation2 + $0x290] sm:$0xff]
    %v1657 = vld [vmem:[#allocation2 + $0x298] sm:$0xff]
    %v1658 = vld [vmem:[#allocation2 + $0x2a0] sm:$0xff]
    %v1659 = vld [vmem:[#allocation2 + $0x2a8] sm:$0xff]
    %v1660 = vld [vmem:[#allocation2 + $0x2b0] sm:$0xff]
    %v1661 = vld [vmem:[#allocation2 + $0x2b8] sm:$0xff]
    %v1662 = vld [vmem:[#allocation2 + $0x2c0] sm:$0xff]
    %v1663 = vld [vmem:[#allocation2 + $0x2c8] sm:$0xff]
    %v1664 = vld [vmem:[#allocation2 + $0x2d0] sm:$0xff]
    %v1665 = vld [vmem:[#allocation2 + $0x2d8] sm:$0xff]
    %v1666 = vld [vmem:[#allocation2 + $0x2e0] sm:$0xff]
    %v1667 = vld [vmem:[#allocation2 + $0x2e8] sm:$0xff]
    %v1668 = vld [vmem:[#allocation2 + $0x2f0] sm:$0xff]
    %v1669 = vld [vmem:[#allocation2 + $0x2f8] sm:$0xff]
    %v1670 = vrot.slane %v1037, 2
    %v1703 = vunpack.c.l.b16 %v1638
    %v1704 = vunpack.c.h.b16 %v1638
    %v1705 = vunpack.c.l.b16 %v1639
    %v1706 = vunpack.c.h.b16 %v1639
    %v1707 = vunpack.c.l.b16 %v1640
    %v1708 = vunpack.c.h.b16 %v1640
    %v1709 = vunpack.c.l.b16 %v1641
    %v1710 = vunpack.c.h.b16 %v1641
    %v1711 = vunpack.c.l.b16 %v1642
    %v1712 = vunpack.c.h.b16 %v1642
    %v1713 = vunpack.c.l.b16 %v1643
    %v1714 = vunpack.c.h.b16 %v1643
    %v1715 = vunpack.c.l.b16 %v1644
    %v1716 = vunpack.c.h.b16 %v1644
    %v1717 = vunpack.c.l.b16 %v1645
    %v1718 = vunpack.c.h.b16 %v1645
    %v1719 = vunpack.c.l.b16 %v1646
    %v1720 = vunpack.c.h.b16 %v1646
    %v1721 = vunpack.c.l.b16 %v1647
    %v1722 = vunpack.c.h.b16 %v1647
    %v1723 = vunpack.c.l.b16 %v1648
    %v1724 = vunpack.c.h.b16 %v1648
    %v1725 = vunpack.c.l.b16 %v1649
    %v1726 = vunpack.c.h.b16 %v1649
    %v1727 = vunpack.c.l.b16 %v1650
    %v1728 = vunpack.c.h.b16 %v1650
    %v1729 = vunpack.c.l.b16 %v1651
    %v1730 = vunpack.c.h.b16 %v1651
    %v1731 = vunpack.c.l.b16 %v1652
    %v1732 = vunpack.c.h.b16 %v1652
    %v1733 = vunpack.c.l.b16 %v1653
    %v1734 = vunpack.c.h.b16 %v1653
    %v1735 = vunpack.c.l.b16 %v1654
    %v1736 = vunpack.c.h.b16 %v1654
    %v1737 = vunpack.c.l.b16 %v1655
    %v1738 = vunpack.c.h.b16 %v1655
    %v1739 = vunpack.c.l.b16 %v1656
    %v1740 = vunpack.c.h.b16 %v1656
    %v1741 = vunpack.c.l.b16 %v1657
    %v1742 = vunpack.c.h.b16 %v1657
    %v1743 = vunpack.c.l.b16 %v1658
    %v1744 = vunpack.c.h.b16 %v1658
    %v1745 = vunpack.c.l.b16 %v1659
    %v1746 = vunpack.c.h.b16 %v1659
    %v1747 = vunpack.c.l.b16 %v1660
    %v1748 = vunpack.c.h.b16 %v1660
    %v1749 = vunpack.c.l.b16 %v1661
    %v1750 = vunpack.c.h.b16 %v1661
    %v1751 = vunpack.c.l.b16 %v1662
    %v1752 = vunpack.c.h.b16 %v1662
    %v1753 = vunpack.c.l.b16 %v1663
    %v1754 = vunpack.c.h.b16 %v1663
    %v1755 = vunpack.c.l.b16 %v1664
    %v1756 = vunpack.c.h.b16 %v1664
    %v1757 = vunpack.c.l.b16 %v1665
    %v1758 = vunpack.c.h.b16 %v1665
    %v1759 = vunpack.c.l.b16 %v1666
    %v1760 = vunpack.c.h.b16 %v1666
    %v1761 = vunpack.c.l.b16 %v1667
    %v1762 = vunpack.c.h.b16 %v1667
    %v1763 = vunpack.c.l.b16 %v1668
    %v1764 = vunpack.c.h.b16 %v1668
    %v1765 = vunpack.c.l.b16 %v1669
    %v1766 = vunpack.c.h.b16 %v1669
    %v1767 = vpack.c.b16 %v1711, %v1703
    %v1768 = vpack.c.b16 %v1712, %v1704
    %v1769 = vpack.c.b16 %v1713, %v1705
    %v1770 = vpack.c.b16 %v1714, %v1706
    %v1771 = vpack.c.b16 %v1715, %v1707
    %v1772 = vpack.c.b16 %v1716, %v1708
    %v1773 = vpack.c.b16 %v1717, %v1709
    %v1774 = vpack.c.b16 %v1718, %v1710
    %v1775 = vpack.c.b16 %v1727, %v1719
    %v1776 = vpack.c.b16 %v1728, %v1720
    %v1777 = vpack.c.b16 %v1729, %v1721
    %v1778 = vpack.c.b16 %v1730, %v1722
    %v1779 = vpack.c.b16 %v1731, %v1723
    %v1780 = vpack.c.b16 %v1732, %v1724
    %v1781 = vpack.c.b16 %v1733, %v1725
    %v1782 = vpack.c.b16 %v1734, %v1726
    %v1783 = vpack.c.b16 %v1743, %v1735
    %v1784 = vpack.c.b16 %v1744, %v1736
    %v1785 = vpack.c.b16 %v1745, %v1737
    %v1786 = vpack.c.b16 %v1746, %v1738
    %v1787 = vpack.c.b16 %v1747, %v1739
    %v1788 = vpack.c.b16 %v1748, %v1740
    %v1789 = vpack.c.b16 %v1749, %v1741
    %v1790 = vpack.c.b16 %v1750, %v1742
    %v1791 = vpack.c.b16 %v1759, %v1751
    %v1792 = vpack.c.b16 %v1760, %v1752
    %v1793 = vpack.c.b16 %v1761, %v1753
    %v1794 = vpack.c.b16 %v1762, %v1754
    %v1795 = vpack.c.b16 %v1763, %v1755
    %v1796 = vpack.c.b16 %v1764, %v1756
    %v1797 = vpack.c.b16 %v1765, %v1757
    %v1798 = vpack.c.b16 %v1766, %v1758
    %v1832 = vsel %vm325, %v1670, 0
    %1834 = vmatpush.bf16.msra.mxu0 0
    %1835 = vmatpush.bf16.msra.mxu0 0
    %1836 = vmatpush.bf16.msra.mxu0 0
    %1837 = vmatpush.bf16.msra.mxu0 0
    %1838 = vmatpush.bf16.msra.mxu0 %v1791
    %1839 = vmatpush.bf16.msra.mxu0 %v1783
    %1840 = vmatpush.bf16.msra.mxu0 %v1775
    %1841 = vmatpush.bf16.msra.mxu0 %v1767
    %1842 = vmatmul.bf16.gmra.mxu0 %v1832
    %v1843 = vpop.f32.mrf.mxu0
    %v1844 = vadd.f32 0.0, %v1843
    %v1845 = vpop.f32.mrf.mxu0
    %1846 = vdwg.mxu0
    %1847 = vmatpush.bf16.msra.mxu0 0
    %1848 = vmatpush.bf16.msra.mxu0 0
    %1849 = vmatpush.bf16.msra.mxu0 0
    %1850 = vmatpush.bf16.msra.mxu0 0
    %1851 = vmatpush.bf16.msra.mxu0 %v1792
    %1852 = vmatpush.bf16.msra.mxu0 %v1784
    %1853 = vmatpush.bf16.msra.mxu0 %v1776
    %1854 = vmatpush.bf16.msra.mxu0 %v1768
    %1855 = vmatmul.bf16.gmra.mxu0 %v1832
    %v1856 = vpop.f32.mrf.mxu0
    %v1857 = vadd.f32 0.0, %v1856
    %v1858 = vpop.f32.mrf.mxu0
    %1859 = vdwg.mxu0
    %1860 = vmatpush.bf16.msra.mxu0 0
    %1861 = vmatpush.bf16.msra.mxu0 0
    %1862 = vmatpush.bf16.msra.mxu0 0
    %1863 = vmatpush.bf16.msra.mxu0 0
    %1864 = vmatpush.bf16.msra.mxu0 %v1793
    %1865 = vmatpush.bf16.msra.mxu0 %v1785
    %1866 = vmatpush.bf16.msra.mxu0 %v1777
    %1867 = vmatpush.bf16.msra.mxu0 %v1769
    %1868 = vmatmul.bf16.gmra.mxu0 %v1832
    %v1869 = vpop.f32.mrf.mxu0
    %v1870 = vadd.f32 0.0, %v1869
    %v1871 = vpop.f32.mrf.mxu0
    %1872 = vdwg.mxu0
    %1873 = vmatpush.bf16.msra.mxu0 0
    %1874 = vmatpush.bf16.msra.mxu0 0
    %1875 = vmatpush.bf16.msra.mxu0 0
    %1876 = vmatpush.bf16.msra.mxu0 0
    %1877 = vmatpush.bf16.msra.mxu0 %v1794
    %1878 = vmatpush.bf16.msra.mxu0 %v1786
    %1879 = vmatpush.bf16.msra.mxu0 %v1778
    %1880 = vmatpush.bf16.msra.mxu0 %v1770
    %1881 = vmatmul.bf16.gmra.mxu0 %v1832
    %v1882 = vpop.f32.mrf.mxu0
    %v1883 = vadd.f32 0.0, %v1882
    %v1884 = vpop.f32.mrf.mxu0
    %1885 = vdwg.mxu0
    %1886 = vmatpush.bf16.msra.mxu0 0
    %1887 = vmatpush.bf16.msra.mxu0 0
    %1888 = vmatpush.bf16.msra.mxu0 0
    %1889 = vmatpush.bf16.msra.mxu0 0
    %1890 = vmatpush.bf16.msra.mxu0 %v1795
    %1891 = vmatpush.bf16.msra.mxu0 %v1787
    %1892 = vmatpush.bf16.msra.mxu0 %v1779
    %1893 = vmatpush.bf16.msra.mxu0 %v1771
    %1894 = vmatmul.bf16.gmra.mxu0 %v1832
    %v1895 = vpop.f32.mrf.mxu0
    %v1896 = vadd.f32 0.0, %v1895
    %v1897 = vpop.f32.mrf.mxu0
    %1898 = vdwg.mxu0
    %1899 = vmatpush.bf16.msra.mxu0 0
    %1900 = vmatpush.bf16.msra.mxu0 0
    %1901 = vmatpush.bf16.msra.mxu0 0
    %1902 = vmatpush.bf16.msra.mxu0 0
    %1903 = vmatpush.bf16.msra.mxu0 %v1796
    %1904 = vmatpush.bf16.msra.mxu0 %v1788
    %1905 = vmatpush.bf16.msra.mxu0 %v1780
    %1906 = vmatpush.bf16.msra.mxu0 %v1772
    %1907 = vmatmul.bf16.gmra.mxu0 %v1832
    %v1908 = vpop.f32.mrf.mxu0
    %v1909 = vadd.f32 0.0, %v1908
    %v1910 = vpop.f32.mrf.mxu0
    %1911 = vdwg.mxu0
    %1912 = vmatpush.bf16.msra.mxu0 0
    %1913 = vmatpush.bf16.msra.mxu0 0
    %1914 = vmatpush.bf16.msra.mxu0 0
    %1915 = vmatpush.bf16.msra.mxu0 0
    %1916 = vmatpush.bf16.msra.mxu0 %v1797
    %1917 = vmatpush.bf16.msra.mxu0 %v1789
    %1918 = vmatpush.bf16.msra.mxu0 %v1781
    %1919 = vmatpush.bf16.msra.mxu0 %v1773
    %1920 = vmatmul.bf16.gmra.mxu0 %v1832
    %v1921 = vpop.f32.mrf.mxu0
    %v1922 = vadd.f32 0.0, %v1921
    %v1923 = vpop.f32.mrf.mxu0
    %1924 = vdwg.mxu0
    %1925 = vmatpush.bf16.msra.mxu0 0
    %1926 = vmatpush.bf16.msra.mxu0 0
    %1927 = vmatpush.bf16.msra.mxu0 0
    %1928 = vmatpush.bf16.msra.mxu0 0
    %1929 = vmatpush.bf16.msra.mxu0 %v1798
    %1930 = vmatpush.bf16.msra.mxu0 %v1790
    %1931 = vmatpush.bf16.msra.mxu0 %v1782
    %1932 = vmatpush.bf16.msra.mxu0 %v1774
    %1933 = vmatmul.bf16.gmra.mxu0 %v1832
    %v1934 = vpop.f32.mrf.mxu0
    %v1935 = vadd.f32 0.0, %v1934
    %v1936 = vpop.f32.mrf.mxu0
    %1937 = vdwg.mxu0
    %v1938 = vadd.f32 %v1544, %v1844
    %v1939 = vadd.f32 %v1557, %v1857
    %v1940 = vadd.f32 %v1570, %v1870
    %v1941 = vadd.f32 %v1583, %v1883
    %v1942 = vadd.f32 %v1596, %v1896
    %v1943 = vadd.f32 %v1609, %v1909
    %v1944 = vadd.f32 %v1622, %v1922
    %v1945 = vadd.f32 %v1635, %v1935
    %v1946 = vld [vmem:[#allocation2 + $0x300] sm:$0xff]
    %v1947 = vld [vmem:[#allocation2 + $0x308] sm:$0xff]
    %v1948 = vld [vmem:[#allocation2 + $0x310] sm:$0xff]
    %v1949 = vld [vmem:[#allocation2 + $0x318] sm:$0xff]
    %v1950 = vld [vmem:[#allocation2 + $0x320] sm:$0xff]
    %v1951 = vld [vmem:[#allocation2 + $0x328] sm:$0xff]
    %v1952 = vld [vmem:[#allocation2 + $0x330] sm:$0xff]
    %v1953 = vld [vmem:[#allocation2 + $0x338] sm:$0xff]
    %v1954 = vld [vmem:[#allocation2 + $0x340] sm:$0xff]
    %v1955 = vld [vmem:[#allocation2 + $0x348] sm:$0xff]
    %v1956 = vld [vmem:[#allocation2 + $0x350] sm:$0xff]
    %v1957 = vld [vmem:[#allocation2 + $0x358] sm:$0xff]
    %v1958 = vld [vmem:[#allocation2 + $0x360] sm:$0xff]
    %v1959 = vld [vmem:[#allocation2 + $0x368] sm:$0xff]
    %v1960 = vld [vmem:[#allocation2 + $0x370] sm:$0xff]
    %v1961 = vld [vmem:[#allocation2 + $0x378] sm:$0xff]
    %v1962 = vld [vmem:[#allocation2 + $0x380] sm:$0xff]
    %v1963 = vld [vmem:[#allocation2 + $0x388] sm:$0xff]
    %v1964 = vld [vmem:[#allocation2 + $0x390] sm:$0xff]
    %v1965 = vld [vmem:[#allocation2 + $0x398] sm:$0xff]
    %v1966 = vld [vmem:[#allocation2 + $0x3a0] sm:$0xff]
    %v1967 = vld [vmem:[#allocation2 + $0x3a8] sm:$0xff]
    %v1968 = vld [vmem:[#allocation2 + $0x3b0] sm:$0xff]
    %v1969 = vld [vmem:[#allocation2 + $0x3b8] sm:$0xff]
    %v1970 = vld [vmem:[#allocation2 + $0x3c0] sm:$0xff]
    %v1971 = vld [vmem:[#allocation2 + $0x3c8] sm:$0xff]
    %v1972 = vld [vmem:[#allocation2 + $0x3d0] sm:$0xff]
    %v1973 = vld [vmem:[#allocation2 + $0x3d8] sm:$0xff]
    %v1974 = vld [vmem:[#allocation2 + $0x3e0] sm:$0xff]
    %v1975 = vld [vmem:[#allocation2 + $0x3e8] sm:$0xff]
    %v1976 = vld [vmem:[#allocation2 + $0x3f0] sm:$0xff]
    %v1977 = vld [vmem:[#allocation2 + $0x3f8] sm:$0xff]
    %v1978 = vrot.slane %v1037, 3
    %v2011 = vunpack.c.l.b16 %v1946
    %v2012 = vunpack.c.h.b16 %v1946
    %v2013 = vunpack.c.l.b16 %v1947
    %v2014 = vunpack.c.h.b16 %v1947
    %v2015 = vunpack.c.l.b16 %v1948
    %v2016 = vunpack.c.h.b16 %v1948
    %v2017 = vunpack.c.l.b16 %v1949
    %v2018 = vunpack.c.h.b16 %v1949
    %v2019 = vunpack.c.l.b16 %v1950
    %v2020 = vunpack.c.h.b16 %v1950
    %v2021 = vunpack.c.l.b16 %v1951
    %v2022 = vunpack.c.h.b16 %v1951
    %v2023 = vunpack.c.l.b16 %v1952
    %v2024 = vunpack.c.h.b16 %v1952
    %v2025 = vunpack.c.l.b16 %v1953
    %v2026 = vunpack.c.h.b16 %v1953
    %v2027 = vunpack.c.l.b16 %v1954
    %v2028 = vunpack.c.h.b16 %v1954
    %v2029 = vunpack.c.l.b16 %v1955
    %v2030 = vunpack.c.h.b16 %v1955
    %v2031 = vunpack.c.l.b16 %v1956
    %v2032 = vunpack.c.h.b16 %v1956
    %v2033 = vunpack.c.l.b16 %v1957
    %v2034 = vunpack.c.h.b16 %v1957
    %v2035 = vunpack.c.l.b16 %v1958
    %v2036 = vunpack.c.h.b16 %v1958
    %v2037 = vunpack.c.l.b16 %v1959
    %v2038 = vunpack.c.h.b16 %v1959
    %v2039 = vunpack.c.l.b16 %v1960
    %v2040 = vunpack.c.h.b16 %v1960
    %v2041 = vunpack.c.l.b16 %v1961
    %v2042 = vunpack.c.h.b16 %v1961
    %v2043 = vunpack.c.l.b16 %v1962
    %v2044 = vunpack.c.h.b16 %v1962
    %v2045 = vunpack.c.l.b16 %v1963
    %v2046 = vunpack.c.h.b16 %v1963
    %v2047 = vunpack.c.l.b16 %v1964
    %v2048 = vunpack.c.h.b16 %v1964
    %v2049 = vunpack.c.l.b16 %v1965
    %v2050 = vunpack.c.h.b16 %v1965
    %v2051 = vunpack.c.l.b16 %v1966
    %v2052 = vunpack.c.h.b16 %v1966
    %v2053 = vunpack.c.l.b16 %v1967
    %v2054 = vunpack.c.h.b16 %v1967
    %v2055 = vunpack.c.l.b16 %v1968
    %v2056 = vunpack.c.h.b16 %v1968
    %v2057 = vunpack.c.l.b16 %v1969
    %v2058 = vunpack.c.h.b16 %v1969
    %v2059 = vunpack.c.l.b16 %v1970
    %v2060 = vunpack.c.h.b16 %v1970
    %v2061 = vunpack.c.l.b16 %v1971
    %v2062 = vunpack.c.h.b16 %v1971
    %v2063 = vunpack.c.l.b16 %v1972
    %v2064 = vunpack.c.h.b16 %v1972
    %v2065 = vunpack.c.l.b16 %v1973
    %v2066 = vunpack.c.h.b16 %v1973
    %v2067 = vunpack.c.l.b16 %v1974
    %v2068 = vunpack.c.h.b16 %v1974
    %v2069 = vunpack.c.l.b16 %v1975
    %v2070 = vunpack.c.h.b16 %v1975
    %v2071 = vunpack.c.l.b16 %v1976
    %v2072 = vunpack.c.h.b16 %v1976
    %v2073 = vunpack.c.l.b16 %v1977
    %v2074 = vunpack.c.h.b16 %v1977
    %v2075 = vpack.c.b16 %v2019, %v2011
    %v2076 = vpack.c.b16 %v2020, %v2012
    %v2077 = vpack.c.b16 %v2021, %v2013
    %v2078 = vpack.c.b16 %v2022, %v2014
    %v2079 = vpack.c.b16 %v2023, %v2015
    %v2080 = vpack.c.b16 %v2024, %v2016
    %v2081 = vpack.c.b16 %v2025, %v2017
    %v2082 = vpack.c.b16 %v2026, %v2018
    %v2083 = vpack.c.b16 %v2035, %v2027
    %v2084 = vpack.c.b16 %v2036, %v2028
    %v2085 = vpack.c.b16 %v2037, %v2029
    %v2086 = vpack.c.b16 %v2038, %v2030
    %v2087 = vpack.c.b16 %v2039, %v2031
    %v2088 = vpack.c.b16 %v2040, %v2032
    %v2089 = vpack.c.b16 %v2041, %v2033
    %v2090 = vpack.c.b16 %v2042, %v2034
    %v2091 = vpack.c.b16 %v2051, %v2043
    %v2092 = vpack.c.b16 %v2052, %v2044
    %v2093 = vpack.c.b16 %v2053, %v2045
    %v2094 = vpack.c.b16 %v2054, %v2046
    %v2095 = vpack.c.b16 %v2055, %v2047
    %v2096 = vpack.c.b16 %v2056, %v2048
    %v2097 = vpack.c.b16 %v2057, %v2049
    %v2098 = vpack.c.b16 %v2058, %v2050
    %v2099 = vpack.c.b16 %v2067, %v2059
    %v2100 = vpack.c.b16 %v2068, %v2060
    %v2101 = vpack.c.b16 %v2069, %v2061
    %v2102 = vpack.c.b16 %v2070, %v2062
    %v2103 = vpack.c.b16 %v2071, %v2063
    %v2104 = vpack.c.b16 %v2072, %v2064
    %v2105 = vpack.c.b16 %v2073, %v2065
    %v2106 = vpack.c.b16 %v2074, %v2066
    %v2140 = vsel %vm325, %v1978, 0
    %2142 = vmatpush.bf16.msra.mxu0 0
    %2143 = vmatpush.bf16.msra.mxu0 0
    %2144 = vmatpush.bf16.msra.mxu0 0
    %2145 = vmatpush.bf16.msra.mxu0 0
    %2146 = vmatpush.bf16.msra.mxu0 %v2099
    %2147 = vmatpush.bf16.msra.mxu0 %v2091
    %2148 = vmatpush.bf16.msra.mxu0 %v2083
    %2149 = vmatpush.bf16.msra.mxu0 %v2075
    %2150 = vmatmul.bf16.gmra.mxu0 %v2140
    %v2151 = vpop.f32.mrf.mxu0
    %v2152 = vadd.f32 0.0, %v2151
    %v2153 = vpop.f32.mrf.mxu0
    %2154 = vdwg.mxu0
    %2155 = vmatpush.bf16.msra.mxu0 0
    %2156 = vmatpush.bf16.msra.mxu0 0
    %2157 = vmatpush.bf16.msra.mxu0 0
    %2158 = vmatpush.bf16.msra.mxu0 0
    %2159 = vmatpush.bf16.msra.mxu0 %v2100
    %2160 = vmatpush.bf16.msra.mxu0 %v2092
    %2161 = vmatpush.bf16.msra.mxu0 %v2084
    %2162 = vmatpush.bf16.msra.mxu0 %v2076
    %2163 = vmatmul.bf16.gmra.mxu0 %v2140
    %v2164 = vpop.f32.mrf.mxu0
    %v2165 = vadd.f32 0.0, %v2164
    %v2166 = vpop.f32.mrf.mxu0
    %2167 = vdwg.mxu0
    %2168 = vmatpush.bf16.msra.mxu0 0
    %2169 = vmatpush.bf16.msra.mxu0 0
    %2170 = vmatpush.bf16.msra.mxu0 0
    %2171 = vmatpush.bf16.msra.mxu0 0
    %2172 = vmatpush.bf16.msra.mxu0 %v2101
    %2173 = vmatpush.bf16.msra.mxu0 %v2093
    %2174 = vmatpush.bf16.msra.mxu0 %v2085
    %2175 = vmatpush.bf16.msra.mxu0 %v2077
    %2176 = vmatmul.bf16.gmra.mxu0 %v2140
    %v2177 = vpop.f32.mrf.mxu0
    %v2178 = vadd.f32 0.0, %v2177
    %v2179 = vpop.f32.mrf.mxu0
    %2180 = vdwg.mxu0
    %2181 = vmatpush.bf16.msra.mxu0 0
    %2182 = vmatpush.bf16.msra.mxu0 0
    %2183 = vmatpush.bf16.msra.mxu0 0
    %2184 = vmatpush.bf16.msra.mxu0 0
    %2185 = vmatpush.bf16.msra.mxu0 %v2102
    %2186 = vmatpush.bf16.msra.mxu0 %v2094
    %2187 = vmatpush.bf16.msra.mxu0 %v2086
    %2188 = vmatpush.bf16.msra.mxu0 %v2078
    %2189 = vmatmul.bf16.gmra.mxu0 %v2140
    %v2190 = vpop.f32.mrf.mxu0
    %v2191 = vadd.f32 0.0, %v2190
    %v2192 = vpop.f32.mrf.mxu0
    %2193 = vdwg.mxu0
    %2194 = vmatpush.bf16.msra.mxu0 0
    %2195 = vmatpush.bf16.msra.mxu0 0
    %2196 = vmatpush.bf16.msra.mxu0 0
    %2197 = vmatpush.bf16.msra.mxu0 0
    %2198 = vmatpush.bf16.msra.mxu0 %v2103
    %2199 = vmatpush.bf16.msra.mxu0 %v2095
    %2200 = vmatpush.bf16.msra.mxu0 %v2087
    %2201 = vmatpush.bf16.msra.mxu0 %v2079
    %2202 = vmatmul.bf16.gmra.mxu0 %v2140
    %v2203 = vpop.f32.mrf.mxu0
    %v2204 = vadd.f32 0.0, %v2203
    %v2205 = vpop.f32.mrf.mxu0
    %2206 = vdwg.mxu0
    %2207 = vmatpush.bf16.msra.mxu0 0
    %2208 = vmatpush.bf16.msra.mxu0 0
    %2209 = vmatpush.bf16.msra.mxu0 0
    %2210 = vmatpush.bf16.msra.mxu0 0
    %2211 = vmatpush.bf16.msra.mxu0 %v2104
    %2212 = vmatpush.bf16.msra.mxu0 %v2096
    %2213 = vmatpush.bf16.msra.mxu0 %v2088
    %2214 = vmatpush.bf16.msra.mxu0 %v2080
    %2215 = vmatmul.bf16.gmra.mxu0 %v2140
    %v2216 = vpop.f32.mrf.mxu0
    %v2217 = vadd.f32 0.0, %v2216
    %v2218 = vpop.f32.mrf.mxu0
    %2219 = vdwg.mxu0
    %2220 = vmatpush.bf16.msra.mxu0 0
    %2221 = vmatpush.bf16.msra.mxu0 0
    %2222 = vmatpush.bf16.msra.mxu0 0
    %2223 = vmatpush.bf16.msra.mxu0 0
    %2224 = vmatpush.bf16.msra.mxu0 %v2105
    %2225 = vmatpush.bf16.msra.mxu0 %v2097
    %2226 = vmatpush.bf16.msra.mxu0 %v2089
    %2227 = vmatpush.bf16.msra.mxu0 %v2081
    %2228 = vmatmul.bf16.gmra.mxu0 %v2140
    %v2229 = vpop.f32.mrf.mxu0
    %v2230 = vadd.f32 0.0, %v2229
    %v2231 = vpop.f32.mrf.mxu0
    %2232 = vdwg.mxu0
    %2233 = vmatpush.bf16.msra.mxu0 0
    %2234 = vmatpush.bf16.msra.mxu0 0
    %2235 = vmatpush.bf16.msra.mxu0 0
    %2236 = vmatpush.bf16.msra.mxu0 0
    %2237 = vmatpush.bf16.msra.mxu0 %v2106
    %2238 = vmatpush.bf16.msra.mxu0 %v2098
    %2239 = vmatpush.bf16.msra.mxu0 %v2090
    %2240 = vmatpush.bf16.msra.mxu0 %v2082
    %2241 = vmatmul.bf16.gmra.mxu0 %v2140
    %v2242 = vpop.f32.mrf.mxu0
    %v2243 = vadd.f32 0.0, %v2242
    %v2244 = vpop.f32.mrf.mxu0
    %2245 = vdwg.mxu0
    %v2246 = vadd.f32 %v1938, %v2152
    %v2247 = vadd.f32 %v1939, %v2165
    %v2248 = vadd.f32 %v1940, %v2178
    %v2249 = vadd.f32 %v1941, %v2191
    %v2250 = vadd.f32 %v1942, %v2204
    %v2251 = vadd.f32 %v1943, %v2217
    %v2252 = vadd.f32 %v1944, %v2230
    %v2253 = vadd.f32 %v1945, %v2243
    %v2254 = vpack.c.bf16 %v1030, %v1030
    %v2255 = vld [vmem:[#allocation2 + $0x400] sm:$0xff]
    %v2256 = vld [vmem:[#allocation2 + $0x408] sm:$0xff]
    %v2257 = vld [vmem:[#allocation2 + $0x410] sm:$0xff]
    %v2258 = vld [vmem:[#allocation2 + $0x418] sm:$0xff]
    %v2259 = vld [vmem:[#allocation2 + $0x420] sm:$0xff]
    %v2260 = vld [vmem:[#allocation2 + $0x428] sm:$0xff]
    %v2261 = vld [vmem:[#allocation2 + $0x430] sm:$0xff]
    %v2262 = vld [vmem:[#allocation2 + $0x438] sm:$0xff]
    %v2263 = vld [vmem:[#allocation2 + $0x440] sm:$0xff]
    %v2264 = vld [vmem:[#allocation2 + $0x448] sm:$0xff]
    %v2265 = vld [vmem:[#allocation2 + $0x450] sm:$0xff]
    %v2266 = vld [vmem:[#allocation2 + $0x458] sm:$0xff]
    %v2267 = vld [vmem:[#allocation2 + $0x460] sm:$0xff]
    %v2268 = vld [vmem:[#allocation2 + $0x468] sm:$0xff]
    %v2269 = vld [vmem:[#allocation2 + $0x470] sm:$0xff]
    %v2270 = vld [vmem:[#allocation2 + $0x478] sm:$0xff]
    %v2271 = vld [vmem:[#allocation2 + $0x480] sm:$0xff]
    %v2272 = vld [vmem:[#allocation2 + $0x488] sm:$0xff]
    %v2273 = vld [vmem:[#allocation2 + $0x490] sm:$0xff]
    %v2274 = vld [vmem:[#allocation2 + $0x498] sm:$0xff]
    %v2275 = vld [vmem:[#allocation2 + $0x4a0] sm:$0xff]
    %v2276 = vld [vmem:[#allocation2 + $0x4a8] sm:$0xff]
    %v2277 = vld [vmem:[#allocation2 + $0x4b0] sm:$0xff]
    %v2278 = vld [vmem:[#allocation2 + $0x4b8] sm:$0xff]
    %v2279 = vld [vmem:[#allocation2 + $0x4c0] sm:$0xff]
    %v2280 = vld [vmem:[#allocation2 + $0x4c8] sm:$0xff]
    %v2281 = vld [vmem:[#allocation2 + $0x4d0] sm:$0xff]
    %v2282 = vld [vmem:[#allocation2 + $0x4d8] sm:$0xff]
    %v2283 = vld [vmem:[#allocation2 + $0x4e0] sm:$0xff]
    %v2284 = vld [vmem:[#allocation2 + $0x4e8] sm:$0xff]
    %v2285 = vld [vmem:[#allocation2 + $0x4f0] sm:$0xff]
    %v2286 = vld [vmem:[#allocation2 + $0x4f8] sm:$0xff]
    %v2319 = vunpack.c.l.b16 %v2255
    %v2320 = vunpack.c.h.b16 %v2255
    %v2321 = vunpack.c.l.b16 %v2256
    %v2322 = vunpack.c.h.b16 %v2256
    %v2323 = vunpack.c.l.b16 %v2257
    %v2324 = vunpack.c.h.b16 %v2257
    %v2325 = vunpack.c.l.b16 %v2258
    %v2326 = vunpack.c.h.b16 %v2258
    %v2327 = vunpack.c.l.b16 %v2259
    %v2328 = vunpack.c.h.b16 %v2259
    %v2329 = vunpack.c.l.b16 %v2260
    %v2330 = vunpack.c.h.b16 %v2260
    %v2331 = vunpack.c.l.b16 %v2261
    %v2332 = vunpack.c.h.b16 %v2261
    %v2333 = vunpack.c.l.b16 %v2262
    %v2334 = vunpack.c.h.b16 %v2262
    %v2335 = vunpack.c.l.b16 %v2263
    %v2336 = vunpack.c.h.b16 %v2263
    %v2337 = vunpack.c.l.b16 %v2264
    %v2338 = vunpack.c.h.b16 %v2264
    %v2339 = vunpack.c.l.b16 %v2265
    %v2340 = vunpack.c.h.b16 %v2265
    %v2341 = vunpack.c.l.b16 %v2266
    %v2342 = vunpack.c.h.b16 %v2266
    %v2343 = vunpack.c.l.b16 %v2267
    %v2344 = vunpack.c.h.b16 %v2267
    %v2345 = vunpack.c.l.b16 %v2268
    %v2346 = vunpack.c.h.b16 %v2268
    %v2347 = vunpack.c.l.b16 %v2269
    %v2348 = vunpack.c.h.b16 %v2269
    %v2349 = vunpack.c.l.b16 %v2270
    %v2350 = vunpack.c.h.b16 %v2270
    %v2351 = vunpack.c.l.b16 %v2271
    %v2352 = vunpack.c.h.b16 %v2271
    %v2353 = vunpack.c.l.b16 %v2272
    %v2354 = vunpack.c.h.b16 %v2272
    %v2355 = vunpack.c.l.b16 %v2273
    %v2356 = vunpack.c.h.b16 %v2273
    %v2357 = vunpack.c.l.b16 %v2274
    %v2358 = vunpack.c.h.b16 %v2274
    %v2359 = vunpack.c.l.b16 %v2275
    %v2360 = vunpack.c.h.b16 %v2275
    %v2361 = vunpack.c.l.b16 %v2276
    %v2362 = vunpack.c.h.b16 %v2276
    %v2363 = vunpack.c.l.b16 %v2277
    %v2364 = vunpack.c.h.b16 %v2277
    %v2365 = vunpack.c.l.b16 %v2278
    %v2366 = vunpack.c.h.b16 %v2278
    %v2367 = vunpack.c.l.b16 %v2279
    %v2368 = vunpack.c.h.b16 %v2279
    %v2369 = vunpack.c.l.b16 %v2280
    %v2370 = vunpack.c.h.b16 %v2280
    %v2371 = vunpack.c.l.b16 %v2281
    %v2372 = vunpack.c.h.b16 %v2281
    %v2373 = vunpack.c.l.b16 %v2282
    %v2374 = vunpack.c.h.b16 %v2282
    %v2375 = vunpack.c.l.b16 %v2283
    %v2376 = vunpack.c.h.b16 %v2283
    %v2377 = vunpack.c.l.b16 %v2284
    %v2378 = vunpack.c.h.b16 %v2284
    %v2379 = vunpack.c.l.b16 %v2285
    %v2380 = vunpack.c.h.b16 %v2285
    %v2381 = vunpack.c.l.b16 %v2286
    %v2382 = vunpack.c.h.b16 %v2286
    %v2383 = vpack.c.b16 %v2327, %v2319
    %v2384 = vpack.c.b16 %v2328, %v2320
    %v2385 = vpack.c.b16 %v2329, %v2321
    %v2386 = vpack.c.b16 %v2330, %v2322
    %v2387 = vpack.c.b16 %v2331, %v2323
    %v2388 = vpack.c.b16 %v2332, %v2324
    %v2389 = vpack.c.b16 %v2333, %v2325
    %v2390 = vpack.c.b16 %v2334, %v2326
    %v2391 = vpack.c.b16 %v2343, %v2335
    %v2392 = vpack.c.b16 %v2344, %v2336
    %v2393 = vpack.c.b16 %v2345, %v2337
    %v2394 = vpack.c.b16 %v2346, %v2338
    %v2395 = vpack.c.b16 %v2347, %v2339
    %v2396 = vpack.c.b16 %v2348, %v2340
    %v2397 = vpack.c.b16 %v2349, %v2341
    %v2398 = vpack.c.b16 %v2350, %v2342
    %v2399 = vpack.c.b16 %v2359, %v2351
    %v2400 = vpack.c.b16 %v2360, %v2352
    %v2401 = vpack.c.b16 %v2361, %v2353
    %v2402 = vpack.c.b16 %v2362, %v2354
    %v2403 = vpack.c.b16 %v2363, %v2355
    %v2404 = vpack.c.b16 %v2364, %v2356
    %v2405 = vpack.c.b16 %v2365, %v2357
    %v2406 = vpack.c.b16 %v2366, %v2358
    %v2407 = vpack.c.b16 %v2375, %v2367
    %v2408 = vpack.c.b16 %v2376, %v2368
    %v2409 = vpack.c.b16 %v2377, %v2369
    %v2410 = vpack.c.b16 %v2378, %v2370
    %v2411 = vpack.c.b16 %v2379, %v2371
    %v2412 = vpack.c.b16 %v2380, %v2372
    %v2413 = vpack.c.b16 %v2381, %v2373
    %v2414 = vpack.c.b16 %v2382, %v2374
    %v2448 = vsel %vm325, %v2254, 0
    %2450 = vmatpush.bf16.msra.mxu0 0
    %2451 = vmatpush.bf16.msra.mxu0 0
    %2452 = vmatpush.bf16.msra.mxu0 0
    %2453 = vmatpush.bf16.msra.mxu0 0
    %2454 = vmatpush.bf16.msra.mxu0 %v2407
    %2455 = vmatpush.bf16.msra.mxu0 %v2399
    %2456 = vmatpush.bf16.msra.mxu0 %v2391
    %2457 = vmatpush.bf16.msra.mxu0 %v2383
    %2458 = vmatmul.bf16.gmra.mxu0 %v2448
    %v2459 = vpop.f32.mrf.mxu0
    %v2460 = vadd.f32 0.0, %v2459
    %v2461 = vpop.f32.mrf.mxu0
    %2462 = vdwg.mxu0
    %2463 = vmatpush.bf16.msra.mxu0 0
    %2464 = vmatpush.bf16.msra.mxu0 0
    %2465 = vmatpush.bf16.msra.mxu0 0
    %2466 = vmatpush.bf16.msra.mxu0 0
    %2467 = vmatpush.bf16.msra.mxu0 %v2408
    %2468 = vmatpush.bf16.msra.mxu0 %v2400
    %2469 = vmatpush.bf16.msra.mxu0 %v2392
    %2470 = vmatpush.bf16.msra.mxu0 %v2384
    %2471 = vmatmul.bf16.gmra.mxu0 %v2448
    %v2472 = vpop.f32.mrf.mxu0
    %v2473 = vadd.f32 0.0, %v2472
    %v2474 = vpop.f32.mrf.mxu0
    %2475 = vdwg.mxu0
    %2476 = vmatpush.bf16.msra.mxu0 0
    %2477 = vmatpush.bf16.msra.mxu0 0
    %2478 = vmatpush.bf16.msra.mxu0 0
    %2479 = vmatpush.bf16.msra.mxu0 0
    %2480 = vmatpush.bf16.msra.mxu0 %v2409
    %2481 = vmatpush.bf16.msra.mxu0 %v2401
    %2482 = vmatpush.bf16.msra.mxu0 %v2393
    %2483 = vmatpush.bf16.msra.mxu0 %v2385
    %2484 = vmatmul.bf16.gmra.mxu0 %v2448
    %v2485 = vpop.f32.mrf.mxu0
    %v2486 = vadd.f32 0.0, %v2485
    %v2487 = vpop.f32.mrf.mxu0
    %2488 = vdwg.mxu0
    %2489 = vmatpush.bf16.msra.mxu0 0
    %2490 = vmatpush.bf16.msra.mxu0 0
    %2491 = vmatpush.bf16.msra.mxu0 0
    %2492 = vmatpush.bf16.msra.mxu0 0
    %2493 = vmatpush.bf16.msra.mxu0 %v2410
    %2494 = vmatpush.bf16.msra.mxu0 %v2402
    %2495 = vmatpush.bf16.msra.mxu0 %v2394
    %2496 = vmatpush.bf16.msra.mxu0 %v2386
    %2497 = vmatmul.bf16.gmra.mxu0 %v2448
    %v2498 = vpop.f32.mrf.mxu0
    %v2499 = vadd.f32 0.0, %v2498
    %v2500 = vpop.f32.mrf.mxu0
    %2501 = vdwg.mxu0
    %2502 = vmatpush.bf16.msra.mxu0 0
    %2503 = vmatpush.bf16.msra.mxu0 0
    %2504 = vmatpush.bf16.msra.mxu0 0
    %2505 = vmatpush.bf16.msra.mxu0 0
    %2506 = vmatpush.bf16.msra.mxu0 %v2411
    %2507 = vmatpush.bf16.msra.mxu0 %v2403
    %2508 = vmatpush.bf16.msra.mxu0 %v2395
    %2509 = vmatpush.bf16.msra.mxu0 %v2387
    %2510 = vmatmul.bf16.gmra.mxu0 %v2448
    %v2511 = vpop.f32.mrf.mxu0
    %v2512 = vadd.f32 0.0, %v2511
    %v2513 = vpop.f32.mrf.mxu0
    %2514 = vdwg.mxu0
    %2515 = vmatpush.bf16.msra.mxu0 0
    %2516 = vmatpush.bf16.msra.mxu0 0
    %2517 = vmatpush.bf16.msra.mxu0 0
    %2518 = vmatpush.bf16.msra.mxu0 0
    %2519 = vmatpush.bf16.msra.mxu0 %v2412
    %2520 = vmatpush.bf16.msra.mxu0 %v2404
    %2521 = vmatpush.bf16.msra.mxu0 %v2396
    %2522 = vmatpush.bf16.msra.mxu0 %v2388
    %2523 = vmatmul.bf16.gmra.mxu0 %v2448
    %v2524 = vpop.f32.mrf.mxu0
    %v2525 = vadd.f32 0.0, %v2524
    %v2526 = vpop.f32.mrf.mxu0
    %2527 = vdwg.mxu0
    %2528 = vmatpush.bf16.msra.mxu0 0
    %2529 = vmatpush.bf16.msra.mxu0 0
    %2530 = vmatpush.bf16.msra.mxu0 0
    %2531 = vmatpush.bf16.msra.mxu0 0
    %2532 = vmatpush.bf16.msra.mxu0 %v2413
    %2533 = vmatpush.bf16.msra.mxu0 %v2405
    %2534 = vmatpush.bf16.msra.mxu0 %v2397
    %2535 = vmatpush.bf16.msra.mxu0 %v2389
    %2536 = vmatmul.bf16.gmra.mxu0 %v2448
    %v2537 = vpop.f32.mrf.mxu0
    %v2538 = vadd.f32 0.0, %v2537
    %v2539 = vpop.f32.mrf.mxu0
    %2540 = vdwg.mxu0
    %2541 = vmatpush.bf16.msra.mxu0 0
    %2542 = vmatpush.bf16.msra.mxu0 0
    %2543 = vmatpush.bf16.msra.mxu0 0
    %2544 = vmatpush.bf16.msra.mxu0 0
    %2545 = vmatpush.bf16.msra.mxu0 %v2414
    %2546 = vmatpush.bf16.msra.mxu0 %v2406
    %2547 = vmatpush.bf16.msra.mxu0 %v2398
    %2548 = vmatpush.bf16.msra.mxu0 %v2390
    %2549 = vmatmul.bf16.gmra.mxu0 %v2448
    %v2550 = vpop.f32.mrf.mxu0
    %v2551 = vadd.f32 0.0, %v2550
    %v2552 = vpop.f32.mrf.mxu0
    %2553 = vdwg.mxu0
    %v2554 = vadd.f32 %v2246, %v2460
    %v2555 = vadd.f32 %v2247, %v2473
    %v2556 = vadd.f32 %v2248, %v2486
    %v2557 = vadd.f32 %v2249, %v2499
    %v2558 = vadd.f32 %v2250, %v2512
    %v2559 = vadd.f32 %v2251, %v2525
    %v2560 = vadd.f32 %v2252, %v2538
    %v2561 = vadd.f32 %v2253, %v2551
    %v2562 = vld [vmem:[#allocation2 + $0x500] sm:$0xff]
    %v2563 = vld [vmem:[#allocation2 + $0x508] sm:$0xff]
    %v2564 = vld [vmem:[#allocation2 + $0x510] sm:$0xff]
    %v2565 = vld [vmem:[#allocation2 + $0x518] sm:$0xff]
    %v2566 = vld [vmem:[#allocation2 + $0x520] sm:$0xff]
    %v2567 = vld [vmem:[#allocation2 + $0x528] sm:$0xff]
    %v2568 = vld [vmem:[#allocation2 + $0x530] sm:$0xff]
    %v2569 = vld [vmem:[#allocation2 + $0x538] sm:$0xff]
    %v2570 = vld [vmem:[#allocation2 + $0x540] sm:$0xff]
    %v2571 = vld [vmem:[#allocation2 + $0x548] sm:$0xff]
    %v2572 = vld [vmem:[#allocation2 + $0x550] sm:$0xff]
    %v2573 = vld [vmem:[#allocation2 + $0x558] sm:$0xff]
    %v2574 = vld [vmem:[#allocation2 + $0x560] sm:$0xff]
    %v2575 = vld [vmem:[#allocation2 + $0x568] sm:$0xff]
    %v2576 = vld [vmem:[#allocation2 + $0x570] sm:$0xff]
    %v2577 = vld [vmem:[#allocation2 + $0x578] sm:$0xff]
    %v2578 = vld [vmem:[#allocation2 + $0x580] sm:$0xff]
    %v2579 = vld [vmem:[#allocation2 + $0x588] sm:$0xff]
    %v2580 = vld [vmem:[#allocation2 + $0x590] sm:$0xff]
    %v2581 = vld [vmem:[#allocation2 + $0x598] sm:$0xff]
    %v2582 = vld [vmem:[#allocation2 + $0x5a0] sm:$0xff]
    %v2583 = vld [vmem:[#allocation2 + $0x5a8] sm:$0xff]
    %v2584 = vld [vmem:[#allocation2 + $0x5b0] sm:$0xff]
    %v2585 = vld [vmem:[#allocation2 + $0x5b8] sm:$0xff]
    %v2586 = vld [vmem:[#allocation2 + $0x5c0] sm:$0xff]
    %v2587 = vld [vmem:[#allocation2 + $0x5c8] sm:$0xff]
    %v2588 = vld [vmem:[#allocation2 + $0x5d0] sm:$0xff]
    %v2589 = vld [vmem:[#allocation2 + $0x5d8] sm:$0xff]
    %v2590 = vld [vmem:[#allocation2 + $0x5e0] sm:$0xff]
    %v2591 = vld [vmem:[#allocation2 + $0x5e8] sm:$0xff]
    %v2592 = vld [vmem:[#allocation2 + $0x5f0] sm:$0xff]
    %v2593 = vld [vmem:[#allocation2 + $0x5f8] sm:$0xff]
    %v2595 = vrot.slane %v2254, 1
    %v2628 = vunpack.c.l.b16 %v2562
    %v2629 = vunpack.c.h.b16 %v2562
    %v2630 = vunpack.c.l.b16 %v2563
    %v2631 = vunpack.c.h.b16 %v2563
    %v2632 = vunpack.c.l.b16 %v2564
    %v2633 = vunpack.c.h.b16 %v2564
    %v2634 = vunpack.c.l.b16 %v2565
    %v2635 = vunpack.c.h.b16 %v2565
    %v2636 = vunpack.c.l.b16 %v2566
    %v2637 = vunpack.c.h.b16 %v2566
    %v2638 = vunpack.c.l.b16 %v2567
    %v2639 = vunpack.c.h.b16 %v2567
    %v2640 = vunpack.c.l.b16 %v2568
    %v2641 = vunpack.c.h.b16 %v2568
    %v2642 = vunpack.c.l.b16 %v2569
    %v2643 = vunpack.c.h.b16 %v2569
    %v2644 = vunpack.c.l.b16 %v2570
    %v2645 = vunpack.c.h.b16 %v2570
    %v2646 = vunpack.c.l.b16 %v2571
    %v2647 = vunpack.c.h.b16 %v2571
    %v2648 = vunpack.c.l.b16 %v2572
    %v2649 = vunpack.c.h.b16 %v2572
    %v2650 = vunpack.c.l.b16 %v2573
    %v2651 = vunpack.c.h.b16 %v2573
    %v2652 = vunpack.c.l.b16 %v2574
    %v2653 = vunpack.c.h.b16 %v2574
    %v2654 = vunpack.c.l.b16 %v2575
    %v2655 = vunpack.c.h.b16 %v2575
    %v2656 = vunpack.c.l.b16 %v2576
    %v2657 = vunpack.c.h.b16 %v2576
    %v2658 = vunpack.c.l.b16 %v2577
    %v2659 = vunpack.c.h.b16 %v2577
    %v2660 = vunpack.c.l.b16 %v2578
    %v2661 = vunpack.c.h.b16 %v2578
    %v2662 = vunpack.c.l.b16 %v2579
    %v2663 = vunpack.c.h.b16 %v2579
    %v2664 = vunpack.c.l.b16 %v2580
    %v2665 = vunpack.c.h.b16 %v2580
    %v2666 = vunpack.c.l.b16 %v2581
    %v2667 = vunpack.c.h.b16 %v2581
    %v2668 = vunpack.c.l.b16 %v2582
    %v2669 = vunpack.c.h.b16 %v2582
    %v2670 = vunpack.c.l.b16 %v2583
    %v2671 = vunpack.c.h.b16 %v2583
    %v2672 = vunpack.c.l.b16 %v2584
    %v2673 = vunpack.c.h.b16 %v2584
    %v2674 = vunpack.c.l.b16 %v2585
    %v2675 = vunpack.c.h.b16 %v2585
    %v2676 = vunpack.c.l.b16 %v2586
    %v2677 = vunpack.c.h.b16 %v2586
    %v2678 = vunpack.c.l.b16 %v2587
    %v2679 = vunpack.c.h.b16 %v2587
    %v2680 = vunpack.c.l.b16 %v2588
    %v2681 = vunpack.c.h.b16 %v2588
    %v2682 = vunpack.c.l.b16 %v2589
    %v2683 = vunpack.c.h.b16 %v2589
    %v2684 = vunpack.c.l.b16 %v2590
    %v2685 = vunpack.c.h.b16 %v2590
    %v2686 = vunpack.c.l.b16 %v2591
    %v2687 = vunpack.c.h.b16 %v2591
    %v2688 = vunpack.c.l.b16 %v2592
    %v2689 = vunpack.c.h.b16 %v2592
    %v2690 = vunpack.c.l.b16 %v2593
    %v2691 = vunpack.c.h.b16 %v2593
    %v2692 = vpack.c.b16 %v2636, %v2628
    %v2693 = vpack.c.b16 %v2637, %v2629
    %v2694 = vpack.c.b16 %v2638, %v2630
    %v2695 = vpack.c.b16 %v2639, %v2631
    %v2696 = vpack.c.b16 %v2640, %v2632
    %v2697 = vpack.c.b16 %v2641, %v2633
    %v2698 = vpack.c.b16 %v2642, %v2634
    %v2699 = vpack.c.b16 %v2643, %v2635
    %v2700 = vpack.c.b16 %v2652, %v2644
    %v2701 = vpack.c.b16 %v2653, %v2645
    %v2702 = vpack.c.b16 %v2654, %v2646
    %v2703 = vpack.c.b16 %v2655, %v2647
    %v2704 = vpack.c.b16 %v2656, %v2648
    %v2705 = vpack.c.b16 %v2657, %v2649
    %v2706 = vpack.c.b16 %v2658, %v2650
    %v2707 = vpack.c.b16 %v2659, %v2651
    %v2708 = vpack.c.b16 %v2668, %v2660
    %v2709 = vpack.c.b16 %v2669, %v2661
    %v2710 = vpack.c.b16 %v2670, %v2662
    %v2711 = vpack.c.b16 %v2671, %v2663
    %v2712 = vpack.c.b16 %v2672, %v2664
    %v2713 = vpack.c.b16 %v2673, %v2665
    %v2714 = vpack.c.b16 %v2674, %v2666
    %v2715 = vpack.c.b16 %v2675, %v2667
    %v2716 = vpack.c.b16 %v2684, %v2676
    %v2717 = vpack.c.b16 %v2685, %v2677
    %v2718 = vpack.c.b16 %v2686, %v2678
    %v2719 = vpack.c.b16 %v2687, %v2679
    %v2720 = vpack.c.b16 %v2688, %v2680
    %v2721 = vpack.c.b16 %v2689, %v2681
    %v2722 = vpack.c.b16 %v2690, %v2682
    %v2723 = vpack.c.b16 %v2691, %v2683
    %v2757 = vsel %vm325, %v2595, 0
    %2759 = vmatpush.bf16.msra.mxu0 0
    %2760 = vmatpush.bf16.msra.mxu0 0
    %2761 = vmatpush.bf16.msra.mxu0 0
    %2762 = vmatpush.bf16.msra.mxu0 0
    %2763 = vmatpush.bf16.msra.mxu0 %v2716
    %2764 = vmatpush.bf16.msra.mxu0 %v2708
    %2765 = vmatpush.bf16.msra.mxu0 %v2700
    %2766 = vmatpush.bf16.msra.mxu0 %v2692
    %2767 = vmatmul.bf16.gmra.mxu0 %v2757
    %v2768 = vpop.f32.mrf.mxu0
    %v2769 = vadd.f32 0.0, %v2768
    %v2770 = vpop.f32.mrf.mxu0
    %2771 = vdwg.mxu0
    %2772 = vmatpush.bf16.msra.mxu0 0
    %2773 = vmatpush.bf16.msra.mxu0 0
    %2774 = vmatpush.bf16.msra.mxu0 0
    %2775 = vmatpush.bf16.msra.mxu0 0
    %2776 = vmatpush.bf16.msra.mxu0 %v2717
    %2777 = vmatpush.bf16.msra.mxu0 %v2709
    %2778 = vmatpush.bf16.msra.mxu0 %v2701
    %2779 = vmatpush.bf16.msra.mxu0 %v2693
    %2780 = vmatmul.bf16.gmra.mxu0 %v2757
    %v2781 = vpop.f32.mrf.mxu0
    %v2782 = vadd.f32 0.0, %v2781
    %v2783 = vpop.f32.mrf.mxu0
    %2784 = vdwg.mxu0
    %2785 = vmatpush.bf16.msra.mxu0 0
    %2786 = vmatpush.bf16.msra.mxu0 0
    %2787 = vmatpush.bf16.msra.mxu0 0
    %2788 = vmatpush.bf16.msra.mxu0 0
    %2789 = vmatpush.bf16.msra.mxu0 %v2718
    %2790 = vmatpush.bf16.msra.mxu0 %v2710
    %2791 = vmatpush.bf16.msra.mxu0 %v2702
    %2792 = vmatpush.bf16.msra.mxu0 %v2694
    %2793 = vmatmul.bf16.gmra.mxu0 %v2757
    %v2794 = vpop.f32.mrf.mxu0
    %v2795 = vadd.f32 0.0, %v2794
    %v2796 = vpop.f32.mrf.mxu0
    %2797 = vdwg.mxu0
    %2798 = vmatpush.bf16.msra.mxu0 0
    %2799 = vmatpush.bf16.msra.mxu0 0
    %2800 = vmatpush.bf16.msra.mxu0 0
    %2801 = vmatpush.bf16.msra.mxu0 0
    %2802 = vmatpush.bf16.msra.mxu0 %v2719
    %2803 = vmatpush.bf16.msra.mxu0 %v2711
    %2804 = vmatpush.bf16.msra.mxu0 %v2703
    %2805 = vmatpush.bf16.msra.mxu0 %v2695
    %2806 = vmatmul.bf16.gmra.mxu0 %v2757
    %v2807 = vpop.f32.mrf.mxu0
    %v2808 = vadd.f32 0.0, %v2807
    %v2809 = vpop.f32.mrf.mxu0
    %2810 = vdwg.mxu0
    %2811 = vmatpush.bf16.msra.mxu0 0
    %2812 = vmatpush.bf16.msra.mxu0 0
    %2813 = vmatpush.bf16.msra.mxu0 0
    %2814 = vmatpush.bf16.msra.mxu0 0
    %2815 = vmatpush.bf16.msra.mxu0 %v2720
    %2816 = vmatpush.bf16.msra.mxu0 %v2712
    %2817 = vmatpush.bf16.msra.mxu0 %v2704
    %2818 = vmatpush.bf16.msra.mxu0 %v2696
    %2819 = vmatmul.bf16.gmra.mxu0 %v2757
    %v2820 = vpop.f32.mrf.mxu0
    %v2821 = vadd.f32 0.0, %v2820
    %v2822 = vpop.f32.mrf.mxu0
    %2823 = vdwg.mxu0
    %2824 = vmatpush.bf16.msra.mxu0 0
    %2825 = vmatpush.bf16.msra.mxu0 0
    %2826 = vmatpush.bf16.msra.mxu0 0
    %2827 = vmatpush.bf16.msra.mxu0 0
    %2828 = vmatpush.bf16.msra.mxu0 %v2721
    %2829 = vmatpush.bf16.msra.mxu0 %v2713
    %2830 = vmatpush.bf16.msra.mxu0 %v2705
    %2831 = vmatpush.bf16.msra.mxu0 %v2697
    %2832 = vmatmul.bf16.gmra.mxu0 %v2757
    %v2833 = vpop.f32.mrf.mxu0
    %v2834 = vadd.f32 0.0, %v2833
    %v2835 = vpop.f32.mrf.mxu0
    %2836 = vdwg.mxu0
    %2837 = vmatpush.bf16.msra.mxu0 0
    %2838 = vmatpush.bf16.msra.mxu0 0
    %2839 = vmatpush.bf16.msra.mxu0 0
    %2840 = vmatpush.bf16.msra.mxu0 0
    %2841 = vmatpush.bf16.msra.mxu0 %v2722
    %2842 = vmatpush.bf16.msra.mxu0 %v2714
    %2843 = vmatpush.bf16.msra.mxu0 %v2706
    %2844 = vmatpush.bf16.msra.mxu0 %v2698
    %2845 = vmatmul.bf16.gmra.mxu0 %v2757
    %v2846 = vpop.f32.mrf.mxu0
    %v2847 = vadd.f32 0.0, %v2846
    %v2848 = vpop.f32.mrf.mxu0
    %2849 = vdwg.mxu0
    %2850 = vmatpush.bf16.msra.mxu0 0
    %2851 = vmatpush.bf16.msra.mxu0 0
    %2852 = vmatpush.bf16.msra.mxu0 0
    %2853 = vmatpush.bf16.msra.mxu0 0
    %2854 = vmatpush.bf16.msra.mxu0 %v2723
    %2855 = vmatpush.bf16.msra.mxu0 %v2715
    %2856 = vmatpush.bf16.msra.mxu0 %v2707
    %2857 = vmatpush.bf16.msra.mxu0 %v2699
    %2858 = vmatmul.bf16.gmra.mxu0 %v2757
    %v2859 = vpop.f32.mrf.mxu0
    %v2860 = vadd.f32 0.0, %v2859
    %v2861 = vpop.f32.mrf.mxu0
    %2862 = vdwg.mxu0
    %v2863 = vadd.f32 %v2554, %v2769
    %v2864 = vadd.f32 %v2555, %v2782
    %v2865 = vadd.f32 %v2556, %v2795
    %v2866 = vadd.f32 %v2557, %v2808
    %v2867 = vadd.f32 %v2558, %v2821
    %v2868 = vadd.f32 %v2559, %v2834
    %v2869 = vadd.f32 %v2560, %v2847
    %v2870 = vadd.f32 %v2561, %v2860
    %v2871 = vld [vmem:[#allocation2 + $0x600] sm:$0xff]
    %v2872 = vld [vmem:[#allocation2 + $0x608] sm:$0xff]
    %v2873 = vld [vmem:[#allocation2 + $0x610] sm:$0xff]
    %v2874 = vld [vmem:[#allocation2 + $0x618] sm:$0xff]
    %v2875 = vld [vmem:[#allocation2 + $0x620] sm:$0xff]
    %v2876 = vld [vmem:[#allocation2 + $0x628] sm:$0xff]
    %v2877 = vld [vmem:[#allocation2 + $0x630] sm:$0xff]
    %v2878 = vld [vmem:[#allocation2 + $0x638] sm:$0xff]
    %v2879 = vld [vmem:[#allocation2 + $0x640] sm:$0xff]
    %v2880 = vld [vmem:[#allocation2 + $0x648] sm:$0xff]
    %v2881 = vld [vmem:[#allocation2 + $0x650] sm:$0xff]
    %v2882 = vld [vmem:[#allocation2 + $0x658] sm:$0xff]
    %v2883 = vld [vmem:[#allocation2 + $0x660] sm:$0xff]
    %v2884 = vld [vmem:[#allocation2 + $0x668] sm:$0xff]
    %v2885 = vld [vmem:[#allocation2 + $0x670] sm:$0xff]
    %v2886 = vld [vmem:[#allocation2 + $0x678] sm:$0xff]
    %v2887 = vld [vmem:[#allocation2 + $0x680] sm:$0xff]
    %v2888 = vld [vmem:[#allocation2 + $0x688] sm:$0xff]
    %v2889 = vld [vmem:[#allocation2 + $0x690] sm:$0xff]
    %v2890 = vld [vmem:[#allocation2 + $0x698] sm:$0xff]
    %v2891 = vld [vmem:[#allocation2 + $0x6a0] sm:$0xff]
    %v2892 = vld [vmem:[#allocation2 + $0x6a8] sm:$0xff]
    %v2893 = vld [vmem:[#allocation2 + $0x6b0] sm:$0xff]
    %v2894 = vld [vmem:[#allocation2 + $0x6b8] sm:$0xff]
    %v2895 = vld [vmem:[#allocation2 + $0x6c0] sm:$0xff]
    %v2896 = vld [vmem:[#allocation2 + $0x6c8] sm:$0xff]
    %v2897 = vld [vmem:[#allocation2 + $0x6d0] sm:$0xff]
    %v2898 = vld [vmem:[#allocation2 + $0x6d8] sm:$0xff]
    %v2899 = vld [vmem:[#allocation2 + $0x6e0] sm:$0xff]
    %v2900 = vld [vmem:[#allocation2 + $0x6e8] sm:$0xff]
    %v2901 = vld [vmem:[#allocation2 + $0x6f0] sm:$0xff]
    %v2902 = vld [vmem:[#allocation2 + $0x6f8] sm:$0xff]
    %v2903 = vrot.slane %v2254, 2
    %v2936 = vunpack.c.l.b16 %v2871
    %v2937 = vunpack.c.h.b16 %v2871
    %v2938 = vunpack.c.l.b16 %v2872
    %v2939 = vunpack.c.h.b16 %v2872
    %v2940 = vunpack.c.l.b16 %v2873
    %v2941 = vunpack.c.h.b16 %v2873
    %v2942 = vunpack.c.l.b16 %v2874
    %v2943 = vunpack.c.h.b16 %v2874
    %v2944 = vunpack.c.l.b16 %v2875
    %v2945 = vunpack.c.h.b16 %v2875
    %v2946 = vunpack.c.l.b16 %v2876
    %v2947 = vunpack.c.h.b16 %v2876
    %v2948 = vunpack.c.l.b16 %v2877
    %v2949 = vunpack.c.h.b16 %v2877
    %v2950 = vunpack.c.l.b16 %v2878
    %v2951 = vunpack.c.h.b16 %v2878
    %v2952 = vunpack.c.l.b16 %v2879
    %v2953 = vunpack.c.h.b16 %v2879
    %v2954 = vunpack.c.l.b16 %v2880
    %v2955 = vunpack.c.h.b16 %v2880
    %v2956 = vunpack.c.l.b16 %v2881
    %v2957 = vunpack.c.h.b16 %v2881
    %v2958 = vunpack.c.l.b16 %v2882
    %v2959 = vunpack.c.h.b16 %v2882
    %v2960 = vunpack.c.l.b16 %v2883
    %v2961 = vunpack.c.h.b16 %v2883
    %v2962 = vunpack.c.l.b16 %v2884
    %v2963 = vunpack.c.h.b16 %v2884
    %v2964 = vunpack.c.l.b16 %v2885
    %v2965 = vunpack.c.h.b16 %v2885
    %v2966 = vunpack.c.l.b16 %v2886
    %v2967 = vunpack.c.h.b16 %v2886
    %v2968 = vunpack.c.l.b16 %v2887
    %v2969 = vunpack.c.h.b16 %v2887
    %v2970 = vunpack.c.l.b16 %v2888
    %v2971 = vunpack.c.h.b16 %v2888
    %v2972 = vunpack.c.l.b16 %v2889
    %v2973 = vunpack.c.h.b16 %v2889
    %v2974 = vunpack.c.l.b16 %v2890
    %v2975 = vunpack.c.h.b16 %v2890
    %v2976 = vunpack.c.l.b16 %v2891
    %v2977 = vunpack.c.h.b16 %v2891
    %v2978 = vunpack.c.l.b16 %v2892
    %v2979 = vunpack.c.h.b16 %v2892
    %v2980 = vunpack.c.l.b16 %v2893
    %v2981 = vunpack.c.h.b16 %v2893
    %v2982 = vunpack.c.l.b16 %v2894
    %v2983 = vunpack.c.h.b16 %v2894
    %v2984 = vunpack.c.l.b16 %v2895
    %v2985 = vunpack.c.h.b16 %v2895
    %v2986 = vunpack.c.l.b16 %v2896
    %v2987 = vunpack.c.h.b16 %v2896
    %v2988 = vunpack.c.l.b16 %v2897
    %v2989 = vunpack.c.h.b16 %v2897
    %v2990 = vunpack.c.l.b16 %v2898
    %v2991 = vunpack.c.h.b16 %v2898
    %v2992 = vunpack.c.l.b16 %v2899
    %v2993 = vunpack.c.h.b16 %v2899
    %v2994 = vunpack.c.l.b16 %v2900
    %v2995 = vunpack.c.h.b16 %v2900
    %v2996 = vunpack.c.l.b16 %v2901
    %v2997 = vunpack.c.h.b16 %v2901
    %v2998 = vunpack.c.l.b16 %v2902
    %v2999 = vunpack.c.h.b16 %v2902
    %v3000 = vpack.c.b16 %v2944, %v2936
    %v3001 = vpack.c.b16 %v2945, %v2937
    %v3002 = vpack.c.b16 %v2946, %v2938
    %v3003 = vpack.c.b16 %v2947, %v2939
    %v3004 = vpack.c.b16 %v2948, %v2940
    %v3005 = vpack.c.b16 %v2949, %v2941
    %v3006 = vpack.c.b16 %v2950, %v2942
    %v3007 = vpack.c.b16 %v2951, %v2943
    %v3008 = vpack.c.b16 %v2960, %v2952
    %v3009 = vpack.c.b16 %v2961, %v2953
    %v3010 = vpack.c.b16 %v2962, %v2954
    %v3011 = vpack.c.b16 %v2963, %v2955
    %v3012 = vpack.c.b16 %v2964, %v2956
    %v3013 = vpack.c.b16 %v2965, %v2957
    %v3014 = vpack.c.b16 %v2966, %v2958
    %v3015 = vpack.c.b16 %v2967, %v2959
    %v3016 = vpack.c.b16 %v2976, %v2968
    %v3017 = vpack.c.b16 %v2977, %v2969
    %v3018 = vpack.c.b16 %v2978, %v2970
    %v3019 = vpack.c.b16 %v2979, %v2971
    %v3020 = vpack.c.b16 %v2980, %v2972
    %v3021 = vpack.c.b16 %v2981, %v2973
    %v3022 = vpack.c.b16 %v2982, %v2974
    %v3023 = vpack.c.b16 %v2983, %v2975
    %v3024 = vpack.c.b16 %v2992, %v2984
    %v3025 = vpack.c.b16 %v2993, %v2985
    %v3026 = vpack.c.b16 %v2994, %v2986
    %v3027 = vpack.c.b16 %v2995, %v2987
    %v3028 = vpack.c.b16 %v2996, %v2988
    %v3029 = vpack.c.b16 %v2997, %v2989
    %v3030 = vpack.c.b16 %v2998, %v2990
    %v3031 = vpack.c.b16 %v2999, %v2991
    %v3065 = vsel %vm325, %v2903, 0
    %3067 = vmatpush.bf16.msra.mxu0 0
    %3068 = vmatpush.bf16.msra.mxu0 0
    %3069 = vmatpush.bf16.msra.mxu0 0
    %3070 = vmatpush.bf16.msra.mxu0 0
    %3071 = vmatpush.bf16.msra.mxu0 %v3024
    %3072 = vmatpush.bf16.msra.mxu0 %v3016
    %3073 = vmatpush.bf16.msra.mxu0 %v3008
    %3074 = vmatpush.bf16.msra.mxu0 %v3000
    %3075 = vmatmul.bf16.gmra.mxu0 %v3065
    %v3076 = vpop.f32.mrf.mxu0
    %v3077 = vadd.f32 0.0, %v3076
    %v3078 = vpop.f32.mrf.mxu0
    %3079 = vdwg.mxu0
    %3080 = vmatpush.bf16.msra.mxu0 0
    %3081 = vmatpush.bf16.msra.mxu0 0
    %3082 = vmatpush.bf16.msra.mxu0 0
    %3083 = vmatpush.bf16.msra.mxu0 0
    %3084 = vmatpush.bf16.msra.mxu0 %v3025
    %3085 = vmatpush.bf16.msra.mxu0 %v3017
    %3086 = vmatpush.bf16.msra.mxu0 %v3009
    %3087 = vmatpush.bf16.msra.mxu0 %v3001
    %3088 = vmatmul.bf16.gmra.mxu0 %v3065
    %v3089 = vpop.f32.mrf.mxu0
    %v3090 = vadd.f32 0.0, %v3089
    %v3091 = vpop.f32.mrf.mxu0
    %3092 = vdwg.mxu0
    %3093 = vmatpush.bf16.msra.mxu0 0
    %3094 = vmatpush.bf16.msra.mxu0 0
    %3095 = vmatpush.bf16.msra.mxu0 0
    %3096 = vmatpush.bf16.msra.mxu0 0
    %3097 = vmatpush.bf16.msra.mxu0 %v3026
    %3098 = vmatpush.bf16.msra.mxu0 %v3018
    %3099 = vmatpush.bf16.msra.mxu0 %v3010
    %3100 = vmatpush.bf16.msra.mxu0 %v3002
    %3101 = vmatmul.bf16.gmra.mxu0 %v3065
    %v3102 = vpop.f32.mrf.mxu0
    %v3103 = vadd.f32 0.0, %v3102
    %v3104 = vpop.f32.mrf.mxu0
    %3105 = vdwg.mxu0
    %3106 = vmatpush.bf16.msra.mxu0 0
    %3107 = vmatpush.bf16.msra.mxu0 0
    %3108 = vmatpush.bf16.msra.mxu0 0
    %3109 = vmatpush.bf16.msra.mxu0 0
    %3110 = vmatpush.bf16.msra.mxu0 %v3027
    %3111 = vmatpush.bf16.msra.mxu0 %v3019
    %3112 = vmatpush.bf16.msra.mxu0 %v3011
    %3113 = vmatpush.bf16.msra.mxu0 %v3003
    %3114 = vmatmul.bf16.gmra.mxu0 %v3065
    %v3115 = vpop.f32.mrf.mxu0
    %v3116 = vadd.f32 0.0, %v3115
    %v3117 = vpop.f32.mrf.mxu0
    %3118 = vdwg.mxu0
    %3119 = vmatpush.bf16.msra.mxu0 0
    %3120 = vmatpush.bf16.msra.mxu0 0
    %3121 = vmatpush.bf16.msra.mxu0 0
    %3122 = vmatpush.bf16.msra.mxu0 0
    %3123 = vmatpush.bf16.msra.mxu0 %v3028
    %3124 = vmatpush.bf16.msra.mxu0 %v3020
    %3125 = vmatpush.bf16.msra.mxu0 %v3012
    %3126 = vmatpush.bf16.msra.mxu0 %v3004
    %3127 = vmatmul.bf16.gmra.mxu0 %v3065
    %v3128 = vpop.f32.mrf.mxu0
    %v3129 = vadd.f32 0.0, %v3128
    %v3130 = vpop.f32.mrf.mxu0
    %3131 = vdwg.mxu0
    %3132 = vmatpush.bf16.msra.mxu0 0
    %3133 = vmatpush.bf16.msra.mxu0 0
    %3134 = vmatpush.bf16.msra.mxu0 0
    %3135 = vmatpush.bf16.msra.mxu0 0
    %3136 = vmatpush.bf16.msra.mxu0 %v3029
    %3137 = vmatpush.bf16.msra.mxu0 %v3021
    %3138 = vmatpush.bf16.msra.mxu0 %v3013
    %3139 = vmatpush.bf16.msra.mxu0 %v3005
    %3140 = vmatmul.bf16.gmra.mxu0 %v3065
    %v3141 = vpop.f32.mrf.mxu0
    %v3142 = vadd.f32 0.0, %v3141
    %v3143 = vpop.f32.mrf.mxu0
    %3144 = vdwg.mxu0
    %3145 = vmatpush.bf16.msra.mxu0 0
    %3146 = vmatpush.bf16.msra.mxu0 0
    %3147 = vmatpush.bf16.msra.mxu0 0
    %3148 = vmatpush.bf16.msra.mxu0 0
    %3149 = vmatpush.bf16.msra.mxu0 %v3030
    %3150 = vmatpush.bf16.msra.mxu0 %v3022
    %3151 = vmatpush.bf16.msra.mxu0 %v3014
    %3152 = vmatpush.bf16.msra.mxu0 %v3006
    %3153 = vmatmul.bf16.gmra.mxu0 %v3065
    %v3154 = vpop.f32.mrf.mxu0
    %v3155 = vadd.f32 0.0, %v3154
    %v3156 = vpop.f32.mrf.mxu0
    %3157 = vdwg.mxu0
    %3158 = vmatpush.bf16.msra.mxu0 0
    %3159 = vmatpush.bf16.msra.mxu0 0
    %3160 = vmatpush.bf16.msra.mxu0 0
    %3161 = vmatpush.bf16.msra.mxu0 0
    %3162 = vmatpush.bf16.msra.mxu0 %v3031
    %3163 = vmatpush.bf16.msra.mxu0 %v3023
    %3164 = vmatpush.bf16.msra.mxu0 %v3015
    %3165 = vmatpush.bf16.msra.mxu0 %v3007
    %3166 = vmatmul.bf16.gmra.mxu0 %v3065
    %v3167 = vpop.f32.mrf.mxu0
    %v3168 = vadd.f32 0.0, %v3167
    %v3169 = vpop.f32.mrf.mxu0
    %3170 = vdwg.mxu0
    %v3171 = vadd.f32 %v2863, %v3077
    %v3172 = vadd.f32 %v2864, %v3090
    %v3173 = vadd.f32 %v2865, %v3103
    %v3174 = vadd.f32 %v2866, %v3116
    %v3175 = vadd.f32 %v2867, %v3129
    %v3176 = vadd.f32 %v2868, %v3142
    %v3177 = vadd.f32 %v2869, %v3155
    %v3178 = vadd.f32 %v2870, %v3168
    %v3179 = vld [vmem:[#allocation2 + $0x700] sm:$0xff]
    %v3180 = vld [vmem:[#allocation2 + $0x708] sm:$0xff]
    %v3181 = vld [vmem:[#allocation2 + $0x710] sm:$0xff]
    %v3182 = vld [vmem:[#allocation2 + $0x718] sm:$0xff]
    %v3183 = vld [vmem:[#allocation2 + $0x720] sm:$0xff]
    %v3184 = vld [vmem:[#allocation2 + $0x728] sm:$0xff]
    %v3185 = vld [vmem:[#allocation2 + $0x730] sm:$0xff]
    %v3186 = vld [vmem:[#allocation2 + $0x738] sm:$0xff]
    %v3187 = vld [vmem:[#allocation2 + $0x740] sm:$0xff]
    %v3188 = vld [vmem:[#allocation2 + $0x748] sm:$0xff]
    %v3189 = vld [vmem:[#allocation2 + $0x750] sm:$0xff]
    %v3190 = vld [vmem:[#allocation2 + $0x758] sm:$0xff]
    %v3191 = vld [vmem:[#allocation2 + $0x760] sm:$0xff]
    %v3192 = vld [vmem:[#allocation2 + $0x768] sm:$0xff]
    %v3193 = vld [vmem:[#allocation2 + $0x770] sm:$0xff]
    %v3194 = vld [vmem:[#allocation2 + $0x778] sm:$0xff]
    %v3195 = vld [vmem:[#allocation2 + $0x780] sm:$0xff]
    %v3196 = vld [vmem:[#allocation2 + $0x788] sm:$0xff]
    %v3197 = vld [vmem:[#allocation2 + $0x790] sm:$0xff]
    %v3198 = vld [vmem:[#allocation2 + $0x798] sm:$0xff]
    %v3199 = vld [vmem:[#allocation2 + $0x7a0] sm:$0xff]
    %v3200 = vld [vmem:[#allocation2 + $0x7a8] sm:$0xff]
    %v3201 = vld [vmem:[#allocation2 + $0x7b0] sm:$0xff]
    %v3202 = vld [vmem:[#allocation2 + $0x7b8] sm:$0xff]
    %v3203 = vld [vmem:[#allocation2 + $0x7c0] sm:$0xff]
    %v3204 = vld [vmem:[#allocation2 + $0x7c8] sm:$0xff]
    %v3205 = vld [vmem:[#allocation2 + $0x7d0] sm:$0xff]
    %v3206 = vld [vmem:[#allocation2 + $0x7d8] sm:$0xff]
    %v3207 = vld [vmem:[#allocation2 + $0x7e0] sm:$0xff]
    %v3208 = vld [vmem:[#allocation2 + $0x7e8] sm:$0xff]
    %v3209 = vld [vmem:[#allocation2 + $0x7f0] sm:$0xff]
    %v3210 = vld [vmem:[#allocation2 + $0x7f8] sm:$0xff]
    %v3211 = vrot.slane %v2254, 3
    %v3244 = vunpack.c.l.b16 %v3179
    %v3245 = vunpack.c.h.b16 %v3179
    %v3246 = vunpack.c.l.b16 %v3180
    %v3247 = vunpack.c.h.b16 %v3180
    %v3248 = vunpack.c.l.b16 %v3181
    %v3249 = vunpack.c.h.b16 %v3181
    %v3250 = vunpack.c.l.b16 %v3182
    %v3251 = vunpack.c.h.b16 %v3182
    %v3252 = vunpack.c.l.b16 %v3183
    %v3253 = vunpack.c.h.b16 %v3183
    %v3254 = vunpack.c.l.b16 %v3184
    %v3255 = vunpack.c.h.b16 %v3184
    %v3256 = vunpack.c.l.b16 %v3185
    %v3257 = vunpack.c.h.b16 %v3185
    %v3258 = vunpack.c.l.b16 %v3186
    %v3259 = vunpack.c.h.b16 %v3186
    %v3260 = vunpack.c.l.b16 %v3187
    %v3261 = vunpack.c.h.b16 %v3187
    %v3262 = vunpack.c.l.b16 %v3188
    %v3263 = vunpack.c.h.b16 %v3188
    %v3264 = vunpack.c.l.b16 %v3189
    %v3265 = vunpack.c.h.b16 %v3189
    %v3266 = vunpack.c.l.b16 %v3190
    %v3267 = vunpack.c.h.b16 %v3190
    %v3268 = vunpack.c.l.b16 %v3191
    %v3269 = vunpack.c.h.b16 %v3191
    %v3270 = vunpack.c.l.b16 %v3192
    %v3271 = vunpack.c.h.b16 %v3192
    %v3272 = vunpack.c.l.b16 %v3193
    %v3273 = vunpack.c.h.b16 %v3193
    %v3274 = vunpack.c.l.b16 %v3194
    %v3275 = vunpack.c.h.b16 %v3194
    %v3276 = vunpack.c.l.b16 %v3195
    %v3277 = vunpack.c.h.b16 %v3195
    %v3278 = vunpack.c.l.b16 %v3196
    %v3279 = vunpack.c.h.b16 %v3196
    %v3280 = vunpack.c.l.b16 %v3197
    %v3281 = vunpack.c.h.b16 %v3197
    %v3282 = vunpack.c.l.b16 %v3198
    %v3283 = vunpack.c.h.b16 %v3198
    %v3284 = vunpack.c.l.b16 %v3199
    %v3285 = vunpack.c.h.b16 %v3199
    %v3286 = vunpack.c.l.b16 %v3200
    %v3287 = vunpack.c.h.b16 %v3200
    %v3288 = vunpack.c.l.b16 %v3201
    %v3289 = vunpack.c.h.b16 %v3201
    %v3290 = vunpack.c.l.b16 %v3202
    %v3291 = vunpack.c.h.b16 %v3202
    %v3292 = vunpack.c.l.b16 %v3203
    %v3293 = vunpack.c.h.b16 %v3203
    %v3294 = vunpack.c.l.b16 %v3204
    %v3295 = vunpack.c.h.b16 %v3204
    %v3296 = vunpack.c.l.b16 %v3205
    %v3297 = vunpack.c.h.b16 %v3205
    %v3298 = vunpack.c.l.b16 %v3206
    %v3299 = vunpack.c.h.b16 %v3206
    %v3300 = vunpack.c.l.b16 %v3207
    %v3301 = vunpack.c.h.b16 %v3207
    %v3302 = vunpack.c.l.b16 %v3208
    %v3303 = vunpack.c.h.b16 %v3208
    %v3304 = vunpack.c.l.b16 %v3209
    %v3305 = vunpack.c.h.b16 %v3209
    %v3306 = vunpack.c.l.b16 %v3210
    %v3307 = vunpack.c.h.b16 %v3210
    %v3308 = vpack.c.b16 %v3252, %v3244
    %v3309 = vpack.c.b16 %v3253, %v3245
    %v3310 = vpack.c.b16 %v3254, %v3246
    %v3311 = vpack.c.b16 %v3255, %v3247
    %v3312 = vpack.c.b16 %v3256, %v3248
    %v3313 = vpack.c.b16 %v3257, %v3249
    %v3314 = vpack.c.b16 %v3258, %v3250
    %v3315 = vpack.c.b16 %v3259, %v3251
    %v3316 = vpack.c.b16 %v3268, %v3260
    %v3317 = vpack.c.b16 %v3269, %v3261
    %v3318 = vpack.c.b16 %v3270, %v3262
    %v3319 = vpack.c.b16 %v3271, %v3263
    %v3320 = vpack.c.b16 %v3272, %v3264
    %v3321 = vpack.c.b16 %v3273, %v3265
    %v3322 = vpack.c.b16 %v3274, %v3266
    %v3323 = vpack.c.b16 %v3275, %v3267
    %v3324 = vpack.c.b16 %v3284, %v3276
    %v3325 = vpack.c.b16 %v3285, %v3277
    %v3326 = vpack.c.b16 %v3286, %v3278
    %v3327 = vpack.c.b16 %v3287, %v3279
    %v3328 = vpack.c.b16 %v3288, %v3280
    %v3329 = vpack.c.b16 %v3289, %v3281
    %v3330 = vpack.c.b16 %v3290, %v3282
    %v3331 = vpack.c.b16 %v3291, %v3283
    %v3332 = vpack.c.b16 %v3300, %v3292
    %v3333 = vpack.c.b16 %v3301, %v3293
    %v3334 = vpack.c.b16 %v3302, %v3294
    %v3335 = vpack.c.b16 %v3303, %v3295
    %v3336 = vpack.c.b16 %v3304, %v3296
    %v3337 = vpack.c.b16 %v3305, %v3297
    %v3338 = vpack.c.b16 %v3306, %v3298
    %v3339 = vpack.c.b16 %v3307, %v3299
    %v3373 = vsel %vm325, %v3211, 0
    %3375 = vmatpush.bf16.msra.mxu0 0
    %3376 = vmatpush.bf16.msra.mxu0 0
    %3377 = vmatpush.bf16.msra.mxu0 0
    %3378 = vmatpush.bf16.msra.mxu0 0
    %3379 = vmatpush.bf16.msra.mxu0 %v3332
    %3380 = vmatpush.bf16.msra.mxu0 %v3324
    %3381 = vmatpush.bf16.msra.mxu0 %v3316
    %3382 = vmatpush.bf16.msra.mxu0 %v3308
    %3383 = vmatmul.bf16.gmra.mxu0 %v3373
    %v3384 = vpop.f32.mrf.mxu0
    %v3385 = vadd.f32 0.0, %v3384
    %v3386 = vpop.f32.mrf.mxu0
    %3387 = vdwg.mxu0
    %3388 = vmatpush.bf16.msra.mxu0 0
    %3389 = vmatpush.bf16.msra.mxu0 0
    %3390 = vmatpush.bf16.msra.mxu0 0
    %3391 = vmatpush.bf16.msra.mxu0 0
    %3392 = vmatpush.bf16.msra.mxu0 %v3333
    %3393 = vmatpush.bf16.msra.mxu0 %v3325
    %3394 = vmatpush.bf16.msra.mxu0 %v3317
    %3395 = vmatpush.bf16.msra.mxu0 %v3309
    %3396 = vmatmul.bf16.gmra.mxu0 %v3373
    %v3397 = vpop.f32.mrf.mxu0
    %v3398 = vadd.f32 0.0, %v3397
    %v3399 = vpop.f32.mrf.mxu0
    %3400 = vdwg.mxu0
    %3401 = vmatpush.bf16.msra.mxu0 0
    %3402 = vmatpush.bf16.msra.mxu0 0
    %3403 = vmatpush.bf16.msra.mxu0 0
    %3404 = vmatpush.bf16.msra.mxu0 0
    %3405 = vmatpush.bf16.msra.mxu0 %v3334
    %3406 = vmatpush.bf16.msra.mxu0 %v3326
    %3407 = vmatpush.bf16.msra.mxu0 %v3318
    %3408 = vmatpush.bf16.msra.mxu0 %v3310
    %3409 = vmatmul.bf16.gmra.mxu0 %v3373
    %v3410 = vpop.f32.mrf.mxu0
    %v3411 = vadd.f32 0.0, %v3410
    %v3412 = vpop.f32.mrf.mxu0
    %3413 = vdwg.mxu0
    %3414 = vmatpush.bf16.msra.mxu0 0
    %3415 = vmatpush.bf16.msra.mxu0 0
    %3416 = vmatpush.bf16.msra.mxu0 0
    %3417 = vmatpush.bf16.msra.mxu0 0
    %3418 = vmatpush.bf16.msra.mxu0 %v3335
    %3419 = vmatpush.bf16.msra.mxu0 %v3327
    %3420 = vmatpush.bf16.msra.mxu0 %v3319
    %3421 = vmatpush.bf16.msra.mxu0 %v3311
    %3422 = vmatmul.bf16.gmra.mxu0 %v3373
    %v3423 = vpop.f32.mrf.mxu0
    %v3424 = vadd.f32 0.0, %v3423
    %v3425 = vpop.f32.mrf.mxu0
    %3426 = vdwg.mxu0
    %3427 = vmatpush.bf16.msra.mxu0 0
    %3428 = vmatpush.bf16.msra.mxu0 0
    %3429 = vmatpush.bf16.msra.mxu0 0
    %3430 = vmatpush.bf16.msra.mxu0 0
    %3431 = vmatpush.bf16.msra.mxu0 %v3336
    %3432 = vmatpush.bf16.msra.mxu0 %v3328
    %3433 = vmatpush.bf16.msra.mxu0 %v3320
    %3434 = vmatpush.bf16.msra.mxu0 %v3312
    %3435 = vmatmul.bf16.gmra.mxu0 %v3373
    %v3436 = vpop.f32.mrf.mxu0
    %v3437 = vadd.f32 0.0, %v3436
    %v3438 = vpop.f32.mrf.mxu0
    %3439 = vdwg.mxu0
    %3440 = vmatpush.bf16.msra.mxu0 0
    %3441 = vmatpush.bf16.msra.mxu0 0
    %3442 = vmatpush.bf16.msra.mxu0 0
    %3443 = vmatpush.bf16.msra.mxu0 0
    %3444 = vmatpush.bf16.msra.mxu0 %v3337
    %3445 = vmatpush.bf16.msra.mxu0 %v3329
    %3446 = vmatpush.bf16.msra.mxu0 %v3321
    %3447 = vmatpush.bf16.msra.mxu0 %v3313
    %3448 = vmatmul.bf16.gmra.mxu0 %v3373
    %v3449 = vpop.f32.mrf.mxu0
    %v3450 = vadd.f32 0.0, %v3449
    %v3451 = vpop.f32.mrf.mxu0
    %3452 = vdwg.mxu0
    %3453 = vmatpush.bf16.msra.mxu0 0
    %3454 = vmatpush.bf16.msra.mxu0 0
    %3455 = vmatpush.bf16.msra.mxu0 0
    %3456 = vmatpush.bf16.msra.mxu0 0
    %3457 = vmatpush.bf16.msra.mxu0 %v3338
    %3458 = vmatpush.bf16.msra.mxu0 %v3330
    %3459 = vmatpush.bf16.msra.mxu0 %v3322
    %3460 = vmatpush.bf16.msra.mxu0 %v3314
    %3461 = vmatmul.bf16.gmra.mxu0 %v3373
    %v3462 = vpop.f32.mrf.mxu0
    %v3463 = vadd.f32 0.0, %v3462
    %v3464 = vpop.f32.mrf.mxu0
    %3465 = vdwg.mxu0
    %3466 = vmatpush.bf16.msra.mxu0 0
    %3467 = vmatpush.bf16.msra.mxu0 0
    %3468 = vmatpush.bf16.msra.mxu0 0
    %3469 = vmatpush.bf16.msra.mxu0 0
    %3470 = vmatpush.bf16.msra.mxu0 %v3339
    %3471 = vmatpush.bf16.msra.mxu0 %v3331
    %3472 = vmatpush.bf16.msra.mxu0 %v3323
    %3473 = vmatpush.bf16.msra.mxu0 %v3315
    %3474 = vmatmul.bf16.gmra.mxu0 %v3373
    %v3475 = vpop.f32.mrf.mxu0
    %v3476 = vadd.f32 0.0, %v3475
    %v3477 = vpop.f32.mrf.mxu0
    %3478 = vdwg.mxu0
    %v3479 = vadd.f32 %v3171, %v3385
    %v3480 = vadd.f32 %v3172, %v3398
    %v3481 = vadd.f32 %v3173, %v3411
    %v3482 = vadd.f32 %v3174, %v3424
    %v3483 = vadd.f32 %v3175, %v3437
    %v3484 = vadd.f32 %v3176, %v3450
    %v3485 = vadd.f32 %v3177, %v3463
    %v3486 = vadd.f32 %v3178, %v3476
    %v3487 = vpack.c.bf16 %v1031, %v1031
    %v3488 = vld [vmem:[#allocation2 + $0x800] sm:$0xff]
    %v3489 = vld [vmem:[#allocation2 + $0x808] sm:$0xff]
    %v3490 = vld [vmem:[#allocation2 + $0x810] sm:$0xff]
    %v3491 = vld [vmem:[#allocation2 + $0x818] sm:$0xff]
    %v3492 = vld [vmem:[#allocation2 + $0x820] sm:$0xff]
    %v3493 = vld [vmem:[#allocation2 + $0x828] sm:$0xff]
    %v3494 = vld [vmem:[#allocation2 + $0x830] sm:$0xff]
    %v3495 = vld [vmem:[#allocation2 + $0x838] sm:$0xff]
    %v3496 = vld [vmem:[#allocation2 + $0x840] sm:$0xff]
    %v3497 = vld [vmem:[#allocation2 + $0x848] sm:$0xff]
    %v3498 = vld [vmem:[#allocation2 + $0x850] sm:$0xff]
    %v3499 = vld [vmem:[#allocation2 + $0x858] sm:$0xff]
    %v3500 = vld [vmem:[#allocation2 + $0x860] sm:$0xff]
    %v3501 = vld [vmem:[#allocation2 + $0x868] sm:$0xff]
    %v3502 = vld [vmem:[#allocation2 + $0x870] sm:$0xff]
    %v3503 = vld [vmem:[#allocation2 + $0x878] sm:$0xff]
    %v3504 = vld [vmem:[#allocation2 + $0x880] sm:$0xff]
    %v3505 = vld [vmem:[#allocation2 + $0x888] sm:$0xff]
    %v3506 = vld [vmem:[#allocation2 + $0x890] sm:$0xff]
    %v3507 = vld [vmem:[#allocation2 + $0x898] sm:$0xff]
    %v3508 = vld [vmem:[#allocation2 + $0x8a0] sm:$0xff]
    %v3509 = vld [vmem:[#allocation2 + $0x8a8] sm:$0xff]
    %v3510 = vld [vmem:[#allocation2 + $0x8b0] sm:$0xff]
    %v3511 = vld [vmem:[#allocation2 + $0x8b8] sm:$0xff]
    %v3512 = vld [vmem:[#allocation2 + $0x8c0] sm:$0xff]
    %v3513 = vld [vmem:[#allocation2 + $0x8c8] sm:$0xff]
    %v3514 = vld [vmem:[#allocation2 + $0x8d0] sm:$0xff]
    %v3515 = vld [vmem:[#allocation2 + $0x8d8] sm:$0xff]
    %v3516 = vld [vmem:[#allocation2 + $0x8e0] sm:$0xff]
    %v3517 = vld [vmem:[#allocation2 + $0x8e8] sm:$0xff]
    %v3518 = vld [vmem:[#allocation2 + $0x8f0] sm:$0xff]
    %v3519 = vld [vmem:[#allocation2 + $0x8f8] sm:$0xff]
    %v3552 = vunpack.c.l.b16 %v3488
    %v3553 = vunpack.c.h.b16 %v3488
    %v3554 = vunpack.c.l.b16 %v3489
    %v3555 = vunpack.c.h.b16 %v3489
    %v3556 = vunpack.c.l.b16 %v3490
    %v3557 = vunpack.c.h.b16 %v3490
    %v3558 = vunpack.c.l.b16 %v3491
    %v3559 = vunpack.c.h.b16 %v3491
    %v3560 = vunpack.c.l.b16 %v3492
    %v3561 = vunpack.c.h.b16 %v3492
    %v3562 = vunpack.c.l.b16 %v3493
    %v3563 = vunpack.c.h.b16 %v3493
    %v3564 = vunpack.c.l.b16 %v3494
    %v3565 = vunpack.c.h.b16 %v3494
    %v3566 = vunpack.c.l.b16 %v3495
    %v3567 = vunpack.c.h.b16 %v3495
    %v3568 = vunpack.c.l.b16 %v3496
    %v3569 = vunpack.c.h.b16 %v3496
    %v3570 = vunpack.c.l.b16 %v3497
    %v3571 = vunpack.c.h.b16 %v3497
    %v3572 = vunpack.c.l.b16 %v3498
    %v3573 = vunpack.c.h.b16 %v3498
    %v3574 = vunpack.c.l.b16 %v3499
    %v3575 = vunpack.c.h.b16 %v3499
    %v3576 = vunpack.c.l.b16 %v3500
    %v3577 = vunpack.c.h.b16 %v3500
    %v3578 = vunpack.c.l.b16 %v3501
    %v3579 = vunpack.c.h.b16 %v3501
    %v3580 = vunpack.c.l.b16 %v3502
    %v3581 = vunpack.c.h.b16 %v3502
    %v3582 = vunpack.c.l.b16 %v3503
    %v3583 = vunpack.c.h.b16 %v3503
    %v3584 = vunpack.c.l.b16 %v3504
    %v3585 = vunpack.c.h.b16 %v3504
    %v3586 = vunpack.c.l.b16 %v3505
    %v3587 = vunpack.c.h.b16 %v3505
    %v3588 = vunpack.c.l.b16 %v3506
    %v3589 = vunpack.c.h.b16 %v3506
    %v3590 = vunpack.c.l.b16 %v3507
    %v3591 = vunpack.c.h.b16 %v3507
    %v3592 = vunpack.c.l.b16 %v3508
    %v3593 = vunpack.c.h.b16 %v3508
    %v3594 = vunpack.c.l.b16 %v3509
    %v3595 = vunpack.c.h.b16 %v3509
    %v3596 = vunpack.c.l.b16 %v3510
    %v3597 = vunpack.c.h.b16 %v3510
    %v3598 = vunpack.c.l.b16 %v3511
    %v3599 = vunpack.c.h.b16 %v3511
    %v3600 = vunpack.c.l.b16 %v3512
    %v3601 = vunpack.c.h.b16 %v3512
    %v3602 = vunpack.c.l.b16 %v3513
    %v3603 = vunpack.c.h.b16 %v3513
    %v3604 = vunpack.c.l.b16 %v3514
    %v3605 = vunpack.c.h.b16 %v3514
    %v3606 = vunpack.c.l.b16 %v3515
    %v3607 = vunpack.c.h.b16 %v3515
    %v3608 = vunpack.c.l.b16 %v3516
    %v3609 = vunpack.c.h.b16 %v3516
    %v3610 = vunpack.c.l.b16 %v3517
    %v3611 = vunpack.c.h.b16 %v3517
    %v3612 = vunpack.c.l.b16 %v3518
    %v3613 = vunpack.c.h.b16 %v3518
    %v3614 = vunpack.c.l.b16 %v3519
    %v3615 = vunpack.c.h.b16 %v3519
    %v3616 = vpack.c.b16 %v3560, %v3552
    %v3617 = vpack.c.b16 %v3561, %v3553
    %v3618 = vpack.c.b16 %v3562, %v3554
    %v3619 = vpack.c.b16 %v3563, %v3555
    %v3620 = vpack.c.b16 %v3564, %v3556
    %v3621 = vpack.c.b16 %v3565, %v3557
    %v3622 = vpack.c.b16 %v3566, %v3558
    %v3623 = vpack.c.b16 %v3567, %v3559
    %v3624 = vpack.c.b16 %v3576, %v3568
    %v3625 = vpack.c.b16 %v3577, %v3569
    %v3626 = vpack.c.b16 %v3578, %v3570
    %v3627 = vpack.c.b16 %v3579, %v3571
    %v3628 = vpack.c.b16 %v3580, %v3572
    %v3629 = vpack.c.b16 %v3581, %v3573
    %v3630 = vpack.c.b16 %v3582, %v3574
    %v3631 = vpack.c.b16 %v3583, %v3575
    %v3632 = vpack.c.b16 %v3592, %v3584
    %v3633 = vpack.c.b16 %v3593, %v3585
    %v3634 = vpack.c.b16 %v3594, %v3586
    %v3635 = vpack.c.b16 %v3595, %v3587
    %v3636 = vpack.c.b16 %v3596, %v3588
    %v3637 = vpack.c.b16 %v3597, %v3589
    %v3638 = vpack.c.b16 %v3598, %v3590
    %v3639 = vpack.c.b16 %v3599, %v3591
    %v3640 = vpack.c.b16 %v3608, %v3600
    %v3641 = vpack.c.b16 %v3609, %v3601
    %v3642 = vpack.c.b16 %v3610, %v3602
    %v3643 = vpack.c.b16 %v3611, %v3603
    %v3644 = vpack.c.b16 %v3612, %v3604
    %v3645 = vpack.c.b16 %v3613, %v3605
    %v3646 = vpack.c.b16 %v3614, %v3606
    %v3647 = vpack.c.b16 %v3615, %v3607
    %v3681 = vsel %vm325, %v3487, 0
    %3683 = vmatpush.bf16.msra.mxu0 0
    %3684 = vmatpush.bf16.msra.mxu0 0
    %3685 = vmatpush.bf16.msra.mxu0 0
    %3686 = vmatpush.bf16.msra.mxu0 0
    %3687 = vmatpush.bf16.msra.mxu0 %v3640
    %3688 = vmatpush.bf16.msra.mxu0 %v3632
    %3689 = vmatpush.bf16.msra.mxu0 %v3624
    %3690 = vmatpush.bf16.msra.mxu0 %v3616
    %3691 = vmatmul.bf16.gmra.mxu0 %v3681
    %v3692 = vpop.f32.mrf.mxu0
    %v3693 = vadd.f32 0.0, %v3692
    %v3694 = vpop.f32.mrf.mxu0
    %3695 = vdwg.mxu0
    %3696 = vmatpush.bf16.msra.mxu0 0
    %3697 = vmatpush.bf16.msra.mxu0 0
    %3698 = vmatpush.bf16.msra.mxu0 0
    %3699 = vmatpush.bf16.msra.mxu0 0
    %3700 = vmatpush.bf16.msra.mxu0 %v3641
    %3701 = vmatpush.bf16.msra.mxu0 %v3633
    %3702 = vmatpush.bf16.msra.mxu0 %v3625
    %3703 = vmatpush.bf16.msra.mxu0 %v3617
    %3704 = vmatmul.bf16.gmra.mxu0 %v3681
    %v3705 = vpop.f32.mrf.mxu0
    %v3706 = vadd.f32 0.0, %v3705
    %v3707 = vpop.f32.mrf.mxu0
    %3708 = vdwg.mxu0
    %3709 = vmatpush.bf16.msra.mxu0 0
    %3710 = vmatpush.bf16.msra.mxu0 0
    %3711 = vmatpush.bf16.msra.mxu0 0
    %3712 = vmatpush.bf16.msra.mxu0 0
    %3713 = vmatpush.bf16.msra.mxu0 %v3642
    %3714 = vmatpush.bf16.msra.mxu0 %v3634
    %3715 = vmatpush.bf16.msra.mxu0 %v3626
    %3716 = vmatpush.bf16.msra.mxu0 %v3618
    %3717 = vmatmul.bf16.gmra.mxu0 %v3681
    %v3718 = vpop.f32.mrf.mxu0
    %v3719 = vadd.f32 0.0, %v3718
    %v3720 = vpop.f32.mrf.mxu0
    %3721 = vdwg.mxu0
    %3722 = vmatpush.bf16.msra.mxu0 0
    %3723 = vmatpush.bf16.msra.mxu0 0
    %3724 = vmatpush.bf16.msra.mxu0 0
    %3725 = vmatpush.bf16.msra.mxu0 0
    %3726 = vmatpush.bf16.msra.mxu0 %v3643
    %3727 = vmatpush.bf16.msra.mxu0 %v3635
    %3728 = vmatpush.bf16.msra.mxu0 %v3627
    %3729 = vmatpush.bf16.msra.mxu0 %v3619
    %3730 = vmatmul.bf16.gmra.mxu0 %v3681
    %v3731 = vpop.f32.mrf.mxu0
    %v3732 = vadd.f32 0.0, %v3731
    %v3733 = vpop.f32.mrf.mxu0
    %3734 = vdwg.mxu0
    %3735 = vmatpush.bf16.msra.mxu0 0
    %3736 = vmatpush.bf16.msra.mxu0 0
    %3737 = vmatpush.bf16.msra.mxu0 0
    %3738 = vmatpush.bf16.msra.mxu0 0
    %3739 = vmatpush.bf16.msra.mxu0 %v3644
    %3740 = vmatpush.bf16.msra.mxu0 %v3636
    %3741 = vmatpush.bf16.msra.mxu0 %v3628
    %3742 = vmatpush.bf16.msra.mxu0 %v3620
    %3743 = vmatmul.bf16.gmra.mxu0 %v3681
    %v3744 = vpop.f32.mrf.mxu0
    %v3745 = vadd.f32 0.0, %v3744
    %v3746 = vpop.f32.mrf.mxu0
    %3747 = vdwg.mxu0
    %3748 = vmatpush.bf16.msra.mxu0 0
    %3749 = vmatpush.bf16.msra.mxu0 0
    %3750 = vmatpush.bf16.msra.mxu0 0
    %3751 = vmatpush.bf16.msra.mxu0 0
    %3752 = vmatpush.bf16.msra.mxu0 %v3645
    %3753 = vmatpush.bf16.msra.mxu0 %v3637
    %3754 = vmatpush.bf16.msra.mxu0 %v3629
    %3755 = vmatpush.bf16.msra.mxu0 %v3621
    %3756 = vmatmul.bf16.gmra.mxu0 %v3681
    %v3757 = vpop.f32.mrf.mxu0
    %v3758 = vadd.f32 0.0, %v3757
    %v3759 = vpop.f32.mrf.mxu0
    %3760 = vdwg.mxu0
    %3761 = vmatpush.bf16.msra.mxu0 0
    %3762 = vmatpush.bf16.msra.mxu0 0
    %3763 = vmatpush.bf16.msra.mxu0 0
    %3764 = vmatpush.bf16.msra.mxu0 0
    %3765 = vmatpush.bf16.msra.mxu0 %v3646
    %3766 = vmatpush.bf16.msra.mxu0 %v3638
    %3767 = vmatpush.bf16.msra.mxu0 %v3630
    %3768 = vmatpush.bf16.msra.mxu0 %v3622
    %3769 = vmatmul.bf16.gmra.mxu0 %v3681
    %v3770 = vpop.f32.mrf.mxu0
    %v3771 = vadd.f32 0.0, %v3770
    %v3772 = vpop.f32.mrf.mxu0
    %3773 = vdwg.mxu0
    %3774 = vmatpush.bf16.msra.mxu0 0
    %3775 = vmatpush.bf16.msra.mxu0 0
    %3776 = vmatpush.bf16.msra.mxu0 0
    %3777 = vmatpush.bf16.msra.mxu0 0
    %3778 = vmatpush.bf16.msra.mxu0 %v3647
    %3779 = vmatpush.bf16.msra.mxu0 %v3639
    %3780 = vmatpush.bf16.msra.mxu0 %v3631
    %3781 = vmatpush.bf16.msra.mxu0 %v3623
    %3782 = vmatmul.bf16.gmra.mxu0 %v3681
    %v3783 = vpop.f32.mrf.mxu0
    %v3784 = vadd.f32 0.0, %v3783
    %v3785 = vpop.f32.mrf.mxu0
    %3786 = vdwg.mxu0
    %v3787 = vadd.f32 %v3479, %v3693
    %v3788 = vadd.f32 %v3480, %v3706
    %v3789 = vadd.f32 %v3481, %v3719
    %v3790 = vadd.f32 %v3482, %v3732
    %v3791 = vadd.f32 %v3483, %v3745
    %v3792 = vadd.f32 %v3484, %v3758
    %v3793 = vadd.f32 %v3485, %v3771
    %v3794 = vadd.f32 %v3486, %v3784
    %v3795 = vld [vmem:[#allocation2 + $0x900] sm:$0xff]
    %v3796 = vld [vmem:[#allocation2 + $0x908] sm:$0xff]
    %v3797 = vld [vmem:[#allocation2 + $0x910] sm:$0xff]
    %v3798 = vld [vmem:[#allocation2 + $0x918] sm:$0xff]
    %v3799 = vld [vmem:[#allocation2 + $0x920] sm:$0xff]
    %v3800 = vld [vmem:[#allocation2 + $0x928] sm:$0xff]
    %v3801 = vld [vmem:[#allocation2 + $0x930] sm:$0xff]
    %v3802 = vld [vmem:[#allocation2 + $0x938] sm:$0xff]
    %v3803 = vld [vmem:[#allocation2 + $0x940] sm:$0xff]
    %v3804 = vld [vmem:[#allocation2 + $0x948] sm:$0xff]
    %v3805 = vld [vmem:[#allocation2 + $0x950] sm:$0xff]
    %v3806 = vld [vmem:[#allocation2 + $0x958] sm:$0xff]
    %v3807 = vld [vmem:[#allocation2 + $0x960] sm:$0xff]
    %v3808 = vld [vmem:[#allocation2 + $0x968] sm:$0xff]
    %v3809 = vld [vmem:[#allocation2 + $0x970] sm:$0xff]
    %v3810 = vld [vmem:[#allocation2 + $0x978] sm:$0xff]
    %v3811 = vld [vmem:[#allocation2 + $0x980] sm:$0xff]
    %v3812 = vld [vmem:[#allocation2 + $0x988] sm:$0xff]
    %v3813 = vld [vmem:[#allocation2 + $0x990] sm:$0xff]
    %v3814 = vld [vmem:[#allocation2 + $0x998] sm:$0xff]
    %v3815 = vld [vmem:[#allocation2 + $0x9a0] sm:$0xff]
    %v3816 = vld [vmem:[#allocation2 + $0x9a8] sm:$0xff]
    %v3817 = vld [vmem:[#allocation2 + $0x9b0] sm:$0xff]
    %v3818 = vld [vmem:[#allocation2 + $0x9b8] sm:$0xff]
    %v3819 = vld [vmem:[#allocation2 + $0x9c0] sm:$0xff]
    %v3820 = vld [vmem:[#allocation2 + $0x9c8] sm:$0xff]
    %v3821 = vld [vmem:[#allocation2 + $0x9d0] sm:$0xff]
    %v3822 = vld [vmem:[#allocation2 + $0x9d8] sm:$0xff]
    %v3823 = vld [vmem:[#allocation2 + $0x9e0] sm:$0xff]
    %v3824 = vld [vmem:[#allocation2 + $0x9e8] sm:$0xff]
    %v3825 = vld [vmem:[#allocation2 + $0x9f0] sm:$0xff]
    %v3826 = vld [vmem:[#allocation2 + $0x9f8] sm:$0xff]
    %v3828 = vrot.slane %v3487, 1
    %v3861 = vunpack.c.l.b16 %v3795
    %v3862 = vunpack.c.h.b16 %v3795
    %v3863 = vunpack.c.l.b16 %v3796
    %v3864 = vunpack.c.h.b16 %v3796
    %v3865 = vunpack.c.l.b16 %v3797
    %v3866 = vunpack.c.h.b16 %v3797
    %v3867 = vunpack.c.l.b16 %v3798
    %v3868 = vunpack.c.h.b16 %v3798
    %v3869 = vunpack.c.l.b16 %v3799
    %v3870 = vunpack.c.h.b16 %v3799
    %v3871 = vunpack.c.l.b16 %v3800
    %v3872 = vunpack.c.h.b16 %v3800
    %v3873 = vunpack.c.l.b16 %v3801
    %v3874 = vunpack.c.h.b16 %v3801
    %v3875 = vunpack.c.l.b16 %v3802
    %v3876 = vunpack.c.h.b16 %v3802
    %v3877 = vunpack.c.l.b16 %v3803
    %v3878 = vunpack.c.h.b16 %v3803
    %v3879 = vunpack.c.l.b16 %v3804
    %v3880 = vunpack.c.h.b16 %v3804
    %v3881 = vunpack.c.l.b16 %v3805
    %v3882 = vunpack.c.h.b16 %v3805
    %v3883 = vunpack.c.l.b16 %v3806
    %v3884 = vunpack.c.h.b16 %v3806
    %v3885 = vunpack.c.l.b16 %v3807
    %v3886 = vunpack.c.h.b16 %v3807
    %v3887 = vunpack.c.l.b16 %v3808
    %v3888 = vunpack.c.h.b16 %v3808
    %v3889 = vunpack.c.l.b16 %v3809
    %v3890 = vunpack.c.h.b16 %v3809
    %v3891 = vunpack.c.l.b16 %v3810
    %v3892 = vunpack.c.h.b16 %v3810
    %v3893 = vunpack.c.l.b16 %v3811
    %v3894 = vunpack.c.h.b16 %v3811
    %v3895 = vunpack.c.l.b16 %v3812
    %v3896 = vunpack.c.h.b16 %v3812
    %v3897 = vunpack.c.l.b16 %v3813
    %v3898 = vunpack.c.h.b16 %v3813
    %v3899 = vunpack.c.l.b16 %v3814
    %v3900 = vunpack.c.h.b16 %v3814
    %v3901 = vunpack.c.l.b16 %v3815
    %v3902 = vunpack.c.h.b16 %v3815
    %v3903 = vunpack.c.l.b16 %v3816
    %v3904 = vunpack.c.h.b16 %v3816
    %v3905 = vunpack.c.l.b16 %v3817
    %v3906 = vunpack.c.h.b16 %v3817
    %v3907 = vunpack.c.l.b16 %v3818
    %v3908 = vunpack.c.h.b16 %v3818
    %v3909 = vunpack.c.l.b16 %v3819
    %v3910 = vunpack.c.h.b16 %v3819
    %v3911 = vunpack.c.l.b16 %v3820
    %v3912 = vunpack.c.h.b16 %v3820
    %v3913 = vunpack.c.l.b16 %v3821
    %v3914 = vunpack.c.h.b16 %v3821
    %v3915 = vunpack.c.l.b16 %v3822
    %v3916 = vunpack.c.h.b16 %v3822
    %v3917 = vunpack.c.l.b16 %v3823
    %v3918 = vunpack.c.h.b16 %v3823
    %v3919 = vunpack.c.l.b16 %v3824
    %v3920 = vunpack.c.h.b16 %v3824
    %v3921 = vunpack.c.l.b16 %v3825
    %v3922 = vunpack.c.h.b16 %v3825
    %v3923 = vunpack.c.l.b16 %v3826
    %v3924 = vunpack.c.h.b16 %v3826
    %v3925 = vpack.c.b16 %v3869, %v3861
    %v3926 = vpack.c.b16 %v3870, %v3862
    %v3927 = vpack.c.b16 %v3871, %v3863
    %v3928 = vpack.c.b16 %v3872, %v3864
    %v3929 = vpack.c.b16 %v3873, %v3865
    %v3930 = vpack.c.b16 %v3874, %v3866
    %v3931 = vpack.c.b16 %v3875, %v3867
    %v3932 = vpack.c.b16 %v3876, %v3868
    %v3933 = vpack.c.b16 %v3885, %v3877
    %v3934 = vpack.c.b16 %v3886, %v3878
    %v3935 = vpack.c.b16 %v3887, %v3879
    %v3936 = vpack.c.b16 %v3888, %v3880
    %v3937 = vpack.c.b16 %v3889, %v3881
    %v3938 = vpack.c.b16 %v3890, %v3882
    %v3939 = vpack.c.b16 %v3891, %v3883
    %v3940 = vpack.c.b16 %v3892, %v3884
    %v3941 = vpack.c.b16 %v3901, %v3893
    %v3942 = vpack.c.b16 %v3902, %v3894
    %v3943 = vpack.c.b16 %v3903, %v3895
    %v3944 = vpack.c.b16 %v3904, %v3896
    %v3945 = vpack.c.b16 %v3905, %v3897
    %v3946 = vpack.c.b16 %v3906, %v3898
    %v3947 = vpack.c.b16 %v3907, %v3899
    %v3948 = vpack.c.b16 %v3908, %v3900
    %v3949 = vpack.c.b16 %v3917, %v3909
    %v3950 = vpack.c.b16 %v3918, %v3910
    %v3951 = vpack.c.b16 %v3919, %v3911
    %v3952 = vpack.c.b16 %v3920, %v3912
    %v3953 = vpack.c.b16 %v3921, %v3913
    %v3954 = vpack.c.b16 %v3922, %v3914
    %v3955 = vpack.c.b16 %v3923, %v3915
    %v3956 = vpack.c.b16 %v3924, %v3916
    %v3990 = vsel %vm325, %v3828, 0
    %3992 = vmatpush.bf16.msra.mxu0 0
    %3993 = vmatpush.bf16.msra.mxu0 0
    %3994 = vmatpush.bf16.msra.mxu0 0
    %3995 = vmatpush.bf16.msra.mxu0 0
    %3996 = vmatpush.bf16.msra.mxu0 %v3949
    %3997 = vmatpush.bf16.msra.mxu0 %v3941
    %3998 = vmatpush.bf16.msra.mxu0 %v3933
    %3999 = vmatpush.bf16.msra.mxu0 %v3925
    %4000 = vmatmul.bf16.gmra.mxu0 %v3990
    %v4001 = vpop.f32.mrf.mxu0
    %v4002 = vadd.f32 0.0, %v4001
    %v4003 = vpop.f32.mrf.mxu0
    %4004 = vdwg.mxu0
    %4005 = vmatpush.bf16.msra.mxu0 0
    %4006 = vmatpush.bf16.msra.mxu0 0
    %4007 = vmatpush.bf16.msra.mxu0 0
    %4008 = vmatpush.bf16.msra.mxu0 0
    %4009 = vmatpush.bf16.msra.mxu0 %v3950
    %4010 = vmatpush.bf16.msra.mxu0 %v3942
    %4011 = vmatpush.bf16.msra.mxu0 %v3934
    %4012 = vmatpush.bf16.msra.mxu0 %v3926
    %4013 = vmatmul.bf16.gmra.mxu0 %v3990
    %v4014 = vpop.f32.mrf.mxu0
    %v4015 = vadd.f32 0.0, %v4014
    %v4016 = vpop.f32.mrf.mxu0
    %4017 = vdwg.mxu0
    %4018 = vmatpush.bf16.msra.mxu0 0
    %4019 = vmatpush.bf16.msra.mxu0 0
    %4020 = vmatpush.bf16.msra.mxu0 0
    %4021 = vmatpush.bf16.msra.mxu0 0
    %4022 = vmatpush.bf16.msra.mxu0 %v3951
    %4023 = vmatpush.bf16.msra.mxu0 %v3943
    %4024 = vmatpush.bf16.msra.mxu0 %v3935
    %4025 = vmatpush.bf16.msra.mxu0 %v3927
    %4026 = vmatmul.bf16.gmra.mxu0 %v3990
    %v4027 = vpop.f32.mrf.mxu0
    %v4028 = vadd.f32 0.0, %v4027
    %v4029 = vpop.f32.mrf.mxu0
    %4030 = vdwg.mxu0
    %4031 = vmatpush.bf16.msra.mxu0 0
    %4032 = vmatpush.bf16.msra.mxu0 0
    %4033 = vmatpush.bf16.msra.mxu0 0
    %4034 = vmatpush.bf16.msra.mxu0 0
    %4035 = vmatpush.bf16.msra.mxu0 %v3952
    %4036 = vmatpush.bf16.msra.mxu0 %v3944
    %4037 = vmatpush.bf16.msra.mxu0 %v3936
    %4038 = vmatpush.bf16.msra.mxu0 %v3928
    %4039 = vmatmul.bf16.gmra.mxu0 %v3990
    %v4040 = vpop.f32.mrf.mxu0
    %v4041 = vadd.f32 0.0, %v4040
    %v4042 = vpop.f32.mrf.mxu0
    %4043 = vdwg.mxu0
    %4044 = vmatpush.bf16.msra.mxu0 0
    %4045 = vmatpush.bf16.msra.mxu0 0
    %4046 = vmatpush.bf16.msra.mxu0 0
    %4047 = vmatpush.bf16.msra.mxu0 0
    %4048 = vmatpush.bf16.msra.mxu0 %v3953
    %4049 = vmatpush.bf16.msra.mxu0 %v3945
    %4050 = vmatpush.bf16.msra.mxu0 %v3937
    %4051 = vmatpush.bf16.msra.mxu0 %v3929
    %4052 = vmatmul.bf16.gmra.mxu0 %v3990
    %v4053 = vpop.f32.mrf.mxu0
    %v4054 = vadd.f32 0.0, %v4053
    %v4055 = vpop.f32.mrf.mxu0
    %4056 = vdwg.mxu0
    %4057 = vmatpush.bf16.msra.mxu0 0
    %4058 = vmatpush.bf16.msra.mxu0 0
    %4059 = vmatpush.bf16.msra.mxu0 0
    %4060 = vmatpush.bf16.msra.mxu0 0
    %4061 = vmatpush.bf16.msra.mxu0 %v3954
    %4062 = vmatpush.bf16.msra.mxu0 %v3946
    %4063 = vmatpush.bf16.msra.mxu0 %v3938
    %4064 = vmatpush.bf16.msra.mxu0 %v3930
    %4065 = vmatmul.bf16.gmra.mxu0 %v3990
    %v4066 = vpop.f32.mrf.mxu0
    %v4067 = vadd.f32 0.0, %v4066
    %v4068 = vpop.f32.mrf.mxu0
    %4069 = vdwg.mxu0
    %4070 = vmatpush.bf16.msra.mxu0 0
    %4071 = vmatpush.bf16.msra.mxu0 0
    %4072 = vmatpush.bf16.msra.mxu0 0
    %4073 = vmatpush.bf16.msra.mxu0 0
    %4074 = vmatpush.bf16.msra.mxu0 %v3955
    %4075 = vmatpush.bf16.msra.mxu0 %v3947
    %4076 = vmatpush.bf16.msra.mxu0 %v3939
    %4077 = vmatpush.bf16.msra.mxu0 %v3931
    %4078 = vmatmul.bf16.gmra.mxu0 %v3990
    %v4079 = vpop.f32.mrf.mxu0
    %v4080 = vadd.f32 0.0, %v4079
    %v4081 = vpop.f32.mrf.mxu0
    %4082 = vdwg.mxu0
    %4083 = vmatpush.bf16.msra.mxu0 0
    %4084 = vmatpush.bf16.msra.mxu0 0
    %4085 = vmatpush.bf16.msra.mxu0 0
    %4086 = vmatpush.bf16.msra.mxu0 0
    %4087 = vmatpush.bf16.msra.mxu0 %v3956
    %4088 = vmatpush.bf16.msra.mxu0 %v3948
    %4089 = vmatpush.bf16.msra.mxu0 %v3940
    %4090 = vmatpush.bf16.msra.mxu0 %v3932
    %4091 = vmatmul.bf16.gmra.mxu0 %v3990
    %v4092 = vpop.f32.mrf.mxu0
    %v4093 = vadd.f32 0.0, %v4092
    %v4094 = vpop.f32.mrf.mxu0
    %4095 = vdwg.mxu0
    %v4096 = vadd.f32 %v3787, %v4002
    %v4097 = vadd.f32 %v3788, %v4015
    %v4098 = vadd.f32 %v3789, %v4028
    %v4099 = vadd.f32 %v3790, %v4041
    %v4100 = vadd.f32 %v3791, %v4054
    %v4101 = vadd.f32 %v3792, %v4067
    %v4102 = vadd.f32 %v3793, %v4080
    %v4103 = vadd.f32 %v3794, %v4093
    %v4104 = vld [vmem:[#allocation2 + $0xa00] sm:$0xff]
    %v4105 = vld [vmem:[#allocation2 + $0xa08] sm:$0xff]
    %v4106 = vld [vmem:[#allocation2 + $0xa10] sm:$0xff]
    %v4107 = vld [vmem:[#allocation2 + $0xa18] sm:$0xff]
    %v4108 = vld [vmem:[#allocation2 + $0xa20] sm:$0xff]
    %v4109 = vld [vmem:[#allocation2 + $0xa28] sm:$0xff]
    %v4110 = vld [vmem:[#allocation2 + $0xa30] sm:$0xff]
    %v4111 = vld [vmem:[#allocation2 + $0xa38] sm:$0xff]
    %v4112 = vld [vmem:[#allocation2 + $0xa40] sm:$0xff]
    %v4113 = vld [vmem:[#allocation2 + $0xa48] sm:$0xff]
    %v4114 = vld [vmem:[#allocation2 + $0xa50] sm:$0xff]
    %v4115 = vld [vmem:[#allocation2 + $0xa58] sm:$0xff]
    %v4116 = vld [vmem:[#allocation2 + $0xa60] sm:$0xff]
    %v4117 = vld [vmem:[#allocation2 + $0xa68] sm:$0xff]
    %v4118 = vld [vmem:[#allocation2 + $0xa70] sm:$0xff]
    %v4119 = vld [vmem:[#allocation2 + $0xa78] sm:$0xff]
    %v4120 = vld [vmem:[#allocation2 + $0xa80] sm:$0xff]
    %v4121 = vld [vmem:[#allocation2 + $0xa88] sm:$0xff]
    %v4122 = vld [vmem:[#allocation2 + $0xa90] sm:$0xff]
    %v4123 = vld [vmem:[#allocation2 + $0xa98] sm:$0xff]
    %v4124 = vld [vmem:[#allocation2 + $0xaa0] sm:$0xff]
    %v4125 = vld [vmem:[#allocation2 + $0xaa8] sm:$0xff]
    %v4126 = vld [vmem:[#allocation2 + $0xab0] sm:$0xff]
    %v4127 = vld [vmem:[#allocation2 + $0xab8] sm:$0xff]
    %v4128 = vld [vmem:[#allocation2 + $0xac0] sm:$0xff]
    %v4129 = vld [vmem:[#allocation2 + $0xac8] sm:$0xff]
    %v4130 = vld [vmem:[#allocation2 + $0xad0] sm:$0xff]
    %v4131 = vld [vmem:[#allocation2 + $0xad8] sm:$0xff]
    %v4132 = vld [vmem:[#allocation2 + $0xae0] sm:$0xff]
    %v4133 = vld [vmem:[#allocation2 + $0xae8] sm:$0xff]
    %v4134 = vld [vmem:[#allocation2 + $0xaf0] sm:$0xff]
    %v4135 = vld [vmem:[#allocation2 + $0xaf8] sm:$0xff]
    %v4136 = vrot.slane %v3487, 2
    %v4169 = vunpack.c.l.b16 %v4104
    %v4170 = vunpack.c.h.b16 %v4104
    %v4171 = vunpack.c.l.b16 %v4105
    %v4172 = vunpack.c.h.b16 %v4105
    %v4173 = vunpack.c.l.b16 %v4106
    %v4174 = vunpack.c.h.b16 %v4106
    %v4175 = vunpack.c.l.b16 %v4107
    %v4176 = vunpack.c.h.b16 %v4107
    %v4177 = vunpack.c.l.b16 %v4108
    %v4178 = vunpack.c.h.b16 %v4108
    %v4179 = vunpack.c.l.b16 %v4109
    %v4180 = vunpack.c.h.b16 %v4109
    %v4181 = vunpack.c.l.b16 %v4110
    %v4182 = vunpack.c.h.b16 %v4110
    %v4183 = vunpack.c.l.b16 %v4111
    %v4184 = vunpack.c.h.b16 %v4111
    %v4185 = vunpack.c.l.b16 %v4112
    %v4186 = vunpack.c.h.b16 %v4112
    %v4187 = vunpack.c.l.b16 %v4113
    %v4188 = vunpack.c.h.b16 %v4113
    %v4189 = vunpack.c.l.b16 %v4114
    %v4190 = vunpack.c.h.b16 %v4114
    %v4191 = vunpack.c.l.b16 %v4115
    %v4192 = vunpack.c.h.b16 %v4115
    %v4193 = vunpack.c.l.b16 %v4116
    %v4194 = vunpack.c.h.b16 %v4116
    %v4195 = vunpack.c.l.b16 %v4117
    %v4196 = vunpack.c.h.b16 %v4117
    %v4197 = vunpack.c.l.b16 %v4118
    %v4198 = vunpack.c.h.b16 %v4118
    %v4199 = vunpack.c.l.b16 %v4119
    %v4200 = vunpack.c.h.b16 %v4119
    %v4201 = vunpack.c.l.b16 %v4120
    %v4202 = vunpack.c.h.b16 %v4120
    %v4203 = vunpack.c.l.b16 %v4121
    %v4204 = vunpack.c.h.b16 %v4121
    %v4205 = vunpack.c.l.b16 %v4122
    %v4206 = vunpack.c.h.b16 %v4122
    %v4207 = vunpack.c.l.b16 %v4123
    %v4208 = vunpack.c.h.b16 %v4123
    %v4209 = vunpack.c.l.b16 %v4124
    %v4210 = vunpack.c.h.b16 %v4124
    %v4211 = vunpack.c.l.b16 %v4125
    %v4212 = vunpack.c.h.b16 %v4125
    %v4213 = vunpack.c.l.b16 %v4126
    %v4214 = vunpack.c.h.b16 %v4126
    %v4215 = vunpack.c.l.b16 %v4127
    %v4216 = vunpack.c.h.b16 %v4127
    %v4217 = vunpack.c.l.b16 %v4128
    %v4218 = vunpack.c.h.b16 %v4128
    %v4219 = vunpack.c.l.b16 %v4129
    %v4220 = vunpack.c.h.b16 %v4129
    %v4221 = vunpack.c.l.b16 %v4130
    %v4222 = vunpack.c.h.b16 %v4130
    %v4223 = vunpack.c.l.b16 %v4131
    %v4224 = vunpack.c.h.b16 %v4131
    %v4225 = vunpack.c.l.b16 %v4132
    %v4226 = vunpack.c.h.b16 %v4132
    %v4227 = vunpack.c.l.b16 %v4133
    %v4228 = vunpack.c.h.b16 %v4133
    %v4229 = vunpack.c.l.b16 %v4134
    %v4230 = vunpack.c.h.b16 %v4134
    %v4231 = vunpack.c.l.b16 %v4135
    %v4232 = vunpack.c.h.b16 %v4135
    %v4233 = vpack.c.b16 %v4177, %v4169
    %v4234 = vpack.c.b16 %v4178, %v4170
    %v4235 = vpack.c.b16 %v4179, %v4171
    %v4236 = vpack.c.b16 %v4180, %v4172
    %v4237 = vpack.c.b16 %v4181, %v4173
    %v4238 = vpack.c.b16 %v4182, %v4174
    %v4239 = vpack.c.b16 %v4183, %v4175
    %v4240 = vpack.c.b16 %v4184, %v4176
    %v4241 = vpack.c.b16 %v4193, %v4185
    %v4242 = vpack.c.b16 %v4194, %v4186
    %v4243 = vpack.c.b16 %v4195, %v4187
    %v4244 = vpack.c.b16 %v4196, %v4188
    %v4245 = vpack.c.b16 %v4197, %v4189
    %v4246 = vpack.c.b16 %v4198, %v4190
    %v4247 = vpack.c.b16 %v4199, %v4191
    %v4248 = vpack.c.b16 %v4200, %v4192
    %v4249 = vpack.c.b16 %v4209, %v4201
    %v4250 = vpack.c.b16 %v4210, %v4202
    %v4251 = vpack.c.b16 %v4211, %v4203
    %v4252 = vpack.c.b16 %v4212, %v4204
    %v4253 = vpack.c.b16 %v4213, %v4205
    %v4254 = vpack.c.b16 %v4214, %v4206
    %v4255 = vpack.c.b16 %v4215, %v4207
    %v4256 = vpack.c.b16 %v4216, %v4208
    %v4257 = vpack.c.b16 %v4225, %v4217
    %v4258 = vpack.c.b16 %v4226, %v4218
    %v4259 = vpack.c.b16 %v4227, %v4219
    %v4260 = vpack.c.b16 %v4228, %v4220
    %v4261 = vpack.c.b16 %v4229, %v4221
    %v4262 = vpack.c.b16 %v4230, %v4222
    %v4263 = vpack.c.b16 %v4231, %v4223
    %v4264 = vpack.c.b16 %v4232, %v4224
    %v4298 = vsel %vm325, %v4136, 0
    %4300 = vmatpush.bf16.msra.mxu0 0
    %4301 = vmatpush.bf16.msra.mxu0 0
    %4302 = vmatpush.bf16.msra.mxu0 0
    %4303 = vmatpush.bf16.msra.mxu0 0
    %4304 = vmatpush.bf16.msra.mxu0 %v4257
    %4305 = vmatpush.bf16.msra.mxu0 %v4249
    %4306 = vmatpush.bf16.msra.mxu0 %v4241
    %4307 = vmatpush.bf16.msra.mxu0 %v4233
    %4308 = vmatmul.bf16.gmra.mxu0 %v4298
    %v4309 = vpop.f32.mrf.mxu0
    %v4310 = vadd.f32 0.0, %v4309
    %v4311 = vpop.f32.mrf.mxu0
    %4312 = vdwg.mxu0
    %4313 = vmatpush.bf16.msra.mxu0 0
    %4314 = vmatpush.bf16.msra.mxu0 0
    %4315 = vmatpush.bf16.msra.mxu0 0
    %4316 = vmatpush.bf16.msra.mxu0 0
    %4317 = vmatpush.bf16.msra.mxu0 %v4258
    %4318 = vmatpush.bf16.msra.mxu0 %v4250
    %4319 = vmatpush.bf16.msra.mxu0 %v4242
    %4320 = vmatpush.bf16.msra.mxu0 %v4234
    %4321 = vmatmul.bf16.gmra.mxu0 %v4298
    %v4322 = vpop.f32.mrf.mxu0
    %v4323 = vadd.f32 0.0, %v4322
    %v4324 = vpop.f32.mrf.mxu0
    %4325 = vdwg.mxu0
    %4326 = vmatpush.bf16.msra.mxu0 0
    %4327 = vmatpush.bf16.msra.mxu0 0
    %4328 = vmatpush.bf16.msra.mxu0 0
    %4329 = vmatpush.bf16.msra.mxu0 0
    %4330 = vmatpush.bf16.msra.mxu0 %v4259
    %4331 = vmatpush.bf16.msra.mxu0 %v4251
    %4332 = vmatpush.bf16.msra.mxu0 %v4243
    %4333 = vmatpush.bf16.msra.mxu0 %v4235
    %4334 = vmatmul.bf16.gmra.mxu0 %v4298
    %v4335 = vpop.f32.mrf.mxu0
    %v4336 = vadd.f32 0.0, %v4335
    %v4337 = vpop.f32.mrf.mxu0
    %4338 = vdwg.mxu0
    %4339 = vmatpush.bf16.msra.mxu0 0
    %4340 = vmatpush.bf16.msra.mxu0 0
    %4341 = vmatpush.bf16.msra.mxu0 0
    %4342 = vmatpush.bf16.msra.mxu0 0
    %4343 = vmatpush.bf16.msra.mxu0 %v4260
    %4344 = vmatpush.bf16.msra.mxu0 %v4252
    %4345 = vmatpush.bf16.msra.mxu0 %v4244
    %4346 = vmatpush.bf16.msra.mxu0 %v4236
    %4347 = vmatmul.bf16.gmra.mxu0 %v4298
    %v4348 = vpop.f32.mrf.mxu0
    %v4349 = vadd.f32 0.0, %v4348
    %v4350 = vpop.f32.mrf.mxu0
    %4351 = vdwg.mxu0
    %4352 = vmatpush.bf16.msra.mxu0 0
    %4353 = vmatpush.bf16.msra.mxu0 0
    %4354 = vmatpush.bf16.msra.mxu0 0
    %4355 = vmatpush.bf16.msra.mxu0 0
    %4356 = vmatpush.bf16.msra.mxu0 %v4261
    %4357 = vmatpush.bf16.msra.mxu0 %v4253
    %4358 = vmatpush.bf16.msra.mxu0 %v4245
    %4359 = vmatpush.bf16.msra.mxu0 %v4237
    %4360 = vmatmul.bf16.gmra.mxu0 %v4298
    %v4361 = vpop.f32.mrf.mxu0
    %v4362 = vadd.f32 0.0, %v4361
    %v4363 = vpop.f32.mrf.mxu0
    %4364 = vdwg.mxu0
    %4365 = vmatpush.bf16.msra.mxu0 0
    %4366 = vmatpush.bf16.msra.mxu0 0
    %4367 = vmatpush.bf16.msra.mxu0 0
    %4368 = vmatpush.bf16.msra.mxu0 0
    %4369 = vmatpush.bf16.msra.mxu0 %v4262
    %4370 = vmatpush.bf16.msra.mxu0 %v4254
    %4371 = vmatpush.bf16.msra.mxu0 %v4246
    %4372 = vmatpush.bf16.msra.mxu0 %v4238
    %4373 = vmatmul.bf16.gmra.mxu0 %v4298
    %v4374 = vpop.f32.mrf.mxu0
    %v4375 = vadd.f32 0.0, %v4374
    %v4376 = vpop.f32.mrf.mxu0
    %4377 = vdwg.mxu0
    %4378 = vmatpush.bf16.msra.mxu0 0
    %4379 = vmatpush.bf16.msra.mxu0 0
    %4380 = vmatpush.bf16.msra.mxu0 0
    %4381 = vmatpush.bf16.msra.mxu0 0
    %4382 = vmatpush.bf16.msra.mxu0 %v4263
    %4383 = vmatpush.bf16.msra.mxu0 %v4255
    %4384 = vmatpush.bf16.msra.mxu0 %v4247
    %4385 = vmatpush.bf16.msra.mxu0 %v4239
    %4386 = vmatmul.bf16.gmra.mxu0 %v4298
    %v4387 = vpop.f32.mrf.mxu0
    %v4388 = vadd.f32 0.0, %v4387
    %v4389 = vpop.f32.mrf.mxu0
    %4390 = vdwg.mxu0
    %4391 = vmatpush.bf16.msra.mxu0 0
    %4392 = vmatpush.bf16.msra.mxu0 0
    %4393 = vmatpush.bf16.msra.mxu0 0
    %4394 = vmatpush.bf16.msra.mxu0 0
    %4395 = vmatpush.bf16.msra.mxu0 %v4264
    %4396 = vmatpush.bf16.msra.mxu0 %v4256
    %4397 = vmatpush.bf16.msra.mxu0 %v4248
    %4398 = vmatpush.bf16.msra.mxu0 %v4240
    %4399 = vmatmul.bf16.gmra.mxu0 %v4298
    %v4400 = vpop.f32.mrf.mxu0
    %v4401 = vadd.f32 0.0, %v4400
    %v4402 = vpop.f32.mrf.mxu0
    %4403 = vdwg.mxu0
    %v4404 = vadd.f32 %v4096, %v4310
    %v4405 = vadd.f32 %v4097, %v4323
    %v4406 = vadd.f32 %v4098, %v4336
    %v4407 = vadd.f32 %v4099, %v4349
    %v4408 = vadd.f32 %v4100, %v4362
    %v4409 = vadd.f32 %v4101, %v4375
    %v4410 = vadd.f32 %v4102, %v4388
    %v4411 = vadd.f32 %v4103, %v4401
    %v4412 = vld [vmem:[#allocation2 + $0xb00] sm:$0xff]
    %v4413 = vld [vmem:[#allocation2 + $0xb08] sm:$0xff]
    %v4414 = vld [vmem:[#allocation2 + $0xb10] sm:$0xff]
    %v4415 = vld [vmem:[#allocation2 + $0xb18] sm:$0xff]
    %v4416 = vld [vmem:[#allocation2 + $0xb20] sm:$0xff]
    %v4417 = vld [vmem:[#allocation2 + $0xb28] sm:$0xff]
    %v4418 = vld [vmem:[#allocation2 + $0xb30] sm:$0xff]
    %v4419 = vld [vmem:[#allocation2 + $0xb38] sm:$0xff]
    %v4420 = vld [vmem:[#allocation2 + $0xb40] sm:$0xff]
    %v4421 = vld [vmem:[#allocation2 + $0xb48] sm:$0xff]
    %v4422 = vld [vmem:[#allocation2 + $0xb50] sm:$0xff]
    %v4423 = vld [vmem:[#allocation2 + $0xb58] sm:$0xff]
    %v4424 = vld [vmem:[#allocation2 + $0xb60] sm:$0xff]
    %v4425 = vld [vmem:[#allocation2 + $0xb68] sm:$0xff]
    %v4426 = vld [vmem:[#allocation2 + $0xb70] sm:$0xff]
    %v4427 = vld [vmem:[#allocation2 + $0xb78] sm:$0xff]
    %v4428 = vld [vmem:[#allocation2 + $0xb80] sm:$0xff]
    %v4429 = vld [vmem:[#allocation2 + $0xb88] sm:$0xff]
    %v4430 = vld [vmem:[#allocation2 + $0xb90] sm:$0xff]
    %v4431 = vld [vmem:[#allocation2 + $0xb98] sm:$0xff]
    %v4432 = vld [vmem:[#allocation2 + $0xba0] sm:$0xff]
    %v4433 = vld [vmem:[#allocation2 + $0xba8] sm:$0xff]
    %v4434 = vld [vmem:[#allocation2 + $0xbb0] sm:$0xff]
    %v4435 = vld [vmem:[#allocation2 + $0xbb8] sm:$0xff]
    %v4436 = vld [vmem:[#allocation2 + $0xbc0] sm:$0xff]
    %v4437 = vld [vmem:[#allocation2 + $0xbc8] sm:$0xff]
    %v4438 = vld [vmem:[#allocation2 + $0xbd0] sm:$0xff]
    %v4439 = vld [vmem:[#allocation2 + $0xbd8] sm:$0xff]
    %v4440 = vld [vmem:[#allocation2 + $0xbe0] sm:$0xff]
    %v4441 = vld [vmem:[#allocation2 + $0xbe8] sm:$0xff]
    %v4442 = vld [vmem:[#allocation2 + $0xbf0] sm:$0xff]
    %v4443 = vld [vmem:[#allocation2 + $0xbf8] sm:$0xff]
    %v4444 = vrot.slane %v3487, 3
    %v4477 = vunpack.c.l.b16 %v4412
    %v4478 = vunpack.c.h.b16 %v4412
    %v4479 = vunpack.c.l.b16 %v4413
    %v4480 = vunpack.c.h.b16 %v4413
    %v4481 = vunpack.c.l.b16 %v4414
    %v4482 = vunpack.c.h.b16 %v4414
    %v4483 = vunpack.c.l.b16 %v4415
    %v4484 = vunpack.c.h.b16 %v4415
    %v4485 = vunpack.c.l.b16 %v4416
    %v4486 = vunpack.c.h.b16 %v4416
    %v4487 = vunpack.c.l.b16 %v4417
    %v4488 = vunpack.c.h.b16 %v4417
    %v4489 = vunpack.c.l.b16 %v4418
    %v4490 = vunpack.c.h.b16 %v4418
    %v4491 = vunpack.c.l.b16 %v4419
    %v4492 = vunpack.c.h.b16 %v4419
    %v4493 = vunpack.c.l.b16 %v4420
    %v4494 = vunpack.c.h.b16 %v4420
    %v4495 = vunpack.c.l.b16 %v4421
    %v4496 = vunpack.c.h.b16 %v4421
    %v4497 = vunpack.c.l.b16 %v4422
    %v4498 = vunpack.c.h.b16 %v4422
    %v4499 = vunpack.c.l.b16 %v4423
    %v4500 = vunpack.c.h.b16 %v4423
    %v4501 = vunpack.c.l.b16 %v4424
    %v4502 = vunpack.c.h.b16 %v4424
    %v4503 = vunpack.c.l.b16 %v4425
    %v4504 = vunpack.c.h.b16 %v4425
    %v4505 = vunpack.c.l.b16 %v4426
    %v4506 = vunpack.c.h.b16 %v4426
    %v4507 = vunpack.c.l.b16 %v4427
    %v4508 = vunpack.c.h.b16 %v4427
    %v4509 = vunpack.c.l.b16 %v4428
    %v4510 = vunpack.c.h.b16 %v4428
    %v4511 = vunpack.c.l.b16 %v4429
    %v4512 = vunpack.c.h.b16 %v4429
    %v4513 = vunpack.c.l.b16 %v4430
    %v4514 = vunpack.c.h.b16 %v4430
    %v4515 = vunpack.c.l.b16 %v4431
    %v4516 = vunpack.c.h.b16 %v4431
    %v4517 = vunpack.c.l.b16 %v4432
    %v4518 = vunpack.c.h.b16 %v4432
    %v4519 = vunpack.c.l.b16 %v4433
    %v4520 = vunpack.c.h.b16 %v4433
    %v4521 = vunpack.c.l.b16 %v4434
    %v4522 = vunpack.c.h.b16 %v4434
    %v4523 = vunpack.c.l.b16 %v4435
    %v4524 = vunpack.c.h.b16 %v4435
    %v4525 = vunpack.c.l.b16 %v4436
    %v4526 = vunpack.c.h.b16 %v4436
    %v4527 = vunpack.c.l.b16 %v4437
    %v4528 = vunpack.c.h.b16 %v4437
    %v4529 = vunpack.c.l.b16 %v4438
    %v4530 = vunpack.c.h.b16 %v4438
    %v4531 = vunpack.c.l.b16 %v4439
    %v4532 = vunpack.c.h.b16 %v4439
    %v4533 = vunpack.c.l.b16 %v4440
    %v4534 = vunpack.c.h.b16 %v4440
    %v4535 = vunpack.c.l.b16 %v4441
    %v4536 = vunpack.c.h.b16 %v4441
    %v4537 = vunpack.c.l.b16 %v4442
    %v4538 = vunpack.c.h.b16 %v4442
    %v4539 = vunpack.c.l.b16 %v4443
    %v4540 = vunpack.c.h.b16 %v4443
    %v4541 = vpack.c.b16 %v4485, %v4477
    %v4542 = vpack.c.b16 %v4486, %v4478
    %v4543 = vpack.c.b16 %v4487, %v4479
    %v4544 = vpack.c.b16 %v4488, %v4480
    %v4545 = vpack.c.b16 %v4489, %v4481
    %v4546 = vpack.c.b16 %v4490, %v4482
    %v4547 = vpack.c.b16 %v4491, %v4483
    %v4548 = vpack.c.b16 %v4492, %v4484
    %v4549 = vpack.c.b16 %v4501, %v4493
    %v4550 = vpack.c.b16 %v4502, %v4494
    %v4551 = vpack.c.b16 %v4503, %v4495
    %v4552 = vpack.c.b16 %v4504, %v4496
    %v4553 = vpack.c.b16 %v4505, %v4497
    %v4554 = vpack.c.b16 %v4506, %v4498
    %v4555 = vpack.c.b16 %v4507, %v4499
    %v4556 = vpack.c.b16 %v4508, %v4500
    %v4557 = vpack.c.b16 %v4517, %v4509
    %v4558 = vpack.c.b16 %v4518, %v4510
    %v4559 = vpack.c.b16 %v4519, %v4511
    %v4560 = vpack.c.b16 %v4520, %v4512
    %v4561 = vpack.c.b16 %v4521, %v4513
    %v4562 = vpack.c.b16 %v4522, %v4514
    %v4563 = vpack.c.b16 %v4523, %v4515
    %v4564 = vpack.c.b16 %v4524, %v4516
    %v4565 = vpack.c.b16 %v4533, %v4525
    %v4566 = vpack.c.b16 %v4534, %v4526
    %v4567 = vpack.c.b16 %v4535, %v4527
    %v4568 = vpack.c.b16 %v4536, %v4528
    %v4569 = vpack.c.b16 %v4537, %v4529
    %v4570 = vpack.c.b16 %v4538, %v4530
    %v4571 = vpack.c.b16 %v4539, %v4531
    %v4572 = vpack.c.b16 %v4540, %v4532
    %v4606 = vsel %vm325, %v4444, 0
    %4608 = vmatpush.bf16.msra.mxu0 0
    %4609 = vmatpush.bf16.msra.mxu0 0
    %4610 = vmatpush.bf16.msra.mxu0 0
    %4611 = vmatpush.bf16.msra.mxu0 0
    %4612 = vmatpush.bf16.msra.mxu0 %v4565
    %4613 = vmatpush.bf16.msra.mxu0 %v4557
    %4614 = vmatpush.bf16.msra.mxu0 %v4549
    %4615 = vmatpush.bf16.msra.mxu0 %v4541
    %4616 = vmatmul.bf16.gmra.mxu0 %v4606
    %v4617 = vpop.f32.mrf.mxu0
    %v4618 = vadd.f32 0.0, %v4617
    %v4619 = vpop.f32.mrf.mxu0
    %4620 = vdwg.mxu0
    %4621 = vmatpush.bf16.msra.mxu0 0
    %4622 = vmatpush.bf16.msra.mxu0 0
    %4623 = vmatpush.bf16.msra.mxu0 0
    %4624 = vmatpush.bf16.msra.mxu0 0
    %4625 = vmatpush.bf16.msra.mxu0 %v4566
    %4626 = vmatpush.bf16.msra.mxu0 %v4558
    %4627 = vmatpush.bf16.msra.mxu0 %v4550
    %4628 = vmatpush.bf16.msra.mxu0 %v4542
    %4629 = vmatmul.bf16.gmra.mxu0 %v4606
    %v4630 = vpop.f32.mrf.mxu0
    %v4631 = vadd.f32 0.0, %v4630
    %v4632 = vpop.f32.mrf.mxu0
    %4633 = vdwg.mxu0
    %4634 = vmatpush.bf16.msra.mxu0 0
    %4635 = vmatpush.bf16.msra.mxu0 0
    %4636 = vmatpush.bf16.msra.mxu0 0
    %4637 = vmatpush.bf16.msra.mxu0 0
    %4638 = vmatpush.bf16.msra.mxu0 %v4567
    %4639 = vmatpush.bf16.msra.mxu0 %v4559
    %4640 = vmatpush.bf16.msra.mxu0 %v4551
    %4641 = vmatpush.bf16.msra.mxu0 %v4543
    %4642 = vmatmul.bf16.gmra.mxu0 %v4606
    %v4643 = vpop.f32.mrf.mxu0
    %v4644 = vadd.f32 0.0, %v4643
    %v4645 = vpop.f32.mrf.mxu0
    %4646 = vdwg.mxu0
    %4647 = vmatpush.bf16.msra.mxu0 0
    %4648 = vmatpush.bf16.msra.mxu0 0
    %4649 = vmatpush.bf16.msra.mxu0 0
    %4650 = vmatpush.bf16.msra.mxu0 0
    %4651 = vmatpush.bf16.msra.mxu0 %v4568
    %4652 = vmatpush.bf16.msra.mxu0 %v4560
    %4653 = vmatpush.bf16.msra.mxu0 %v4552
    %4654 = vmatpush.bf16.msra.mxu0 %v4544
    %4655 = vmatmul.bf16.gmra.mxu0 %v4606
    %v4656 = vpop.f32.mrf.mxu0
    %v4657 = vadd.f32 0.0, %v4656
    %v4658 = vpop.f32.mrf.mxu0
    %4659 = vdwg.mxu0
    %4660 = vmatpush.bf16.msra.mxu0 0
    %4661 = vmatpush.bf16.msra.mxu0 0
    %4662 = vmatpush.bf16.msra.mxu0 0
    %4663 = vmatpush.bf16.msra.mxu0 0
    %4664 = vmatpush.bf16.msra.mxu0 %v4569
    %4665 = vmatpush.bf16.msra.mxu0 %v4561
    %4666 = vmatpush.bf16.msra.mxu0 %v4553
    %4667 = vmatpush.bf16.msra.mxu0 %v4545
    %4668 = vmatmul.bf16.gmra.mxu0 %v4606
    %v4669 = vpop.f32.mrf.mxu0
    %v4670 = vadd.f32 0.0, %v4669
    %v4671 = vpop.f32.mrf.mxu0
    %4672 = vdwg.mxu0
    %4673 = vmatpush.bf16.msra.mxu0 0
    %4674 = vmatpush.bf16.msra.mxu0 0
    %4675 = vmatpush.bf16.msra.mxu0 0
    %4676 = vmatpush.bf16.msra.mxu0 0
    %4677 = vmatpush.bf16.msra.mxu0 %v4570
    %4678 = vmatpush.bf16.msra.mxu0 %v4562
    %4679 = vmatpush.bf16.msra.mxu0 %v4554
    %4680 = vmatpush.bf16.msra.mxu0 %v4546
    %4681 = vmatmul.bf16.gmra.mxu0 %v4606
    %v4682 = vpop.f32.mrf.mxu0
    %v4683 = vadd.f32 0.0, %v4682
    %v4684 = vpop.f32.mrf.mxu0
    %4685 = vdwg.mxu0
    %4686 = vmatpush.bf16.msra.mxu0 0
    %4687 = vmatpush.bf16.msra.mxu0 0
    %4688 = vmatpush.bf16.msra.mxu0 0
    %4689 = vmatpush.bf16.msra.mxu0 0
    %4690 = vmatpush.bf16.msra.mxu0 %v4571
    %4691 = vmatpush.bf16.msra.mxu0 %v4563
    %4692 = vmatpush.bf16.msra.mxu0 %v4555
    %4693 = vmatpush.bf16.msra.mxu0 %v4547
    %4694 = vmatmul.bf16.gmra.mxu0 %v4606
    %v4695 = vpop.f32.mrf.mxu0
    %v4696 = vadd.f32 0.0, %v4695
    %v4697 = vpop.f32.mrf.mxu0
    %4698 = vdwg.mxu0
    %4699 = vmatpush.bf16.msra.mxu0 0
    %4700 = vmatpush.bf16.msra.mxu0 0
    %4701 = vmatpush.bf16.msra.mxu0 0
    %4702 = vmatpush.bf16.msra.mxu0 0
    %4703 = vmatpush.bf16.msra.mxu0 %v4572
    %4704 = vmatpush.bf16.msra.mxu0 %v4564
    %4705 = vmatpush.bf16.msra.mxu0 %v4556
    %4706 = vmatpush.bf16.msra.mxu0 %v4548
    %4707 = vmatmul.bf16.gmra.mxu0 %v4606
    %v4708 = vpop.f32.mrf.mxu0
    %v4709 = vadd.f32 0.0, %v4708
    %v4710 = vpop.f32.mrf.mxu0
    %4711 = vdwg.mxu0
    %v4712 = vadd.f32 %v4404, %v4618
    %v4713 = vadd.f32 %v4405, %v4631
    %v4714 = vadd.f32 %v4406, %v4644
    %v4715 = vadd.f32 %v4407, %v4657
    %v4716 = vadd.f32 %v4408, %v4670
    %v4717 = vadd.f32 %v4409, %v4683
    %v4718 = vadd.f32 %v4410, %v4696
    %v4719 = vadd.f32 %v4411, %v4709
    %v4720 = vpack.c.bf16 %v1032, %v1032
    %v4721 = vld [vmem:[#allocation2 + $0xc00] sm:$0xff]
    %v4722 = vld [vmem:[#allocation2 + $0xc08] sm:$0xff]
    %v4723 = vld [vmem:[#allocation2 + $0xc10] sm:$0xff]
    %v4724 = vld [vmem:[#allocation2 + $0xc18] sm:$0xff]
    %v4725 = vld [vmem:[#allocation2 + $0xc20] sm:$0xff]
    %v4726 = vld [vmem:[#allocation2 + $0xc28] sm:$0xff]
    %v4727 = vld [vmem:[#allocation2 + $0xc30] sm:$0xff]
    %v4728 = vld [vmem:[#allocation2 + $0xc38] sm:$0xff]
    %v4729 = vld [vmem:[#allocation2 + $0xc40] sm:$0xff]
    %v4730 = vld [vmem:[#allocation2 + $0xc48] sm:$0xff]
    %v4731 = vld [vmem:[#allocation2 + $0xc50] sm:$0xff]
    %v4732 = vld [vmem:[#allocation2 + $0xc58] sm:$0xff]
    %v4733 = vld [vmem:[#allocation2 + $0xc60] sm:$0xff]
    %v4734 = vld [vmem:[#allocation2 + $0xc68] sm:$0xff]
    %v4735 = vld [vmem:[#allocation2 + $0xc70] sm:$0xff]
    %v4736 = vld [vmem:[#allocation2 + $0xc78] sm:$0xff]
    %v4737 = vld [vmem:[#allocation2 + $0xc80] sm:$0xff]
    %v4738 = vld [vmem:[#allocation2 + $0xc88] sm:$0xff]
    %v4739 = vld [vmem:[#allocation2 + $0xc90] sm:$0xff]
    %v4740 = vld [vmem:[#allocation2 + $0xc98] sm:$0xff]
    %v4741 = vld [vmem:[#allocation2 + $0xca0] sm:$0xff]
    %v4742 = vld [vmem:[#allocation2 + $0xca8] sm:$0xff]
    %v4743 = vld [vmem:[#allocation2 + $0xcb0] sm:$0xff]
    %v4744 = vld [vmem:[#allocation2 + $0xcb8] sm:$0xff]
    %v4745 = vld [vmem:[#allocation2 + $0xcc0] sm:$0xff]
    %v4746 = vld [vmem:[#allocation2 + $0xcc8] sm:$0xff]
    %v4747 = vld [vmem:[#allocation2 + $0xcd0] sm:$0xff]
    %v4748 = vld [vmem:[#allocation2 + $0xcd8] sm:$0xff]
    %v4749 = vld [vmem:[#allocation2 + $0xce0] sm:$0xff]
    %v4750 = vld [vmem:[#allocation2 + $0xce8] sm:$0xff]
    %v4751 = vld [vmem:[#allocation2 + $0xcf0] sm:$0xff]
    %v4752 = vld [vmem:[#allocation2 + $0xcf8] sm:$0xff]
    %v4785 = vunpack.c.l.b16 %v4721
    %v4786 = vunpack.c.h.b16 %v4721
    %v4787 = vunpack.c.l.b16 %v4722
    %v4788 = vunpack.c.h.b16 %v4722
    %v4789 = vunpack.c.l.b16 %v4723
    %v4790 = vunpack.c.h.b16 %v4723
    %v4791 = vunpack.c.l.b16 %v4724
    %v4792 = vunpack.c.h.b16 %v4724
    %v4793 = vunpack.c.l.b16 %v4725
    %v4794 = vunpack.c.h.b16 %v4725
    %v4795 = vunpack.c.l.b16 %v4726
    %v4796 = vunpack.c.h.b16 %v4726
    %v4797 = vunpack.c.l.b16 %v4727
    %v4798 = vunpack.c.h.b16 %v4727
    %v4799 = vunpack.c.l.b16 %v4728
    %v4800 = vunpack.c.h.b16 %v4728
    %v4801 = vunpack.c.l.b16 %v4729
    %v4802 = vunpack.c.h.b16 %v4729
    %v4803 = vunpack.c.l.b16 %v4730
    %v4804 = vunpack.c.h.b16 %v4730
    %v4805 = vunpack.c.l.b16 %v4731
    %v4806 = vunpack.c.h.b16 %v4731
    %v4807 = vunpack.c.l.b16 %v4732
    %v4808 = vunpack.c.h.b16 %v4732
    %v4809 = vunpack.c.l.b16 %v4733
    %v4810 = vunpack.c.h.b16 %v4733
    %v4811 = vunpack.c.l.b16 %v4734
    %v4812 = vunpack.c.h.b16 %v4734
    %v4813 = vunpack.c.l.b16 %v4735
    %v4814 = vunpack.c.h.b16 %v4735
    %v4815 = vunpack.c.l.b16 %v4736
    %v4816 = vunpack.c.h.b16 %v4736
    %v4817 = vunpack.c.l.b16 %v4737
    %v4818 = vunpack.c.h.b16 %v4737
    %v4819 = vunpack.c.l.b16 %v4738
    %v4820 = vunpack.c.h.b16 %v4738
    %v4821 = vunpack.c.l.b16 %v4739
    %v4822 = vunpack.c.h.b16 %v4739
    %v4823 = vunpack.c.l.b16 %v4740
    %v4824 = vunpack.c.h.b16 %v4740
    %v4825 = vunpack.c.l.b16 %v4741
    %v4826 = vunpack.c.h.b16 %v4741
    %v4827 = vunpack.c.l.b16 %v4742
    %v4828 = vunpack.c.h.b16 %v4742
    %v4829 = vunpack.c.l.b16 %v4743
    %v4830 = vunpack.c.h.b16 %v4743
    %v4831 = vunpack.c.l.b16 %v4744
    %v4832 = vunpack.c.h.b16 %v4744
    %v4833 = vunpack.c.l.b16 %v4745
    %v4834 = vunpack.c.h.b16 %v4745
    %v4835 = vunpack.c.l.b16 %v4746
    %v4836 = vunpack.c.h.b16 %v4746
    %v4837 = vunpack.c.l.b16 %v4747
    %v4838 = vunpack.c.h.b16 %v4747
    %v4839 = vunpack.c.l.b16 %v4748
    %v4840 = vunpack.c.h.b16 %v4748
    %v4841 = vunpack.c.l.b16 %v4749
    %v4842 = vunpack.c.h.b16 %v4749
    %v4843 = vunpack.c.l.b16 %v4750
    %v4844 = vunpack.c.h.b16 %v4750
    %v4845 = vunpack.c.l.b16 %v4751
    %v4846 = vunpack.c.h.b16 %v4751
    %v4847 = vunpack.c.l.b16 %v4752
    %v4848 = vunpack.c.h.b16 %v4752
    %v4849 = vpack.c.b16 %v4793, %v4785
    %v4850 = vpack.c.b16 %v4794, %v4786
    %v4851 = vpack.c.b16 %v4795, %v4787
    %v4852 = vpack.c.b16 %v4796, %v4788
    %v4853 = vpack.c.b16 %v4797, %v4789
    %v4854 = vpack.c.b16 %v4798, %v4790
    %v4855 = vpack.c.b16 %v4799, %v4791
    %v4856 = vpack.c.b16 %v4800, %v4792
    %v4857 = vpack.c.b16 %v4809, %v4801
    %v4858 = vpack.c.b16 %v4810, %v4802
    %v4859 = vpack.c.b16 %v4811, %v4803
    %v4860 = vpack.c.b16 %v4812, %v4804
    %v4861 = vpack.c.b16 %v4813, %v4805
    %v4862 = vpack.c.b16 %v4814, %v4806
    %v4863 = vpack.c.b16 %v4815, %v4807
    %v4864 = vpack.c.b16 %v4816, %v4808
    %v4865 = vpack.c.b16 %v4825, %v4817
    %v4866 = vpack.c.b16 %v4826, %v4818
    %v4867 = vpack.c.b16 %v4827, %v4819
    %v4868 = vpack.c.b16 %v4828, %v4820
    %v4869 = vpack.c.b16 %v4829, %v4821
    %v4870 = vpack.c.b16 %v4830, %v4822
    %v4871 = vpack.c.b16 %v4831, %v4823
    %v4872 = vpack.c.b16 %v4832, %v4824
    %v4873 = vpack.c.b16 %v4841, %v4833
    %v4874 = vpack.c.b16 %v4842, %v4834
    %v4875 = vpack.c.b16 %v4843, %v4835
    %v4876 = vpack.c.b16 %v4844, %v4836
    %v4877 = vpack.c.b16 %v4845, %v4837
    %v4878 = vpack.c.b16 %v4846, %v4838
    %v4879 = vpack.c.b16 %v4847, %v4839
    %v4880 = vpack.c.b16 %v4848, %v4840
    %v4914 = vsel %vm325, %v4720, 0
    %4916 = vmatpush.bf16.msra.mxu0 0
    %4917 = vmatpush.bf16.msra.mxu0 0
    %4918 = vmatpush.bf16.msra.mxu0 0
    %4919 = vmatpush.bf16.msra.mxu0 0
    %4920 = vmatpush.bf16.msra.mxu0 %v4873
    %4921 = vmatpush.bf16.msra.mxu0 %v4865
    %4922 = vmatpush.bf16.msra.mxu0 %v4857
    %4923 = vmatpush.bf16.msra.mxu0 %v4849
    %4924 = vmatmul.bf16.gmra.mxu0 %v4914
    %v4925 = vpop.f32.mrf.mxu0
    %v4926 = vadd.f32 0.0, %v4925
    %v4927 = vpop.f32.mrf.mxu0
    %4928 = vdwg.mxu0
    %4929 = vmatpush.bf16.msra.mxu0 0
    %4930 = vmatpush.bf16.msra.mxu0 0
    %4931 = vmatpush.bf16.msra.mxu0 0
    %4932 = vmatpush.bf16.msra.mxu0 0
    %4933 = vmatpush.bf16.msra.mxu0 %v4874
    %4934 = vmatpush.bf16.msra.mxu0 %v4866
    %4935 = vmatpush.bf16.msra.mxu0 %v4858
    %4936 = vmatpush.bf16.msra.mxu0 %v4850
    %4937 = vmatmul.bf16.gmra.mxu0 %v4914
    %v4938 = vpop.f32.mrf.mxu0
    %v4939 = vadd.f32 0.0, %v4938
    %v4940 = vpop.f32.mrf.mxu0
    %4941 = vdwg.mxu0
    %4942 = vmatpush.bf16.msra.mxu0 0
    %4943 = vmatpush.bf16.msra.mxu0 0
    %4944 = vmatpush.bf16.msra.mxu0 0
    %4945 = vmatpush.bf16.msra.mxu0 0
    %4946 = vmatpush.bf16.msra.mxu0 %v4875
    %4947 = vmatpush.bf16.msra.mxu0 %v4867
    %4948 = vmatpush.bf16.msra.mxu0 %v4859
    %4949 = vmatpush.bf16.msra.mxu0 %v4851
    %4950 = vmatmul.bf16.gmra.mxu0 %v4914
    %v4951 = vpop.f32.mrf.mxu0
    %v4952 = vadd.f32 0.0, %v4951
    %v4953 = vpop.f32.mrf.mxu0
    %4954 = vdwg.mxu0
    %4955 = vmatpush.bf16.msra.mxu0 0
    %4956 = vmatpush.bf16.msra.mxu0 0
    %4957 = vmatpush.bf16.msra.mxu0 0
    %4958 = vmatpush.bf16.msra.mxu0 0
    %4959 = vmatpush.bf16.msra.mxu0 %v4876
    %4960 = vmatpush.bf16.msra.mxu0 %v4868
    %4961 = vmatpush.bf16.msra.mxu0 %v4860
    %4962 = vmatpush.bf16.msra.mxu0 %v4852
    %4963 = vmatmul.bf16.gmra.mxu0 %v4914
    %v4964 = vpop.f32.mrf.mxu0
    %v4965 = vadd.f32 0.0, %v4964
    %v4966 = vpop.f32.mrf.mxu0
    %4967 = vdwg.mxu0
    %4968 = vmatpush.bf16.msra.mxu0 0
    %4969 = vmatpush.bf16.msra.mxu0 0
    %4970 = vmatpush.bf16.msra.mxu0 0
    %4971 = vmatpush.bf16.msra.mxu0 0
    %4972 = vmatpush.bf16.msra.mxu0 %v4877
    %4973 = vmatpush.bf16.msra.mxu0 %v4869
    %4974 = vmatpush.bf16.msra.mxu0 %v4861
    %4975 = vmatpush.bf16.msra.mxu0 %v4853
    %4976 = vmatmul.bf16.gmra.mxu0 %v4914
    %v4977 = vpop.f32.mrf.mxu0
    %v4978 = vadd.f32 0.0, %v4977
    %v4979 = vpop.f32.mrf.mxu0
    %4980 = vdwg.mxu0
    %4981 = vmatpush.bf16.msra.mxu0 0
    %4982 = vmatpush.bf16.msra.mxu0 0
    %4983 = vmatpush.bf16.msra.mxu0 0
    %4984 = vmatpush.bf16.msra.mxu0 0
    %4985 = vmatpush.bf16.msra.mxu0 %v4878
    %4986 = vmatpush.bf16.msra.mxu0 %v4870
    %4987 = vmatpush.bf16.msra.mxu0 %v4862
    %4988 = vmatpush.bf16.msra.mxu0 %v4854
    %4989 = vmatmul.bf16.gmra.mxu0 %v4914
    %v4990 = vpop.f32.mrf.mxu0
    %v4991 = vadd.f32 0.0, %v4990
    %v4992 = vpop.f32.mrf.mxu0
    %4993 = vdwg.mxu0
    %4994 = vmatpush.bf16.msra.mxu0 0
    %4995 = vmatpush.bf16.msra.mxu0 0
    %4996 = vmatpush.bf16.msra.mxu0 0
    %4997 = vmatpush.bf16.msra.mxu0 0
    %4998 = vmatpush.bf16.msra.mxu0 %v4879
    %4999 = vmatpush.bf16.msra.mxu0 %v4871
    %5000 = vmatpush.bf16.msra.mxu0 %v4863
    %5001 = vmatpush.bf16.msra.mxu0 %v4855
    %5002 = vmatmul.bf16.gmra.mxu0 %v4914
    %v5003 = vpop.f32.mrf.mxu0
    %v5004 = vadd.f32 0.0, %v5003
    %v5005 = vpop.f32.mrf.mxu0
    %5006 = vdwg.mxu0
    %5007 = vmatpush.bf16.msra.mxu0 0
    %5008 = vmatpush.bf16.msra.mxu0 0
    %5009 = vmatpush.bf16.msra.mxu0 0
    %5010 = vmatpush.bf16.msra.mxu0 0
    %5011 = vmatpush.bf16.msra.mxu0 %v4880
    %5012 = vmatpush.bf16.msra.mxu0 %v4872
    %5013 = vmatpush.bf16.msra.mxu0 %v4864
    %5014 = vmatpush.bf16.msra.mxu0 %v4856
    %5015 = vmatmul.bf16.gmra.mxu0 %v4914
    %v5016 = vpop.f32.mrf.mxu0
    %v5017 = vadd.f32 0.0, %v5016
    %v5018 = vpop.f32.mrf.mxu0
    %5019 = vdwg.mxu0
    %v5020 = vadd.f32 %v4712, %v4926
    %v5021 = vadd.f32 %v4713, %v4939
    %v5022 = vadd.f32 %v4714, %v4952
    %v5023 = vadd.f32 %v4715, %v4965
    %v5024 = vadd.f32 %v4716, %v4978
    %v5025 = vadd.f32 %v4717, %v4991
    %v5026 = vadd.f32 %v4718, %v5004
    %v5027 = vadd.f32 %v4719, %v5017
    %v5028 = vld [vmem:[#allocation2 + $0xd00] sm:$0xff]
    %v5029 = vld [vmem:[#allocation2 + $0xd08] sm:$0xff]
    %v5030 = vld [vmem:[#allocation2 + $0xd10] sm:$0xff]
    %v5031 = vld [vmem:[#allocation2 + $0xd18] sm:$0xff]
    %v5032 = vld [vmem:[#allocation2 + $0xd20] sm:$0xff]
    %v5033 = vld [vmem:[#allocation2 + $0xd28] sm:$0xff]
    %v5034 = vld [vmem:[#allocation2 + $0xd30] sm:$0xff]
    %v5035 = vld [vmem:[#allocation2 + $0xd38] sm:$0xff]
    %v5036 = vld [vmem:[#allocation2 + $0xd40] sm:$0xff]
    %v5037 = vld [vmem:[#allocation2 + $0xd48] sm:$0xff]
    %v5038 = vld [vmem:[#allocation2 + $0xd50] sm:$0xff]
    %v5039 = vld [vmem:[#allocation2 + $0xd58] sm:$0xff]
    %v5040 = vld [vmem:[#allocation2 + $0xd60] sm:$0xff]
    %v5041 = vld [vmem:[#allocation2 + $0xd68] sm:$0xff]
    %v5042 = vld [vmem:[#allocation2 + $0xd70] sm:$0xff]
    %v5043 = vld [vmem:[#allocation2 + $0xd78] sm:$0xff]
    %v5044 = vld [vmem:[#allocation2 + $0xd80] sm:$0xff]
    %v5045 = vld [vmem:[#allocation2 + $0xd88] sm:$0xff]
    %v5046 = vld [vmem:[#allocation2 + $0xd90] sm:$0xff]
    %v5047 = vld [vmem:[#allocation2 + $0xd98] sm:$0xff]
    %v5048 = vld [vmem:[#allocation2 + $0xda0] sm:$0xff]
    %v5049 = vld [vmem:[#allocation2 + $0xda8] sm:$0xff]
    %v5050 = vld [vmem:[#allocation2 + $0xdb0] sm:$0xff]
    %v5051 = vld [vmem:[#allocation2 + $0xdb8] sm:$0xff]
    %v5052 = vld [vmem:[#allocation2 + $0xdc0] sm:$0xff]
    %v5053 = vld [vmem:[#allocation2 + $0xdc8] sm:$0xff]
    %v5054 = vld [vmem:[#allocation2 + $0xdd0] sm:$0xff]
    %v5055 = vld [vmem:[#allocation2 + $0xdd8] sm:$0xff]
    %v5056 = vld [vmem:[#allocation2 + $0xde0] sm:$0xff]
    %v5057 = vld [vmem:[#allocation2 + $0xde8] sm:$0xff]
    %v5058 = vld [vmem:[#allocation2 + $0xdf0] sm:$0xff]
    %v5059 = vld [vmem:[#allocation2 + $0xdf8] sm:$0xff]
    %v5061 = vrot.slane %v4720, 1
    %v5094 = vunpack.c.l.b16 %v5028
    %v5095 = vunpack.c.h.b16 %v5028
    %v5096 = vunpack.c.l.b16 %v5029
    %v5097 = vunpack.c.h.b16 %v5029
    %v5098 = vunpack.c.l.b16 %v5030
    %v5099 = vunpack.c.h.b16 %v5030
    %v5100 = vunpack.c.l.b16 %v5031
    %v5101 = vunpack.c.h.b16 %v5031
    %v5102 = vunpack.c.l.b16 %v5032
    %v5103 = vunpack.c.h.b16 %v5032
    %v5104 = vunpack.c.l.b16 %v5033
    %v5105 = vunpack.c.h.b16 %v5033
    %v5106 = vunpack.c.l.b16 %v5034
    %v5107 = vunpack.c.h.b16 %v5034
    %v5108 = vunpack.c.l.b16 %v5035
    %v5109 = vunpack.c.h.b16 %v5035
    %v5110 = vunpack.c.l.b16 %v5036
    %v5111 = vunpack.c.h.b16 %v5036
    %v5112 = vunpack.c.l.b16 %v5037
    %v5113 = vunpack.c.h.b16 %v5037
    %v5114 = vunpack.c.l.b16 %v5038
    %v5115 = vunpack.c.h.b16 %v5038
    %v5116 = vunpack.c.l.b16 %v5039
    %v5117 = vunpack.c.h.b16 %v5039
    %v5118 = vunpack.c.l.b16 %v5040
    %v5119 = vunpack.c.h.b16 %v5040
    %v5120 = vunpack.c.l.b16 %v5041
    %v5121 = vunpack.c.h.b16 %v5041
    %v5122 = vunpack.c.l.b16 %v5042
    %v5123 = vunpack.c.h.b16 %v5042
    %v5124 = vunpack.c.l.b16 %v5043
    %v5125 = vunpack.c.h.b16 %v5043
    %v5126 = vunpack.c.l.b16 %v5044
    %v5127 = vunpack.c.h.b16 %v5044
    %v5128 = vunpack.c.l.b16 %v5045
    %v5129 = vunpack.c.h.b16 %v5045
    %v5130 = vunpack.c.l.b16 %v5046
    %v5131 = vunpack.c.h.b16 %v5046
    %v5132 = vunpack.c.l.b16 %v5047
    %v5133 = vunpack.c.h.b16 %v5047
    %v5134 = vunpack.c.l.b16 %v5048
    %v5135 = vunpack.c.h.b16 %v5048
    %v5136 = vunpack.c.l.b16 %v5049
    %v5137 = vunpack.c.h.b16 %v5049
    %v5138 = vunpack.c.l.b16 %v5050
    %v5139 = vunpack.c.h.b16 %v5050
    %v5140 = vunpack.c.l.b16 %v5051
    %v5141 = vunpack.c.h.b16 %v5051
    %v5142 = vunpack.c.l.b16 %v5052
    %v5143 = vunpack.c.h.b16 %v5052
    %v5144 = vunpack.c.l.b16 %v5053
    %v5145 = vunpack.c.h.b16 %v5053
    %v5146 = vunpack.c.l.b16 %v5054
    %v5147 = vunpack.c.h.b16 %v5054
    %v5148 = vunpack.c.l.b16 %v5055
    %v5149 = vunpack.c.h.b16 %v5055
    %v5150 = vunpack.c.l.b16 %v5056
    %v5151 = vunpack.c.h.b16 %v5056
    %v5152 = vunpack.c.l.b16 %v5057
    %v5153 = vunpack.c.h.b16 %v5057
    %v5154 = vunpack.c.l.b16 %v5058
    %v5155 = vunpack.c.h.b16 %v5058
    %v5156 = vunpack.c.l.b16 %v5059
    %v5157 = vunpack.c.h.b16 %v5059
    %v5158 = vpack.c.b16 %v5102, %v5094
    %v5159 = vpack.c.b16 %v5103, %v5095
    %v5160 = vpack.c.b16 %v5104, %v5096
    %v5161 = vpack.c.b16 %v5105, %v5097
    %v5162 = vpack.c.b16 %v5106, %v5098
    %v5163 = vpack.c.b16 %v5107, %v5099
    %v5164 = vpack.c.b16 %v5108, %v5100
    %v5165 = vpack.c.b16 %v5109, %v5101
    %v5166 = vpack.c.b16 %v5118, %v5110
    %v5167 = vpack.c.b16 %v5119, %v5111
    %v5168 = vpack.c.b16 %v5120, %v5112
    %v5169 = vpack.c.b16 %v5121, %v5113
    %v5170 = vpack.c.b16 %v5122, %v5114
    %v5171 = vpack.c.b16 %v5123, %v5115
    %v5172 = vpack.c.b16 %v5124, %v5116
    %v5173 = vpack.c.b16 %v5125, %v5117
    %v5174 = vpack.c.b16 %v5134, %v5126
    %v5175 = vpack.c.b16 %v5135, %v5127
    %v5176 = vpack.c.b16 %v5136, %v5128
    %v5177 = vpack.c.b16 %v5137, %v5129
    %v5178 = vpack.c.b16 %v5138, %v5130
    %v5179 = vpack.c.b16 %v5139, %v5131
    %v5180 = vpack.c.b16 %v5140, %v5132
    %v5181 = vpack.c.b16 %v5141, %v5133
    %v5182 = vpack.c.b16 %v5150, %v5142
    %v5183 = vpack.c.b16 %v5151, %v5143
    %v5184 = vpack.c.b16 %v5152, %v5144
    %v5185 = vpack.c.b16 %v5153, %v5145
    %v5186 = vpack.c.b16 %v5154, %v5146
    %v5187 = vpack.c.b16 %v5155, %v5147
    %v5188 = vpack.c.b16 %v5156, %v5148
    %v5189 = vpack.c.b16 %v5157, %v5149
    %v5223 = vsel %vm325, %v5061, 0
    %5225 = vmatpush.bf16.msra.mxu0 0
    %5226 = vmatpush.bf16.msra.mxu0 0
    %5227 = vmatpush.bf16.msra.mxu0 0
    %5228 = vmatpush.bf16.msra.mxu0 0
    %5229 = vmatpush.bf16.msra.mxu0 %v5182
    %5230 = vmatpush.bf16.msra.mxu0 %v5174
    %5231 = vmatpush.bf16.msra.mxu0 %v5166
    %5232 = vmatpush.bf16.msra.mxu0 %v5158
    %5233 = vmatmul.bf16.gmra.mxu0 %v5223
    %v5234 = vpop.f32.mrf.mxu0
    %v5235 = vadd.f32 0.0, %v5234
    %v5236 = vpop.f32.mrf.mxu0
    %5237 = vdwg.mxu0
    %5238 = vmatpush.bf16.msra.mxu0 0
    %5239 = vmatpush.bf16.msra.mxu0 0
    %5240 = vmatpush.bf16.msra.mxu0 0
    %5241 = vmatpush.bf16.msra.mxu0 0
    %5242 = vmatpush.bf16.msra.mxu0 %v5183
    %5243 = vmatpush.bf16.msra.mxu0 %v5175
    %5244 = vmatpush.bf16.msra.mxu0 %v5167
    %5245 = vmatpush.bf16.msra.mxu0 %v5159
    %5246 = vmatmul.bf16.gmra.mxu0 %v5223
    %v5247 = vpop.f32.mrf.mxu0
    %v5248 = vadd.f32 0.0, %v5247
    %v5249 = vpop.f32.mrf.mxu0
    %5250 = vdwg.mxu0
    %5251 = vmatpush.bf16.msra.mxu0 0
    %5252 = vmatpush.bf16.msra.mxu0 0
    %5253 = vmatpush.bf16.msra.mxu0 0
    %5254 = vmatpush.bf16.msra.mxu0 0
    %5255 = vmatpush.bf16.msra.mxu0 %v5184
    %5256 = vmatpush.bf16.msra.mxu0 %v5176
    %5257 = vmatpush.bf16.msra.mxu0 %v5168
    %5258 = vmatpush.bf16.msra.mxu0 %v5160
    %5259 = vmatmul.bf16.gmra.mxu0 %v5223
    %v5260 = vpop.f32.mrf.mxu0
    %v5261 = vadd.f32 0.0, %v5260
    %v5262 = vpop.f32.mrf.mxu0
    %5263 = vdwg.mxu0
    %5264 = vmatpush.bf16.msra.mxu0 0
    %5265 = vmatpush.bf16.msra.mxu0 0
    %5266 = vmatpush.bf16.msra.mxu0 0
    %5267 = vmatpush.bf16.msra.mxu0 0
    %5268 = vmatpush.bf16.msra.mxu0 %v5185
    %5269 = vmatpush.bf16.msra.mxu0 %v5177
    %5270 = vmatpush.bf16.msra.mxu0 %v5169
    %5271 = vmatpush.bf16.msra.mxu0 %v5161
    %5272 = vmatmul.bf16.gmra.mxu0 %v5223
    %v5273 = vpop.f32.mrf.mxu0
    %v5274 = vadd.f32 0.0, %v5273
    %v5275 = vpop.f32.mrf.mxu0
    %5276 = vdwg.mxu0
    %5277 = vmatpush.bf16.msra.mxu0 0
    %5278 = vmatpush.bf16.msra.mxu0 0
    %5279 = vmatpush.bf16.msra.mxu0 0
    %5280 = vmatpush.bf16.msra.mxu0 0
    %5281 = vmatpush.bf16.msra.mxu0 %v5186
    %5282 = vmatpush.bf16.msra.mxu0 %v5178
    %5283 = vmatpush.bf16.msra.mxu0 %v5170
    %5284 = vmatpush.bf16.msra.mxu0 %v5162
    %5285 = vmatmul.bf16.gmra.mxu0 %v5223
    %v5286 = vpop.f32.mrf.mxu0
    %v5287 = vadd.f32 0.0, %v5286
    %v5288 = vpop.f32.mrf.mxu0
    %5289 = vdwg.mxu0
    %5290 = vmatpush.bf16.msra.mxu0 0
    %5291 = vmatpush.bf16.msra.mxu0 0
    %5292 = vmatpush.bf16.msra.mxu0 0
    %5293 = vmatpush.bf16.msra.mxu0 0
    %5294 = vmatpush.bf16.msra.mxu0 %v5187
    %5295 = vmatpush.bf16.msra.mxu0 %v5179
    %5296 = vmatpush.bf16.msra.mxu0 %v5171
    %5297 = vmatpush.bf16.msra.mxu0 %v5163
    %5298 = vmatmul.bf16.gmra.mxu0 %v5223
    %v5299 = vpop.f32.mrf.mxu0
    %v5300 = vadd.f32 0.0, %v5299
    %v5301 = vpop.f32.mrf.mxu0
    %5302 = vdwg.mxu0
    %5303 = vmatpush.bf16.msra.mxu0 0
    %5304 = vmatpush.bf16.msra.mxu0 0
    %5305 = vmatpush.bf16.msra.mxu0 0
    %5306 = vmatpush.bf16.msra.mxu0 0
    %5307 = vmatpush.bf16.msra.mxu0 %v5188
    %5308 = vmatpush.bf16.msra.mxu0 %v5180
    %5309 = vmatpush.bf16.msra.mxu0 %v5172
    %5310 = vmatpush.bf16.msra.mxu0 %v5164
    %5311 = vmatmul.bf16.gmra.mxu0 %v5223
    %v5312 = vpop.f32.mrf.mxu0
    %v5313 = vadd.f32 0.0, %v5312
    %v5314 = vpop.f32.mrf.mxu0
    %5315 = vdwg.mxu0
    %5316 = vmatpush.bf16.msra.mxu0 0
    %5317 = vmatpush.bf16.msra.mxu0 0
    %5318 = vmatpush.bf16.msra.mxu0 0
    %5319 = vmatpush.bf16.msra.mxu0 0
    %5320 = vmatpush.bf16.msra.mxu0 %v5189
    %5321 = vmatpush.bf16.msra.mxu0 %v5181
    %5322 = vmatpush.bf16.msra.mxu0 %v5173
    %5323 = vmatpush.bf16.msra.mxu0 %v5165
    %5324 = vmatmul.bf16.gmra.mxu0 %v5223
    %v5325 = vpop.f32.mrf.mxu0
    %v5326 = vadd.f32 0.0, %v5325
    %v5327 = vpop.f32.mrf.mxu0
    %5328 = vdwg.mxu0
    %v5329 = vadd.f32 %v5020, %v5235
    %v5330 = vadd.f32 %v5021, %v5248
    %v5331 = vadd.f32 %v5022, %v5261
    %v5332 = vadd.f32 %v5023, %v5274
    %v5333 = vadd.f32 %v5024, %v5287
    %v5334 = vadd.f32 %v5025, %v5300
    %v5335 = vadd.f32 %v5026, %v5313
    %v5336 = vadd.f32 %v5027, %v5326
    %v5337 = vld [vmem:[#allocation2 + $0xe00] sm:$0xff]
    %v5338 = vld [vmem:[#allocation2 + $0xe08] sm:$0xff]
    %v5339 = vld [vmem:[#allocation2 + $0xe10] sm:$0xff]
    %v5340 = vld [vmem:[#allocation2 + $0xe18] sm:$0xff]
    %v5341 = vld [vmem:[#allocation2 + $0xe20] sm:$0xff]
    %v5342 = vld [vmem:[#allocation2 + $0xe28] sm:$0xff]
    %v5343 = vld [vmem:[#allocation2 + $0xe30] sm:$0xff]
    %v5344 = vld [vmem:[#allocation2 + $0xe38] sm:$0xff]
    %v5345 = vld [vmem:[#allocation2 + $0xe40] sm:$0xff]
    %v5346 = vld [vmem:[#allocation2 + $0xe48] sm:$0xff]
    %v5347 = vld [vmem:[#allocation2 + $0xe50] sm:$0xff]
    %v5348 = vld [vmem:[#allocation2 + $0xe58] sm:$0xff]
    %v5349 = vld [vmem:[#allocation2 + $0xe60] sm:$0xff]
    %v5350 = vld [vmem:[#allocation2 + $0xe68] sm:$0xff]
    %v5351 = vld [vmem:[#allocation2 + $0xe70] sm:$0xff]
    %v5352 = vld [vmem:[#allocation2 + $0xe78] sm:$0xff]
    %v5353 = vld [vmem:[#allocation2 + $0xe80] sm:$0xff]
    %v5354 = vld [vmem:[#allocation2 + $0xe88] sm:$0xff]
    %v5355 = vld [vmem:[#allocation2 + $0xe90] sm:$0xff]
    %v5356 = vld [vmem:[#allocation2 + $0xe98] sm:$0xff]
    %v5357 = vld [vmem:[#allocation2 + $0xea0] sm:$0xff]
    %v5358 = vld [vmem:[#allocation2 + $0xea8] sm:$0xff]
    %v5359 = vld [vmem:[#allocation2 + $0xeb0] sm:$0xff]
    %v5360 = vld [vmem:[#allocation2 + $0xeb8] sm:$0xff]
    %v5361 = vld [vmem:[#allocation2 + $0xec0] sm:$0xff]
    %v5362 = vld [vmem:[#allocation2 + $0xec8] sm:$0xff]
    %v5363 = vld [vmem:[#allocation2 + $0xed0] sm:$0xff]
    %v5364 = vld [vmem:[#allocation2 + $0xed8] sm:$0xff]
    %v5365 = vld [vmem:[#allocation2 + $0xee0] sm:$0xff]
    %v5366 = vld [vmem:[#allocation2 + $0xee8] sm:$0xff]
    %v5367 = vld [vmem:[#allocation2 + $0xef0] sm:$0xff]
    %v5368 = vld [vmem:[#allocation2 + $0xef8] sm:$0xff]
    %v5369 = vrot.slane %v4720, 2
    %v5402 = vunpack.c.l.b16 %v5337
    %v5403 = vunpack.c.h.b16 %v5337
    %v5404 = vunpack.c.l.b16 %v5338
    %v5405 = vunpack.c.h.b16 %v5338
    %v5406 = vunpack.c.l.b16 %v5339
    %v5407 = vunpack.c.h.b16 %v5339
    %v5408 = vunpack.c.l.b16 %v5340
    %v5409 = vunpack.c.h.b16 %v5340
    %v5410 = vunpack.c.l.b16 %v5341
    %v5411 = vunpack.c.h.b16 %v5341
    %v5412 = vunpack.c.l.b16 %v5342
    %v5413 = vunpack.c.h.b16 %v5342
    %v5414 = vunpack.c.l.b16 %v5343
    %v5415 = vunpack.c.h.b16 %v5343
    %v5416 = vunpack.c.l.b16 %v5344
    %v5417 = vunpack.c.h.b16 %v5344
    %v5418 = vunpack.c.l.b16 %v5345
    %v5419 = vunpack.c.h.b16 %v5345
    %v5420 = vunpack.c.l.b16 %v5346
    %v5421 = vunpack.c.h.b16 %v5346
    %v5422 = vunpack.c.l.b16 %v5347
    %v5423 = vunpack.c.h.b16 %v5347
    %v5424 = vunpack.c.l.b16 %v5348
    %v5425 = vunpack.c.h.b16 %v5348
    %v5426 = vunpack.c.l.b16 %v5349
    %v5427 = vunpack.c.h.b16 %v5349
    %v5428 = vunpack.c.l.b16 %v5350
    %v5429 = vunpack.c.h.b16 %v5350
    %v5430 = vunpack.c.l.b16 %v5351
    %v5431 = vunpack.c.h.b16 %v5351
    %v5432 = vunpack.c.l.b16 %v5352
    %v5433 = vunpack.c.h.b16 %v5352
    %v5434 = vunpack.c.l.b16 %v5353
    %v5435 = vunpack.c.h.b16 %v5353
    %v5436 = vunpack.c.l.b16 %v5354
    %v5437 = vunpack.c.h.b16 %v5354
    %v5438 = vunpack.c.l.b16 %v5355
    %v5439 = vunpack.c.h.b16 %v5355
    %v5440 = vunpack.c.l.b16 %v5356
    %v5441 = vunpack.c.h.b16 %v5356
    %v5442 = vunpack.c.l.b16 %v5357
    %v5443 = vunpack.c.h.b16 %v5357
    %v5444 = vunpack.c.l.b16 %v5358
    %v5445 = vunpack.c.h.b16 %v5358
    %v5446 = vunpack.c.l.b16 %v5359
    %v5447 = vunpack.c.h.b16 %v5359
    %v5448 = vunpack.c.l.b16 %v5360
    %v5449 = vunpack.c.h.b16 %v5360
    %v5450 = vunpack.c.l.b16 %v5361
    %v5451 = vunpack.c.h.b16 %v5361
    %v5452 = vunpack.c.l.b16 %v5362
    %v5453 = vunpack.c.h.b16 %v5362
    %v5454 = vunpack.c.l.b16 %v5363
    %v5455 = vunpack.c.h.b16 %v5363
    %v5456 = vunpack.c.l.b16 %v5364
    %v5457 = vunpack.c.h.b16 %v5364
    %v5458 = vunpack.c.l.b16 %v5365
    %v5459 = vunpack.c.h.b16 %v5365
    %v5460 = vunpack.c.l.b16 %v5366
    %v5461 = vunpack.c.h.b16 %v5366
    %v5462 = vunpack.c.l.b16 %v5367
    %v5463 = vunpack.c.h.b16 %v5367
    %v5464 = vunpack.c.l.b16 %v5368
    %v5465 = vunpack.c.h.b16 %v5368
    %v5466 = vpack.c.b16 %v5410, %v5402
    %v5467 = vpack.c.b16 %v5411, %v5403
    %v5468 = vpack.c.b16 %v5412, %v5404
    %v5469 = vpack.c.b16 %v5413, %v5405
    %v5470 = vpack.c.b16 %v5414, %v5406
    %v5471 = vpack.c.b16 %v5415, %v5407
    %v5472 = vpack.c.b16 %v5416, %v5408
    %v5473 = vpack.c.b16 %v5417, %v5409
    %v5474 = vpack.c.b16 %v5426, %v5418
    %v5475 = vpack.c.b16 %v5427, %v5419
    %v5476 = vpack.c.b16 %v5428, %v5420
    %v5477 = vpack.c.b16 %v5429, %v5421
    %v5478 = vpack.c.b16 %v5430, %v5422
    %v5479 = vpack.c.b16 %v5431, %v5423
    %v5480 = vpack.c.b16 %v5432, %v5424
    %v5481 = vpack.c.b16 %v5433, %v5425
    %v5482 = vpack.c.b16 %v5442, %v5434
    %v5483 = vpack.c.b16 %v5443, %v5435
    %v5484 = vpack.c.b16 %v5444, %v5436
    %v5485 = vpack.c.b16 %v5445, %v5437
    %v5486 = vpack.c.b16 %v5446, %v5438
    %v5487 = vpack.c.b16 %v5447, %v5439
    %v5488 = vpack.c.b16 %v5448, %v5440
    %v5489 = vpack.c.b16 %v5449, %v5441
    %v5490 = vpack.c.b16 %v5458, %v5450
    %v5491 = vpack.c.b16 %v5459, %v5451
    %v5492 = vpack.c.b16 %v5460, %v5452
    %v5493 = vpack.c.b16 %v5461, %v5453
    %v5494 = vpack.c.b16 %v5462, %v5454
    %v5495 = vpack.c.b16 %v5463, %v5455
    %v5496 = vpack.c.b16 %v5464, %v5456
    %v5497 = vpack.c.b16 %v5465, %v5457
    %v5531 = vsel %vm325, %v5369, 0
    %5533 = vmatpush.bf16.msra.mxu0 0
    %5534 = vmatpush.bf16.msra.mxu0 0
    %5535 = vmatpush.bf16.msra.mxu0 0
    %5536 = vmatpush.bf16.msra.mxu0 0
    %5537 = vmatpush.bf16.msra.mxu0 %v5490
    %5538 = vmatpush.bf16.msra.mxu0 %v5482
    %5539 = vmatpush.bf16.msra.mxu0 %v5474
    %5540 = vmatpush.bf16.msra.mxu0 %v5466
    %5541 = vmatmul.bf16.gmra.mxu0 %v5531
    %v5542 = vpop.f32.mrf.mxu0
    %v5543 = vadd.f32 0.0, %v5542
    %v5544 = vpop.f32.mrf.mxu0
    %5545 = vdwg.mxu0
    %5546 = vmatpush.bf16.msra.mxu0 0
    %5547 = vmatpush.bf16.msra.mxu0 0
    %5548 = vmatpush.bf16.msra.mxu0 0
    %5549 = vmatpush.bf16.msra.mxu0 0
    %5550 = vmatpush.bf16.msra.mxu0 %v5491
    %5551 = vmatpush.bf16.msra.mxu0 %v5483
    %5552 = vmatpush.bf16.msra.mxu0 %v5475
    %5553 = vmatpush.bf16.msra.mxu0 %v5467
    %5554 = vmatmul.bf16.gmra.mxu0 %v5531
    %v5555 = vpop.f32.mrf.mxu0
    %v5556 = vadd.f32 0.0, %v5555
    %v5557 = vpop.f32.mrf.mxu0
    %5558 = vdwg.mxu0
    %5559 = vmatpush.bf16.msra.mxu0 0
    %5560 = vmatpush.bf16.msra.mxu0 0
    %5561 = vmatpush.bf16.msra.mxu0 0
    %5562 = vmatpush.bf16.msra.mxu0 0
    %5563 = vmatpush.bf16.msra.mxu0 %v5492
    %5564 = vmatpush.bf16.msra.mxu0 %v5484
    %5565 = vmatpush.bf16.msra.mxu0 %v5476
    %5566 = vmatpush.bf16.msra.mxu0 %v5468
    %5567 = vmatmul.bf16.gmra.mxu0 %v5531
    %v5568 = vpop.f32.mrf.mxu0
    %v5569 = vadd.f32 0.0, %v5568
    %v5570 = vpop.f32.mrf.mxu0
    %5571 = vdwg.mxu0
    %5572 = vmatpush.bf16.msra.mxu0 0
    %5573 = vmatpush.bf16.msra.mxu0 0
    %5574 = vmatpush.bf16.msra.mxu0 0
    %5575 = vmatpush.bf16.msra.mxu0 0
    %5576 = vmatpush.bf16.msra.mxu0 %v5493
    %5577 = vmatpush.bf16.msra.mxu0 %v5485
    %5578 = vmatpush.bf16.msra.mxu0 %v5477
    %5579 = vmatpush.bf16.msra.mxu0 %v5469
    %5580 = vmatmul.bf16.gmra.mxu0 %v5531
    %v5581 = vpop.f32.mrf.mxu0
    %v5582 = vadd.f32 0.0, %v5581
    %v5583 = vpop.f32.mrf.mxu0
    %5584 = vdwg.mxu0
    %5585 = vmatpush.bf16.msra.mxu0 0
    %5586 = vmatpush.bf16.msra.mxu0 0
    %5587 = vmatpush.bf16.msra.mxu0 0
    %5588 = vmatpush.bf16.msra.mxu0 0
    %5589 = vmatpush.bf16.msra.mxu0 %v5494
    %5590 = vmatpush.bf16.msra.mxu0 %v5486
    %5591 = vmatpush.bf16.msra.mxu0 %v5478
    %5592 = vmatpush.bf16.msra.mxu0 %v5470
    %5593 = vmatmul.bf16.gmra.mxu0 %v5531
    %v5594 = vpop.f32.mrf.mxu0
    %v5595 = vadd.f32 0.0, %v5594
    %v5596 = vpop.f32.mrf.mxu0
    %5597 = vdwg.mxu0
    %5598 = vmatpush.bf16.msra.mxu0 0
    %5599 = vmatpush.bf16.msra.mxu0 0
    %5600 = vmatpush.bf16.msra.mxu0 0
    %5601 = vmatpush.bf16.msra.mxu0 0
    %5602 = vmatpush.bf16.msra.mxu0 %v5495
    %5603 = vmatpush.bf16.msra.mxu0 %v5487
    %5604 = vmatpush.bf16.msra.mxu0 %v5479
    %5605 = vmatpush.bf16.msra.mxu0 %v5471
    %5606 = vmatmul.bf16.gmra.mxu0 %v5531
    %v5607 = vpop.f32.mrf.mxu0
    %v5608 = vadd.f32 0.0, %v5607
    %v5609 = vpop.f32.mrf.mxu0
    %5610 = vdwg.mxu0
    %5611 = vmatpush.bf16.msra.mxu0 0
    %5612 = vmatpush.bf16.msra.mxu0 0
    %5613 = vmatpush.bf16.msra.mxu0 0
    %5614 = vmatpush.bf16.msra.mxu0 0
    %5615 = vmatpush.bf16.msra.mxu0 %v5496
    %5616 = vmatpush.bf16.msra.mxu0 %v5488
    %5617 = vmatpush.bf16.msra.mxu0 %v5480
    %5618 = vmatpush.bf16.msra.mxu0 %v5472
    %5619 = vmatmul.bf16.gmra.mxu0 %v5531
    %v5620 = vpop.f32.mrf.mxu0
    %v5621 = vadd.f32 0.0, %v5620
    %v5622 = vpop.f32.mrf.mxu0
    %5623 = vdwg.mxu0
    %5624 = vmatpush.bf16.msra.mxu0 0
    %5625 = vmatpush.bf16.msra.mxu0 0
    %5626 = vmatpush.bf16.msra.mxu0 0
    %5627 = vmatpush.bf16.msra.mxu0 0
    %5628 = vmatpush.bf16.msra.mxu0 %v5497
    %5629 = vmatpush.bf16.msra.mxu0 %v5489
    %5630 = vmatpush.bf16.msra.mxu0 %v5481
    %5631 = vmatpush.bf16.msra.mxu0 %v5473
    %5632 = vmatmul.bf16.gmra.mxu0 %v5531
    %v5633 = vpop.f32.mrf.mxu0
    %v5634 = vadd.f32 0.0, %v5633
    %v5635 = vpop.f32.mrf.mxu0
    %5636 = vdwg.mxu0
    %v5637 = vadd.f32 %v5329, %v5543
    %v5638 = vadd.f32 %v5330, %v5556
    %v5639 = vadd.f32 %v5331, %v5569
    %v5640 = vadd.f32 %v5332, %v5582
    %v5641 = vadd.f32 %v5333, %v5595
    %v5642 = vadd.f32 %v5334, %v5608
    %v5643 = vadd.f32 %v5335, %v5621
    %v5644 = vadd.f32 %v5336, %v5634
    %v5645 = vld [vmem:[#allocation2 + $0xf00] sm:$0xff]
    %v5646 = vld [vmem:[#allocation2 + $0xf08] sm:$0xff]
    %v5647 = vld [vmem:[#allocation2 + $0xf10] sm:$0xff]
    %v5648 = vld [vmem:[#allocation2 + $0xf18] sm:$0xff]
    %v5649 = vld [vmem:[#allocation2 + $0xf20] sm:$0xff]
    %v5650 = vld [vmem:[#allocation2 + $0xf28] sm:$0xff]
    %v5651 = vld [vmem:[#allocation2 + $0xf30] sm:$0xff]
    %v5652 = vld [vmem:[#allocation2 + $0xf38] sm:$0xff]
    %v5653 = vld [vmem:[#allocation2 + $0xf40] sm:$0xff]
    %v5654 = vld [vmem:[#allocation2 + $0xf48] sm:$0xff]
    %v5655 = vld [vmem:[#allocation2 + $0xf50] sm:$0xff]
    %v5656 = vld [vmem:[#allocation2 + $0xf58] sm:$0xff]
    %v5657 = vld [vmem:[#allocation2 + $0xf60] sm:$0xff]
    %v5658 = vld [vmem:[#allocation2 + $0xf68] sm:$0xff]
    %v5659 = vld [vmem:[#allocation2 + $0xf70] sm:$0xff]
    %v5660 = vld [vmem:[#allocation2 + $0xf78] sm:$0xff]
    %v5661 = vld [vmem:[#allocation2 + $0xf80] sm:$0xff]
    %v5662 = vld [vmem:[#allocation2 + $0xf88] sm:$0xff]
    %v5663 = vld [vmem:[#allocation2 + $0xf90] sm:$0xff]
    %v5664 = vld [vmem:[#allocation2 + $0xf98] sm:$0xff]
    %v5665 = vld [vmem:[#allocation2 + $0xfa0] sm:$0xff]
    %v5666 = vld [vmem:[#allocation2 + $0xfa8] sm:$0xff]
    %v5667 = vld [vmem:[#allocation2 + $0xfb0] sm:$0xff]
    %v5668 = vld [vmem:[#allocation2 + $0xfb8] sm:$0xff]
    %v5669 = vld [vmem:[#allocation2 + $0xfc0] sm:$0xff]
    %v5670 = vld [vmem:[#allocation2 + $0xfc8] sm:$0xff]
    %v5671 = vld [vmem:[#allocation2 + $0xfd0] sm:$0xff]
    %v5672 = vld [vmem:[#allocation2 + $0xfd8] sm:$0xff]
    %v5673 = vld [vmem:[#allocation2 + $0xfe0] sm:$0xff]
    %v5674 = vld [vmem:[#allocation2 + $0xfe8] sm:$0xff]
    %v5675 = vld [vmem:[#allocation2 + $0xff0] sm:$0xff]
    %v5676 = vld [vmem:[#allocation2 + $0xff8] sm:$0xff]
    %v5677 = vrot.slane %v4720, 3
    %v5710 = vunpack.c.l.b16 %v5645
    %v5711 = vunpack.c.h.b16 %v5645
    %v5712 = vunpack.c.l.b16 %v5646
    %v5713 = vunpack.c.h.b16 %v5646
    %v5714 = vunpack.c.l.b16 %v5647
    %v5715 = vunpack.c.h.b16 %v5647
    %v5716 = vunpack.c.l.b16 %v5648
    %v5717 = vunpack.c.h.b16 %v5648
    %v5718 = vunpack.c.l.b16 %v5649
    %v5719 = vunpack.c.h.b16 %v5649
    %v5720 = vunpack.c.l.b16 %v5650
    %v5721 = vunpack.c.h.b16 %v5650
    %v5722 = vunpack.c.l.b16 %v5651
    %v5723 = vunpack.c.h.b16 %v5651
    %v5724 = vunpack.c.l.b16 %v5652
    %v5725 = vunpack.c.h.b16 %v5652
    %v5726 = vunpack.c.l.b16 %v5653
    %v5727 = vunpack.c.h.b16 %v5653
    %v5728 = vunpack.c.l.b16 %v5654
    %v5729 = vunpack.c.h.b16 %v5654
    %v5730 = vunpack.c.l.b16 %v5655
    %v5731 = vunpack.c.h.b16 %v5655
    %v5732 = vunpack.c.l.b16 %v5656
    %v5733 = vunpack.c.h.b16 %v5656
    %v5734 = vunpack.c.l.b16 %v5657
    %v5735 = vunpack.c.h.b16 %v5657
    %v5736 = vunpack.c.l.b16 %v5658
    %v5737 = vunpack.c.h.b16 %v5658
    %v5738 = vunpack.c.l.b16 %v5659
    %v5739 = vunpack.c.h.b16 %v5659
    %v5740 = vunpack.c.l.b16 %v5660
    %v5741 = vunpack.c.h.b16 %v5660
    %v5742 = vunpack.c.l.b16 %v5661
    %v5743 = vunpack.c.h.b16 %v5661
    %v5744 = vunpack.c.l.b16 %v5662
    %v5745 = vunpack.c.h.b16 %v5662
    %v5746 = vunpack.c.l.b16 %v5663
    %v5747 = vunpack.c.h.b16 %v5663
    %v5748 = vunpack.c.l.b16 %v5664
    %v5749 = vunpack.c.h.b16 %v5664
    %v5750 = vunpack.c.l.b16 %v5665
    %v5751 = vunpack.c.h.b16 %v5665
    %v5752 = vunpack.c.l.b16 %v5666
    %v5753 = vunpack.c.h.b16 %v5666
    %v5754 = vunpack.c.l.b16 %v5667
    %v5755 = vunpack.c.h.b16 %v5667
    %v5756 = vunpack.c.l.b16 %v5668
    %v5757 = vunpack.c.h.b16 %v5668
    %v5758 = vunpack.c.l.b16 %v5669
    %v5759 = vunpack.c.h.b16 %v5669
    %v5760 = vunpack.c.l.b16 %v5670
    %v5761 = vunpack.c.h.b16 %v5670
    %v5762 = vunpack.c.l.b16 %v5671
    %v5763 = vunpack.c.h.b16 %v5671
    %v5764 = vunpack.c.l.b16 %v5672
    %v5765 = vunpack.c.h.b16 %v5672
    %v5766 = vunpack.c.l.b16 %v5673
    %v5767 = vunpack.c.h.b16 %v5673
    %v5768 = vunpack.c.l.b16 %v5674
    %v5769 = vunpack.c.h.b16 %v5674
    %v5770 = vunpack.c.l.b16 %v5675
    %v5771 = vunpack.c.h.b16 %v5675
    %v5772 = vunpack.c.l.b16 %v5676
    %v5773 = vunpack.c.h.b16 %v5676
    %v5774 = vpack.c.b16 %v5718, %v5710
    %v5775 = vpack.c.b16 %v5719, %v5711
    %v5776 = vpack.c.b16 %v5720, %v5712
    %v5777 = vpack.c.b16 %v5721, %v5713
    %v5778 = vpack.c.b16 %v5722, %v5714
    %v5779 = vpack.c.b16 %v5723, %v5715
    %v5780 = vpack.c.b16 %v5724, %v5716
    %v5781 = vpack.c.b16 %v5725, %v5717
    %v5782 = vpack.c.b16 %v5734, %v5726
    %v5783 = vpack.c.b16 %v5735, %v5727
    %v5784 = vpack.c.b16 %v5736, %v5728
    %v5785 = vpack.c.b16 %v5737, %v5729
    %v5786 = vpack.c.b16 %v5738, %v5730
    %v5787 = vpack.c.b16 %v5739, %v5731
    %v5788 = vpack.c.b16 %v5740, %v5732
    %v5789 = vpack.c.b16 %v5741, %v5733
    %v5790 = vpack.c.b16 %v5750, %v5742
    %v5791 = vpack.c.b16 %v5751, %v5743
    %v5792 = vpack.c.b16 %v5752, %v5744
    %v5793 = vpack.c.b16 %v5753, %v5745
    %v5794 = vpack.c.b16 %v5754, %v5746
    %v5795 = vpack.c.b16 %v5755, %v5747
    %v5796 = vpack.c.b16 %v5756, %v5748
    %v5797 = vpack.c.b16 %v5757, %v5749
    %v5798 = vpack.c.b16 %v5766, %v5758
    %v5799 = vpack.c.b16 %v5767, %v5759
    %v5800 = vpack.c.b16 %v5768, %v5760
    %v5801 = vpack.c.b16 %v5769, %v5761
    %v5802 = vpack.c.b16 %v5770, %v5762
    %v5803 = vpack.c.b16 %v5771, %v5763
    %v5804 = vpack.c.b16 %v5772, %v5764
    %v5805 = vpack.c.b16 %v5773, %v5765
    %v5839 = vsel %vm325, %v5677, 0
    %5841 = vmatpush.bf16.msra.mxu0 0
    %5842 = vmatpush.bf16.msra.mxu0 0
    %5843 = vmatpush.bf16.msra.mxu0 0
    %5844 = vmatpush.bf16.msra.mxu0 0
    %5845 = vmatpush.bf16.msra.mxu0 %v5798
    %5846 = vmatpush.bf16.msra.mxu0 %v5790
    %5847 = vmatpush.bf16.msra.mxu0 %v5782
    %5848 = vmatpush.bf16.msra.mxu0 %v5774
    %5849 = vmatmul.bf16.gmra.mxu0 %v5839
    %v5850 = vpop.f32.mrf.mxu0
    %v5851 = vadd.f32 0.0, %v5850
    %v5852 = vpop.f32.mrf.mxu0
    %5853 = vdwg.mxu0
    %5854 = vmatpush.bf16.msra.mxu0 0
    %5855 = vmatpush.bf16.msra.mxu0 0
    %5856 = vmatpush.bf16.msra.mxu0 0
    %5857 = vmatpush.bf16.msra.mxu0 0
    %5858 = vmatpush.bf16.msra.mxu0 %v5799
    %5859 = vmatpush.bf16.msra.mxu0 %v5791
    %5860 = vmatpush.bf16.msra.mxu0 %v5783
    %5861 = vmatpush.bf16.msra.mxu0 %v5775
    %5862 = vmatmul.bf16.gmra.mxu0 %v5839
    %v5863 = vpop.f32.mrf.mxu0
    %v5864 = vadd.f32 0.0, %v5863
    %v5865 = vpop.f32.mrf.mxu0
    %5866 = vdwg.mxu0
    %5867 = vmatpush.bf16.msra.mxu0 0
    %5868 = vmatpush.bf16.msra.mxu0 0
    %5869 = vmatpush.bf16.msra.mxu0 0
    %5870 = vmatpush.bf16.msra.mxu0 0
    %5871 = vmatpush.bf16.msra.mxu0 %v5800
    %5872 = vmatpush.bf16.msra.mxu0 %v5792
    %5873 = vmatpush.bf16.msra.mxu0 %v5784
    %5874 = vmatpush.bf16.msra.mxu0 %v5776
    %5875 = vmatmul.bf16.gmra.mxu0 %v5839
    %v5876 = vpop.f32.mrf.mxu0
    %v5877 = vadd.f32 0.0, %v5876
    %v5878 = vpop.f32.mrf.mxu0
    %5879 = vdwg.mxu0
    %5880 = vmatpush.bf16.msra.mxu0 0
    %5881 = vmatpush.bf16.msra.mxu0 0
    %5882 = vmatpush.bf16.msra.mxu0 0
    %5883 = vmatpush.bf16.msra.mxu0 0
    %5884 = vmatpush.bf16.msra.mxu0 %v5801
    %5885 = vmatpush.bf16.msra.mxu0 %v5793
    %5886 = vmatpush.bf16.msra.mxu0 %v5785
    %5887 = vmatpush.bf16.msra.mxu0 %v5777
    %5888 = vmatmul.bf16.gmra.mxu0 %v5839
    %v5889 = vpop.f32.mrf.mxu0
    %v5890 = vadd.f32 0.0, %v5889
    %v5891 = vpop.f32.mrf.mxu0
    %5892 = vdwg.mxu0
    %5893 = vmatpush.bf16.msra.mxu0 0
    %5894 = vmatpush.bf16.msra.mxu0 0
    %5895 = vmatpush.bf16.msra.mxu0 0
    %5896 = vmatpush.bf16.msra.mxu0 0
    %5897 = vmatpush.bf16.msra.mxu0 %v5802
    %5898 = vmatpush.bf16.msra.mxu0 %v5794
    %5899 = vmatpush.bf16.msra.mxu0 %v5786
    %5900 = vmatpush.bf16.msra.mxu0 %v5778
    %5901 = vmatmul.bf16.gmra.mxu0 %v5839
    %v5902 = vpop.f32.mrf.mxu0
    %v5903 = vadd.f32 0.0, %v5902
    %v5904 = vpop.f32.mrf.mxu0
    %5905 = vdwg.mxu0
    %5906 = vmatpush.bf16.msra.mxu0 0
    %5907 = vmatpush.bf16.msra.mxu0 0
    %5908 = vmatpush.bf16.msra.mxu0 0
    %5909 = vmatpush.bf16.msra.mxu0 0
    %5910 = vmatpush.bf16.msra.mxu0 %v5803
    %5911 = vmatpush.bf16.msra.mxu0 %v5795
    %5912 = vmatpush.bf16.msra.mxu0 %v5787
    %5913 = vmatpush.bf16.msra.mxu0 %v5779
    %5914 = vmatmul.bf16.gmra.mxu0 %v5839
    %v5915 = vpop.f32.mrf.mxu0
    %v5916 = vadd.f32 0.0, %v5915
    %v5917 = vpop.f32.mrf.mxu0
    %5918 = vdwg.mxu0
    %5919 = vmatpush.bf16.msra.mxu0 0
    %5920 = vmatpush.bf16.msra.mxu0 0
    %5921 = vmatpush.bf16.msra.mxu0 0
    %5922 = vmatpush.bf16.msra.mxu0 0
    %5923 = vmatpush.bf16.msra.mxu0 %v5804
    %5924 = vmatpush.bf16.msra.mxu0 %v5796
    %5925 = vmatpush.bf16.msra.mxu0 %v5788
    %5926 = vmatpush.bf16.msra.mxu0 %v5780
    %5927 = vmatmul.bf16.gmra.mxu0 %v5839
    %v5928 = vpop.f32.mrf.mxu0
    %v5929 = vadd.f32 0.0, %v5928
    %v5930 = vpop.f32.mrf.mxu0
    %5931 = vdwg.mxu0
    %5932 = vmatpush.bf16.msra.mxu0 0
    %5933 = vmatpush.bf16.msra.mxu0 0
    %5934 = vmatpush.bf16.msra.mxu0 0
    %5935 = vmatpush.bf16.msra.mxu0 0
    %5936 = vmatpush.bf16.msra.mxu0 %v5805
    %5937 = vmatpush.bf16.msra.mxu0 %v5797
    %5938 = vmatpush.bf16.msra.mxu0 %v5789
    %5939 = vmatpush.bf16.msra.mxu0 %v5781
    %5940 = vmatmul.bf16.gmra.mxu0 %v5839
    %v5941 = vpop.f32.mrf.mxu0
    %v5942 = vadd.f32 0.0, %v5941
    %v5943 = vpop.f32.mrf.mxu0
    %5944 = vdwg.mxu0
    %v5945 = vadd.f32 %v5637, %v5851
    %v5946 = vadd.f32 %v5638, %v5864
    %v5947 = vadd.f32 %v5639, %v5877
    %v5948 = vadd.f32 %v5640, %v5890
    %v5949 = vadd.f32 %v5641, %v5903
    %v5950 = vadd.f32 %v5642, %v5916
    %v5951 = vadd.f32 %v5643, %v5929
    %v5952 = vadd.f32 %v5644, %v5942
    %v5954 = vperm.slane %v69, 0
    %v5955 = vperm.slane %v69, 1
    %v5956 = vperm.slane %v69, 2
    %v5957 = vperm.slane %v69, 3
    %v5958 = vperm.slane %v69, 4
    %v5959 = vperm.slane %v69, 5
    %v5960 = vperm.slane %v69, 6
    %v5961 = vperm.slane %v69, 7
    %v5970 = vadd.f32 %v5945, %v5954
    %v5971 = vadd.f32 %v5946, %v5955
    %v5972 = vadd.f32 %v5947, %v5956
    %v5973 = vadd.f32 %v5948, %v5957
    %v5974 = vadd.f32 %v5949, %v5958
    %v5975 = vadd.f32 %v5950, %v5959
    %v5976 = vadd.f32 %v5951, %v5960
    %v5977 = vadd.f32 %v5952, %v5961
    %vm5978 = vcmp.ge.f32.partialorder %v5970, 0.0
    %vm5979 = vcmp.ge.f32.partialorder %v5971, 0.0
    %vm5980 = vcmp.ge.f32.partialorder %v5972, 0.0
    %vm5981 = vcmp.ge.f32.partialorder %v5973, 0.0
    %vm5982 = vcmp.ge.f32.partialorder %v5974, 0.0
    %vm5983 = vcmp.ge.f32.partialorder %v5975, 0.0
    %vm5984 = vcmp.ge.f32.partialorder %v5976, 0.0
    %vm5985 = vcmp.ge.f32.partialorder %v5977, 0.0
    %v5986 = vmul.f32 %v5970, 0.01
    %v5987 = vmul.f32 %v5971, 0.01
    %v5988 = vmul.f32 %v5972, 0.01
    %v5989 = vmul.f32 %v5973, 0.01
    %v5990 = vmul.f32 %v5974, 0.01
    %v5991 = vmul.f32 %v5975, 0.01
    %v5992 = vmul.f32 %v5976, 0.01
    %v5993 = vmul.f32 %v5977, 0.01
    %v5994 = vsel %vm5978, %v5970, %v5986
    %v5995 = vsel %vm5979, %v5971, %v5987
    %v5996 = vsel %vm5980, %v5972, %v5988
    %v5997 = vsel %vm5981, %v5973, %v5989
    %v5998 = vsel %vm5982, %v5974, %v5990
    %v5999 = vsel %vm5983, %v5975, %v5991
    %v6000 = vsel %vm5984, %v5976, %v5992
    %v6001 = vsel %vm5985, %v5977, %v5993
    %v6002 = vpack.c.bf16 %v5994, %v5994
    %v6003 = vpack.c.bf16 %v5995, %v5995
    %v6004 = vpack.c.bf16 %v5996, %v5996
    %v6005 = vpack.c.bf16 %v5997, %v5997
    %v6006 = vpack.c.bf16 %v5998, %v5998
    %v6007 = vpack.c.bf16 %v5999, %v5999
    %v6008 = vpack.c.bf16 %v6000, %v6000
    %v6009 = vpack.c.bf16 %v6001, %v6001
    %v6010 = vld [vmem:[%s5] sm:$0xf]
    %v6011 = vld [vmem:[%s5 + $0x4] sm:$0xf]
    %v6012 = vld [vmem:[%s5 + $0x8] sm:$0xf]
    %v6013 = vld [vmem:[%s5 + $0xc] sm:$0xf]
    %v6014 = vld [vmem:[%s5 + $0x10] sm:$0xf]
    %v6015 = vld [vmem:[%s5 + $0x14] sm:$0xf]
    %v6016 = vld [vmem:[%s5 + $0x18] sm:$0xf]
    %v6017 = vld [vmem:[%s5 + $0x1c] sm:$0xf]
    %v6018 = vld [vmem:[%s5 + $0x20] sm:$0xf]
    %v6019 = vld [vmem:[%s5 + $0x24] sm:$0xf]
    %v6020 = vld [vmem:[%s5 + $0x28] sm:$0xf]
    %v6021 = vld [vmem:[%s5 + $0x2c] sm:$0xf]
    %v6022 = vld [vmem:[%s5 + $0x30] sm:$0xf]
    %v6023 = vld [vmem:[%s5 + $0x34] sm:$0xf]
    %v6024 = vld [vmem:[%s5 + $0x38] sm:$0xf]
    %v6025 = vld [vmem:[%s5 + $0x3c] sm:$0xf]
    %v6026 = vld [vmem:[%s5 + $0x40] sm:$0xf]
    %v6027 = vld [vmem:[%s5 + $0x44] sm:$0xf]
    %v6028 = vld [vmem:[%s5 + $0x48] sm:$0xf]
    %v6029 = vld [vmem:[%s5 + $0x4c] sm:$0xf]
    %v6030 = vld [vmem:[%s5 + $0x50] sm:$0xf]
    %v6031 = vld [vmem:[%s5 + $0x54] sm:$0xf]
    %v6032 = vld [vmem:[%s5 + $0x58] sm:$0xf]
    %v6033 = vld [vmem:[%s5 + $0x5c] sm:$0xf]
    %v6034 = vld [vmem:[%s5 + $0x60] sm:$0xf]
    %v6035 = vld [vmem:[%s5 + $0x64] sm:$0xf]
    %v6036 = vld [vmem:[%s5 + $0x68] sm:$0xf]
    %v6037 = vld [vmem:[%s5 + $0x6c] sm:$0xf]
    %v6038 = vld [vmem:[%s5 + $0x70] sm:$0xf]
    %v6039 = vld [vmem:[%s5 + $0x74] sm:$0xf]
    %v6040 = vld [vmem:[%s5 + $0x78] sm:$0xf]
    %v6041 = vld [vmem:[%s5 + $0x7c] sm:$0xf]
    %v6042 = vld [vmem:[%s5 + $0x80] sm:$0xf]
    %v6043 = vld [vmem:[%s5 + $0x84] sm:$0xf]
    %v6044 = vld [vmem:[%s5 + $0x88] sm:$0xf]
    %v6045 = vld [vmem:[%s5 + $0x8c] sm:$0xf]
    %v6046 = vld [vmem:[%s5 + $0x90] sm:$0xf]
    %v6047 = vld [vmem:[%s5 + $0x94] sm:$0xf]
    %v6048 = vld [vmem:[%s5 + $0x98] sm:$0xf]
    %v6049 = vld [vmem:[%s5 + $0x9c] sm:$0xf]
    %v6050 = vld [vmem:[%s5 + $0xa0] sm:$0xf]
    %v6051 = vld [vmem:[%s5 + $0xa4] sm:$0xf]
    %v6052 = vld [vmem:[%s5 + $0xa8] sm:$0xf]
    %v6053 = vld [vmem:[%s5 + $0xac] sm:$0xf]
    %v6054 = vld [vmem:[%s5 + $0xb0] sm:$0xf]
    %v6055 = vld [vmem:[%s5 + $0xb4] sm:$0xf]
    %v6056 = vld [vmem:[%s5 + $0xb8] sm:$0xf]
    %v6057 = vld [vmem:[%s5 + $0xbc] sm:$0xf]
    %v6058 = vld [vmem:[%s5 + $0xc0] sm:$0xf]
    %v6059 = vld [vmem:[%s5 + $0xc4] sm:$0xf]
    %v6060 = vld [vmem:[%s5 + $0xc8] sm:$0xf]
    %v6061 = vld [vmem:[%s5 + $0xcc] sm:$0xf]
    %v6062 = vld [vmem:[%s5 + $0xd0] sm:$0xf]
    %v6063 = vld [vmem:[%s5 + $0xd4] sm:$0xf]
    %v6064 = vld [vmem:[%s5 + $0xd8] sm:$0xf]
    %v6065 = vld [vmem:[%s5 + $0xdc] sm:$0xf]
    %v6066 = vld [vmem:[%s5 + $0xe0] sm:$0xf]
    %v6067 = vld [vmem:[%s5 + $0xe4] sm:$0xf]
    %v6068 = vld [vmem:[%s5 + $0xe8] sm:$0xf]
    %v6069 = vld [vmem:[%s5 + $0xec] sm:$0xf]
    %v6070 = vld [vmem:[%s5 + $0xf0] sm:$0xf]
    %v6071 = vld [vmem:[%s5 + $0xf4] sm:$0xf]
    %v6072 = vld [vmem:[%s5 + $0xf8] sm:$0xf]
    %v6073 = vld [vmem:[%s5 + $0xfc] sm:$0xf]
    %v6074 = vld [vmem:[%s5 + $0x100] sm:$0xf]
    %v6075 = vld [vmem:[%s5 + $0x104] sm:$0xf]
    %v6076 = vld [vmem:[%s5 + $0x108] sm:$0xf]
    %v6077 = vld [vmem:[%s5 + $0x10c] sm:$0xf]
    %v6078 = vld [vmem:[%s5 + $0x110] sm:$0xf]
    %v6079 = vld [vmem:[%s5 + $0x114] sm:$0xf]
    %v6080 = vld [vmem:[%s5 + $0x118] sm:$0xf]
    %v6081 = vld [vmem:[%s5 + $0x11c] sm:$0xf]
    %v6082 = vld [vmem:[%s5 + $0x120] sm:$0xf]
    %v6083 = vld [vmem:[%s5 + $0x124] sm:$0xf]
    %v6084 = vld [vmem:[%s5 + $0x128] sm:$0xf]
    %v6085 = vld [vmem:[%s5 + $0x12c] sm:$0xf]
    %v6086 = vld [vmem:[%s5 + $0x130] sm:$0xf]
    %v6087 = vld [vmem:[%s5 + $0x134] sm:$0xf]
    %v6088 = vld [vmem:[%s5 + $0x138] sm:$0xf]
    %v6089 = vld [vmem:[%s5 + $0x13c] sm:$0xf]
    %v6090 = vld [vmem:[%s5 + $0x140] sm:$0xf]
    %v6091 = vld [vmem:[%s5 + $0x144] sm:$0xf]
    %v6092 = vld [vmem:[%s5 + $0x148] sm:$0xf]
    %v6093 = vld [vmem:[%s5 + $0x14c] sm:$0xf]
    %v6094 = vld [vmem:[%s5 + $0x150] sm:$0xf]
    %v6095 = vld [vmem:[%s5 + $0x154] sm:$0xf]
    %v6096 = vld [vmem:[%s5 + $0x158] sm:$0xf]
    %v6097 = vld [vmem:[%s5 + $0x15c] sm:$0xf]
    %v6098 = vld [vmem:[%s5 + $0x160] sm:$0xf]
    %v6099 = vld [vmem:[%s5 + $0x164] sm:$0xf]
    %v6100 = vld [vmem:[%s5 + $0x168] sm:$0xf]
    %v6101 = vld [vmem:[%s5 + $0x16c] sm:$0xf]
    %v6102 = vld [vmem:[%s5 + $0x170] sm:$0xf]
    %v6103 = vld [vmem:[%s5 + $0x174] sm:$0xf]
    %v6104 = vld [vmem:[%s5 + $0x178] sm:$0xf]
    %v6105 = vld [vmem:[%s5 + $0x17c] sm:$0xf]
    %v6106 = vld [vmem:[%s5 + $0x180] sm:$0xf]
    %v6107 = vld [vmem:[%s5 + $0x184] sm:$0xf]
    %v6108 = vld [vmem:[%s5 + $0x188] sm:$0xf]
    %v6109 = vld [vmem:[%s5 + $0x18c] sm:$0xf]
    %v6110 = vld [vmem:[%s5 + $0x190] sm:$0xf]
    %v6111 = vld [vmem:[%s5 + $0x194] sm:$0xf]
    %v6112 = vld [vmem:[%s5 + $0x198] sm:$0xf]
    %v6113 = vld [vmem:[%s5 + $0x19c] sm:$0xf]
    %v6114 = vld [vmem:[%s5 + $0x1a0] sm:$0xf]
    %v6115 = vld [vmem:[%s5 + $0x1a4] sm:$0xf]
    %v6116 = vld [vmem:[%s5 + $0x1a8] sm:$0xf]
    %v6117 = vld [vmem:[%s5 + $0x1ac] sm:$0xf]
    %v6118 = vld [vmem:[%s5 + $0x1b0] sm:$0xf]
    %v6119 = vld [vmem:[%s5 + $0x1b4] sm:$0xf]
    %v6120 = vld [vmem:[%s5 + $0x1b8] sm:$0xf]
    %v6121 = vld [vmem:[%s5 + $0x1bc] sm:$0xf]
    %v6122 = vld [vmem:[%s5 + $0x1c0] sm:$0xf]
    %v6123 = vld [vmem:[%s5 + $0x1c4] sm:$0xf]
    %v6124 = vld [vmem:[%s5 + $0x1c8] sm:$0xf]
    %v6125 = vld [vmem:[%s5 + $0x1cc] sm:$0xf]
    %v6126 = vld [vmem:[%s5 + $0x1d0] sm:$0xf]
    %v6127 = vld [vmem:[%s5 + $0x1d4] sm:$0xf]
    %v6128 = vld [vmem:[%s5 + $0x1d8] sm:$0xf]
    %v6129 = vld [vmem:[%s5 + $0x1dc] sm:$0xf]
    %v6130 = vld [vmem:[%s5 + $0x1e0] sm:$0xf]
    %v6131 = vld [vmem:[%s5 + $0x1e4] sm:$0xf]
    %v6132 = vld [vmem:[%s5 + $0x1e8] sm:$0xf]
    %v6133 = vld [vmem:[%s5 + $0x1ec] sm:$0xf]
    %v6134 = vld [vmem:[%s5 + $0x1f0] sm:$0xf]
    %v6135 = vld [vmem:[%s5 + $0x1f4] sm:$0xf]
    %v6136 = vld [vmem:[%s5 + $0x1f8] sm:$0xf]
    %v6137 = vld [vmem:[%s5 + $0x1fc] sm:$0xf]
    %v6138 = vperm.slane %v70, 0
    %v6267 = vunpack.c.l.b16 %v6010
    %v6268 = vunpack.c.l.b16 %v6011
    %v6269 = vunpack.c.l.b16 %v6012
    %v6270 = vunpack.c.l.b16 %v6013
    %v6271 = vunpack.c.l.b16 %v6014
    %v6272 = vunpack.c.l.b16 %v6015
    %v6273 = vunpack.c.l.b16 %v6016
    %v6274 = vunpack.c.l.b16 %v6017
    %v6275 = vunpack.c.l.b16 %v6018
    %v6276 = vunpack.c.l.b16 %v6019
    %v6277 = vunpack.c.l.b16 %v6020
    %v6278 = vunpack.c.l.b16 %v6021
    %v6279 = vunpack.c.l.b16 %v6022
    %v6280 = vunpack.c.l.b16 %v6023
    %v6281 = vunpack.c.l.b16 %v6024
    %v6282 = vunpack.c.l.b16 %v6025
    %v6283 = vunpack.c.l.b16 %v6026
    %v6284 = vunpack.c.l.b16 %v6027
    %v6285 = vunpack.c.l.b16 %v6028
    %v6286 = vunpack.c.l.b16 %v6029
    %v6287 = vunpack.c.l.b16 %v6030
    %v6288 = vunpack.c.l.b16 %v6031
    %v6289 = vunpack.c.l.b16 %v6032
    %v6290 = vunpack.c.l.b16 %v6033
    %v6291 = vunpack.c.l.b16 %v6034
    %v6292 = vunpack.c.l.b16 %v6035
    %v6293 = vunpack.c.l.b16 %v6036
    %v6294 = vunpack.c.l.b16 %v6037
    %v6295 = vunpack.c.l.b16 %v6038
    %v6296 = vunpack.c.l.b16 %v6039
    %v6297 = vunpack.c.l.b16 %v6040
    %v6298 = vunpack.c.l.b16 %v6041
    %v6299 = vunpack.c.l.b16 %v6042
    %v6300 = vunpack.c.l.b16 %v6043
    %v6301 = vunpack.c.l.b16 %v6044
    %v6302 = vunpack.c.l.b16 %v6045
    %v6303 = vunpack.c.l.b16 %v6046
    %v6304 = vunpack.c.l.b16 %v6047
    %v6305 = vunpack.c.l.b16 %v6048
    %v6306 = vunpack.c.l.b16 %v6049
    %v6307 = vunpack.c.l.b16 %v6050
    %v6308 = vunpack.c.l.b16 %v6051
    %v6309 = vunpack.c.l.b16 %v6052
    %v6310 = vunpack.c.l.b16 %v6053
    %v6311 = vunpack.c.l.b16 %v6054
    %v6312 = vunpack.c.l.b16 %v6055
    %v6313 = vunpack.c.l.b16 %v6056
    %v6314 = vunpack.c.l.b16 %v6057
    %v6315 = vunpack.c.l.b16 %v6058
    %v6316 = vunpack.c.l.b16 %v6059
    %v6317 = vunpack.c.l.b16 %v6060
    %v6318 = vunpack.c.l.b16 %v6061
    %v6319 = vunpack.c.l.b16 %v6062
    %v6320 = vunpack.c.l.b16 %v6063
    %v6321 = vunpack.c.l.b16 %v6064
    %v6322 = vunpack.c.l.b16 %v6065
    %v6323 = vunpack.c.l.b16 %v6066
    %v6324 = vunpack.c.l.b16 %v6067
    %v6325 = vunpack.c.l.b16 %v6068
    %v6326 = vunpack.c.l.b16 %v6069
    %v6327 = vunpack.c.l.b16 %v6070
    %v6328 = vunpack.c.l.b16 %v6071
    %v6329 = vunpack.c.l.b16 %v6072
    %v6330 = vunpack.c.l.b16 %v6073
    %v6331 = vunpack.c.l.b16 %v6074
    %v6332 = vunpack.c.l.b16 %v6075
    %v6333 = vunpack.c.l.b16 %v6076
    %v6334 = vunpack.c.l.b16 %v6077
    %v6335 = vunpack.c.l.b16 %v6078
    %v6336 = vunpack.c.l.b16 %v6079
    %v6337 = vunpack.c.l.b16 %v6080
    %v6338 = vunpack.c.l.b16 %v6081
    %v6339 = vunpack.c.l.b16 %v6082
    %v6340 = vunpack.c.l.b16 %v6083
    %v6341 = vunpack.c.l.b16 %v6084
    %v6342 = vunpack.c.l.b16 %v6085
    %v6343 = vunpack.c.l.b16 %v6086
    %v6344 = vunpack.c.l.b16 %v6087
    %v6345 = vunpack.c.l.b16 %v6088
    %v6346 = vunpack.c.l.b16 %v6089
    %v6347 = vunpack.c.l.b16 %v6090
    %v6348 = vunpack.c.l.b16 %v6091
    %v6349 = vunpack.c.l.b16 %v6092
    %v6350 = vunpack.c.l.b16 %v6093
    %v6351 = vunpack.c.l.b16 %v6094
    %v6352 = vunpack.c.l.b16 %v6095
    %v6353 = vunpack.c.l.b16 %v6096
    %v6354 = vunpack.c.l.b16 %v6097
    %v6355 = vunpack.c.l.b16 %v6098
    %v6356 = vunpack.c.l.b16 %v6099
    %v6357 = vunpack.c.l.b16 %v6100
    %v6358 = vunpack.c.l.b16 %v6101
    %v6359 = vunpack.c.l.b16 %v6102
    %v6360 = vunpack.c.l.b16 %v6103
    %v6361 = vunpack.c.l.b16 %v6104
    %v6362 = vunpack.c.l.b16 %v6105
    %v6363 = vunpack.c.l.b16 %v6106
    %v6364 = vunpack.c.l.b16 %v6107
    %v6365 = vunpack.c.l.b16 %v6108
    %v6366 = vunpack.c.l.b16 %v6109
    %v6367 = vunpack.c.l.b16 %v6110
    %v6368 = vunpack.c.l.b16 %v6111
    %v6369 = vunpack.c.l.b16 %v6112
    %v6370 = vunpack.c.l.b16 %v6113
    %v6371 = vunpack.c.l.b16 %v6114
    %v6372 = vunpack.c.l.b16 %v6115
    %v6373 = vunpack.c.l.b16 %v6116
    %v6374 = vunpack.c.l.b16 %v6117
    %v6375 = vunpack.c.l.b16 %v6118
    %v6376 = vunpack.c.l.b16 %v6119
    %v6377 = vunpack.c.l.b16 %v6120
    %v6378 = vunpack.c.l.b16 %v6121
    %v6379 = vunpack.c.l.b16 %v6122
    %v6380 = vunpack.c.l.b16 %v6123
    %v6381 = vunpack.c.l.b16 %v6124
    %v6382 = vunpack.c.l.b16 %v6125
    %v6383 = vunpack.c.l.b16 %v6126
    %v6384 = vunpack.c.l.b16 %v6127
    %v6385 = vunpack.c.l.b16 %v6128
    %v6386 = vunpack.c.l.b16 %v6129
    %v6387 = vunpack.c.l.b16 %v6130
    %v6388 = vunpack.c.l.b16 %v6131
    %v6389 = vunpack.c.l.b16 %v6132
    %v6390 = vunpack.c.l.b16 %v6133
    %v6391 = vunpack.c.l.b16 %v6134
    %v6392 = vunpack.c.l.b16 %v6135
    %v6393 = vunpack.c.l.b16 %v6136
    %v6394 = vunpack.c.l.b16 %v6137
    %v6395 = vpack.c.b16 %v6268, %v6267
    %v6396 = vpack.c.b16 %v6270, %v6269
    %v6397 = vpack.c.b16 %v6272, %v6271
    %v6398 = vpack.c.b16 %v6274, %v6273
    %v6399 = vpack.c.b16 %v6276, %v6275
    %v6400 = vpack.c.b16 %v6278, %v6277
    %v6401 = vpack.c.b16 %v6280, %v6279
    %v6402 = vpack.c.b16 %v6282, %v6281
    %v6403 = vpack.c.b16 %v6284, %v6283
    %v6404 = vpack.c.b16 %v6286, %v6285
    %v6405 = vpack.c.b16 %v6288, %v6287
    %v6406 = vpack.c.b16 %v6290, %v6289
    %v6407 = vpack.c.b16 %v6292, %v6291
    %v6408 = vpack.c.b16 %v6294, %v6293
    %v6409 = vpack.c.b16 %v6296, %v6295
    %v6410 = vpack.c.b16 %v6298, %v6297
    %v6411 = vpack.c.b16 %v6300, %v6299
    %v6412 = vpack.c.b16 %v6302, %v6301
    %v6413 = vpack.c.b16 %v6304, %v6303
    %v6414 = vpack.c.b16 %v6306, %v6305
    %v6415 = vpack.c.b16 %v6308, %v6307
    %v6416 = vpack.c.b16 %v6310, %v6309
    %v6417 = vpack.c.b16 %v6312, %v6311
    %v6418 = vpack.c.b16 %v6314, %v6313
    %v6419 = vpack.c.b16 %v6316, %v6315
    %v6420 = vpack.c.b16 %v6318, %v6317
    %v6421 = vpack.c.b16 %v6320, %v6319
    %v6422 = vpack.c.b16 %v6322, %v6321
    %v6423 = vpack.c.b16 %v6324, %v6323
    %v6424 = vpack.c.b16 %v6326, %v6325
    %v6425 = vpack.c.b16 %v6328, %v6327
    %v6426 = vpack.c.b16 %v6330, %v6329
    %v6427 = vpack.c.b16 %v6332, %v6331
    %v6428 = vpack.c.b16 %v6334, %v6333
    %v6429 = vpack.c.b16 %v6336, %v6335
    %v6430 = vpack.c.b16 %v6338, %v6337
    %v6431 = vpack.c.b16 %v6340, %v6339
    %v6432 = vpack.c.b16 %v6342, %v6341
    %v6433 = vpack.c.b16 %v6344, %v6343
    %v6434 = vpack.c.b16 %v6346, %v6345
    %v6435 = vpack.c.b16 %v6348, %v6347
    %v6436 = vpack.c.b16 %v6350, %v6349
    %v6437 = vpack.c.b16 %v6352, %v6351
    %v6438 = vpack.c.b16 %v6354, %v6353
    %v6439 = vpack.c.b16 %v6356, %v6355
    %v6440 = vpack.c.b16 %v6358, %v6357
    %v6441 = vpack.c.b16 %v6360, %v6359
    %v6442 = vpack.c.b16 %v6362, %v6361
    %v6443 = vpack.c.b16 %v6364, %v6363
    %v6444 = vpack.c.b16 %v6366, %v6365
    %v6445 = vpack.c.b16 %v6368, %v6367
    %v6446 = vpack.c.b16 %v6370, %v6369
    %v6447 = vpack.c.b16 %v6372, %v6371
    %v6448 = vpack.c.b16 %v6374, %v6373
    %v6449 = vpack.c.b16 %v6376, %v6375
    %v6450 = vpack.c.b16 %v6378, %v6377
    %v6451 = vpack.c.b16 %v6380, %v6379
    %v6452 = vpack.c.b16 %v6382, %v6381
    %v6453 = vpack.c.b16 %v6384, %v6383
    %v6454 = vpack.c.b16 %v6386, %v6385
    %v6455 = vpack.c.b16 %v6388, %v6387
    %v6456 = vpack.c.b16 %v6390, %v6389
    %v6457 = vpack.c.b16 %v6392, %v6391
    %v6458 = vpack.c.b16 %v6394, %v6393
    %6523 = vmatpush.bf16.msra.mxu0 %v6402
    %6524 = vmatpush.bf16.msra.mxu0 %v6401
    %6525 = vmatpush.bf16.msra.mxu0 %v6400
    %6526 = vmatpush.bf16.msra.mxu0 %v6399
    %6527 = vmatpush.bf16.msra.mxu0 %v6398
    %6528 = vmatpush.bf16.msra.mxu0 %v6397
    %6529 = vmatpush.bf16.msra.mxu0 %v6396
    %6530 = vmatpush.bf16.msra.mxu0 %v6395
    %6531 = vmatmul.bf16.gmra.mxu0 %v6002
    %v6532 = vpop.f32.mrf.mxu0
    %v6533 = vadd.f32 %v6138, %v6532
    %v6534 = vpop.f32.mrf.mxu0
    %6535 = vdwg.mxu0
    %6536 = vmatpush.bf16.msra.mxu0 %v6410
    %6537 = vmatpush.bf16.msra.mxu0 %v6409
    %6538 = vmatpush.bf16.msra.mxu0 %v6408
    %6539 = vmatpush.bf16.msra.mxu0 %v6407
    %6540 = vmatpush.bf16.msra.mxu0 %v6406
    %6541 = vmatpush.bf16.msra.mxu0 %v6405
    %6542 = vmatpush.bf16.msra.mxu0 %v6404
    %6543 = vmatpush.bf16.msra.mxu0 %v6403
    %6544 = vmatmul.bf16.gmra.mxu0 %v6003
    %v6545 = vpop.f32.mrf.mxu0
    %v6546 = vadd.f32 %v6533, %v6545
    %v6547 = vpop.f32.mrf.mxu0
    %6548 = vdwg.mxu0
    %6549 = vmatpush.bf16.msra.mxu0 %v6418
    %6550 = vmatpush.bf16.msra.mxu0 %v6417
    %6551 = vmatpush.bf16.msra.mxu0 %v6416
    %6552 = vmatpush.bf16.msra.mxu0 %v6415
    %6553 = vmatpush.bf16.msra.mxu0 %v6414
    %6554 = vmatpush.bf16.msra.mxu0 %v6413
    %6555 = vmatpush.bf16.msra.mxu0 %v6412
    %6556 = vmatpush.bf16.msra.mxu0 %v6411
    %6557 = vmatmul.bf16.gmra.mxu0 %v6004
    %v6558 = vpop.f32.mrf.mxu0
    %v6559 = vadd.f32 %v6546, %v6558
    %v6560 = vpop.f32.mrf.mxu0
    %6561 = vdwg.mxu0
    %6562 = vmatpush.bf16.msra.mxu0 %v6426
    %6563 = vmatpush.bf16.msra.mxu0 %v6425
    %6564 = vmatpush.bf16.msra.mxu0 %v6424
    %6565 = vmatpush.bf16.msra.mxu0 %v6423
    %6566 = vmatpush.bf16.msra.mxu0 %v6422
    %6567 = vmatpush.bf16.msra.mxu0 %v6421
    %6568 = vmatpush.bf16.msra.mxu0 %v6420
    %6569 = vmatpush.bf16.msra.mxu0 %v6419
    %6570 = vmatmul.bf16.gmra.mxu0 %v6005
    %v6571 = vpop.f32.mrf.mxu0
    %v6572 = vadd.f32 %v6559, %v6571
    %v6573 = vpop.f32.mrf.mxu0
    %6574 = vdwg.mxu0
    %6575 = vmatpush.bf16.msra.mxu0 %v6434
    %6576 = vmatpush.bf16.msra.mxu0 %v6433
    %6577 = vmatpush.bf16.msra.mxu0 %v6432
    %6578 = vmatpush.bf16.msra.mxu0 %v6431
    %6579 = vmatpush.bf16.msra.mxu0 %v6430
    %6580 = vmatpush.bf16.msra.mxu0 %v6429
    %6581 = vmatpush.bf16.msra.mxu0 %v6428
    %6582 = vmatpush.bf16.msra.mxu0 %v6427
    %6583 = vmatmul.bf16.gmra.mxu0 %v6006
    %v6584 = vpop.f32.mrf.mxu0
    %v6585 = vadd.f32 %v6572, %v6584
    %v6586 = vpop.f32.mrf.mxu0
    %6587 = vdwg.mxu0
    %6588 = vmatpush.bf16.msra.mxu0 %v6442
    %6589 = vmatpush.bf16.msra.mxu0 %v6441
    %6590 = vmatpush.bf16.msra.mxu0 %v6440
    %6591 = vmatpush.bf16.msra.mxu0 %v6439
    %6592 = vmatpush.bf16.msra.mxu0 %v6438
    %6593 = vmatpush.bf16.msra.mxu0 %v6437
    %6594 = vmatpush.bf16.msra.mxu0 %v6436
    %6595 = vmatpush.bf16.msra.mxu0 %v6435
    %6596 = vmatmul.bf16.gmra.mxu0 %v6007
    %v6597 = vpop.f32.mrf.mxu0
    %v6598 = vadd.f32 %v6585, %v6597
    %v6599 = vpop.f32.mrf.mxu0
    %6600 = vdwg.mxu0
    %6601 = vmatpush.bf16.msra.mxu0 %v6450
    %6602 = vmatpush.bf16.msra.mxu0 %v6449
    %6603 = vmatpush.bf16.msra.mxu0 %v6448
    %6604 = vmatpush.bf16.msra.mxu0 %v6447
    %6605 = vmatpush.bf16.msra.mxu0 %v6446
    %6606 = vmatpush.bf16.msra.mxu0 %v6445
    %6607 = vmatpush.bf16.msra.mxu0 %v6444
    %6608 = vmatpush.bf16.msra.mxu0 %v6443
    %6609 = vmatmul.bf16.gmra.mxu0 %v6008
    %v6610 = vpop.f32.mrf.mxu0
    %v6611 = vadd.f32 %v6598, %v6610
    %v6612 = vpop.f32.mrf.mxu0
    %6613 = vdwg.mxu0
    %6614 = vmatpush.bf16.msra.mxu0 %v6458
    %6615 = vmatpush.bf16.msra.mxu0 %v6457
    %6616 = vmatpush.bf16.msra.mxu0 %v6456
    %6617 = vmatpush.bf16.msra.mxu0 %v6455
    %6618 = vmatpush.bf16.msra.mxu0 %v6454
    %6619 = vmatpush.bf16.msra.mxu0 %v6453
    %6620 = vmatpush.bf16.msra.mxu0 %v6452
    %6621 = vmatpush.bf16.msra.mxu0 %v6451
    %6622 = vmatmul.bf16.gmra.mxu0 %v6009
    %v6623 = vpop.f32.mrf.mxu0
    %v6624 = vadd.f32 %v6611, %v6623
    %v6625 = vpop.f32.mrf.mxu0
    %6626 = vdwg.mxu0
    %vm6627 = vcmask 91136
    %6628 = vst.msk [vmem:[#allocation9] sm:$0x3] %vm6627, %v6624
    // Predicated region
    $region34: #{net_withoutLS_forward.1} parent=1 // pred_check
      _
    $region35: #{net_withoutLS_forward.1} parent=1 // pred_check_branch
      %6630 = sbr.rel (0) target = $region37
    $region36: #{net_withoutLS_forward.1} parent=1 // pred_region
      %6632 = vsyncadd [#allocation6], 0
      %s6634 = sshll.u32 [#allocation9], 4
      %s6635 = int_to_ptr.vmem [resolvable:$true] %s6634
      %s6636 = sshll.u32 %s6, 4
      %s6637 = int_to_ptr.hbm [resolvable:$true] %s6636
      %6639 = dma.vmem_to_hbm [thread:$0]  %s6635, 32, %s6637, [#allocation6]
    $region37: #{net_withoutLS_forward.1} parent=1 // pred_fallthru
      _
    // Predicated region
    $region38: #{net_withoutLS_forward.1} parent=1 // pred_check
      _
    $region39: #{net_withoutLS_forward.1} parent=1 // pred_check_branch
      %6641 = sbr.rel (0) target = $region41
    $region40: #{net_withoutLS_forward.1} parent=1 // pred_region
      %6643 = dma.done [#allocation6], 32
    $region41: #{net_withoutLS_forward.1} parent=1 // pred_fallthru
      _
    %6644 = vsyncpa [#allocation5], 1
    %6645 = vsyncpa [#allocation8], 1
    %6646 = vsyncpa [#allocation6], 1
  %6647 = vsyncmov [#allocation3]
  %s6648 = vpop.sfrf %6647
  %p6649 = scmp.eq.s32.totalorder %s6648, 0
  %p6650 = pneg %p6649
  %6652 = shalt.err (%p6650)

</llo_original>
